<compile_context>
chip_gen: v6e
topology: v6e:2x2x1
jax: 0.10.0
libtpu: 0.0.40
codegen_flags: <defaults>
</compile_context>

<pallas_src>
import math

import jax
import jax.numpy as jnp
from jax.experimental import pallas as pl
from jax.experimental.pallas import tpu as pltpu

_BN_EPS = 1e-5


# --------------------------------------------------------------------------
# in-kernel helpers
# --------------------------------------------------------------------------
def _conv3x3(h, w_kio):
    """3x3 / stride-1 / pad-1 conv of one image.

    h     : (H, W, Cin) float32 activations.
    w_kio : (3, 3*Cin, P) bfloat16 weights, w_kio[ky, kx*Cin + ci, co].
    returns (H, W, P) float32.

    dx taps: pltpu.roll along the sublane (W) axis + iota border mask -> no
    misaligned slice copies.  dy: plain offsets into an H-padded slab along
    the leading (untiled) axis, feeding three MXU matmuls of K = 3*Cin with
    f32 accumulation.
    """
    H, W, Cin = h.shape
    P = w_kio.shape[-1]

    col = jax.lax.broadcasted_iota(jnp.int32, (H, W, Cin), 1)
    left = jnp.where(col == 0, 0.0, pltpu.roll(h, shift=1, axis=1))          # x-1
    right = jnp.where(col == W - 1, 0.0, pltpu.roll(h, shift=W - 1, axis=1))  # x+1

    # lane-concat the three column taps (kx-major), cast to bf16 for the MXU
    slab = jnp.concatenate(
        [left.astype(jnp.bfloat16),
         h.astype(jnp.bfloat16),
         right.astype(jnp.bfloat16)], axis=-1)                  # (H, W, 3*Cin)
    zrow = jnp.zeros((1, W, 3 * Cin), jnp.bfloat16)
    slab = jnp.concatenate([zrow, slab, zrow], axis=0)           # (H+2, W, 3*Cin)

    out = jnp.zeros((H * W, P), jnp.float32)
    for ky in range(3):                                          # static unroll
        out = out + jnp.dot(
            slab[ky:ky + H].reshape(H * W, 3 * Cin), w_kio[ky],
            preferred_element_type=jnp.float32)
    return out.reshape(H, W, P)


def _preact_block_kernel(x_ref, s1_ref, b1_ref, w1_ref, b2_ref, w2_ref, o_ref):
    """One batch element per grid step (batch dim squeezed by BlockSpec).

    x_ref : (H, W, C)     f32  NHWC input tile
    s1/b1 : (1, 1, C)     f32  folded BN1 scale / bias
    w1    : (3, 3*C, P)   bf16 conv1 weights (per-ky im2col layout, BN2 scale folded in)
    b2    : (1, 1, P)     f32  folded BN2 bias
    w2    : (3, 3*P, P)   bf16 conv2 weights (per-ky im2col layout)
    o_ref : (H, W, P)     f32  output tile
    """
    # ---- BN1 + ReLU (f32 VPU math) ---------------------------------------
    h1 = jnp.maximum(x_ref[...] * s1_ref[...] + b1_ref[...], 0.0)

    # ---- conv1 (BN2 scale pre-folded into w1) ------------------------------
    c1 = _conv3x3(h1, w1_ref[...])                               # (H, W, P) f32

    # ---- BN2 bias + ReLU ----------------------------------------------------
    h2 = jnp.maximum(c1 + b2_ref[...], 0.0)

    # ---- conv2 ---------------------------------------------------------------
    c2 = _conv3x3(h2, w2_ref[...])                               # (H, W, P) f32

    # ---- residual add (downsample=None, stride=1 -> residual = x) -----------
    o_ref[...] = (c2 + x_ref[...]).astype(o_ref.dtype)


# --------------------------------------------------------------------------
# wrapper
# --------------------------------------------------------------------------
def _fold_bn(gamma, beta, mean, var):
    scale = gamma / jnp.sqrt(var + _BN_EPS)
    bias = beta - mean * scale
    return scale, bias


def _vmem_limit_bytes(H, W, C, P):
    """Programmatic VMEM budget from actual block sizes (generous headroom)."""
    io_blocks = 2 * H * W * (C + P) * 4                 # x/out, double-buffered
    weights = 2 * 2 * 9 * (C * P + P * P)               # bf16 w1+w2, double-buffered
    interm = 4 * H * W * (C + P) * 4 + 2 * (H + 2) * W * 3 * (C + P) * 2
    budget = 3 * (io_blocks + weights + interm) + (2 << 20)
    return int(min(budget, 32 * 1024 * 1024))


def preact_block_pallas(x_nhwc, params):
    """PreActBlock forward, NHWC in / NHWC out (no layout transposes).

    x_nhwc : (N, H, W, C) float32
    params : PyTorch-layout conv weights ("w1"/"w2": OIHW (Co,Ci,3,3)) plus
             BN running stats ("bn{1,2}_{gamma,beta,mean,var}").
    """
    N, H, W, C = x_nhwc.shape
    w1_oihw, w2_oihw = params["w1"], params["w2"]
    P = w1_oihw.shape[0]
    assert w1_oihw.shape[1] == C, "inplanes mismatch"
    assert C == P, "residual add requires inplanes == planes (downsample=None)"
    assert w2_oihw.shape[0] == P and w2_oihw.shape[1] == P

    s1, b1 = _fold_bn(params["bn1_gamma"], params["bn1_beta"],
                      params["bn1_mean"], params["bn1_var"])
    s2, b2 = _fold_bn(params["bn2_gamma"], params["bn2_beta"],
                      params["bn2_mean"], params["bn2_var"])

    # OIHW -> HWIO -> per-ky im2col layout (3, 3*Ci, Co); fold BN2's scale into
    # conv1's output channels in f32, then cast to bf16 for the MXU.
    w1_kio = jnp.transpose(w1_oihw, (2, 3, 1, 0)).reshape(3, 3 * C, P)
    w2_kio = jnp.transpose(w2_oihw, (2, 3, 1, 0)).reshape(3, 3 * P, P)
    w1_b = (w1_kio * s2[None, None, :]).astype(jnp.bfloat16)
    w2_b = w2_kio.astype(jnp.bfloat16)

    s1 = s1.reshape(1, 1, C)
    b1 = b1.reshape(1, 1, C)
    b2 = b2.reshape(1, 1, P)

    flops = 2 * N * H * W * 9 * (C * P + P * P)          # two 3x3 convs
    bytes_accessed = N * H * W * (C + P) * 4 + (w1_b.size + w2_b.size) * 2

    out = pl.pallas_call(
        _preact_block_kernel,
        out_shape=jax.ShapeDtypeStruct((N, H, W, P), x_nhwc.dtype),
        grid=(N,),
        in_specs=[
            pl.BlockSpec((None, H, W, C), lambda n: (n, 0, 0, 0)),   # x
            pl.BlockSpec((1, 1, C), lambda n: (0, 0, 0)),            # s1
            pl.BlockSpec((1, 1, C), lambda n: (0, 0, 0)),            # b1
            pl.BlockSpec((3, 3 * C, P), lambda n: (0, 0, 0)),        # w1 (scaled)
            pl.BlockSpec((1, 1, P), lambda n: (0, 0, 0)),            # b2
            pl.BlockSpec((3, 3 * P, P), lambda n: (0, 0, 0)),        # w2
        ],
        out_specs=pl.BlockSpec((None, H, W, P), lambda n: (n, 0, 0, 0)),
        compiler_params=pltpu.CompilerParams(
            dimension_semantics=("parallel",),
            vmem_limit_bytes=_vmem_limit_bytes(H, W, C, P),
        ),
        cost_estimate=pl.CostEstimate(
            flops=flops, transcendentals=0, bytes_accessed=bytes_accessed),
    )(x_nhwc, s1, b1, w1_b, b2, w2_b)

    return out


def preact_block_pallas_nchw(x_nchw, params):
    """Adapter for PyTorch NCHW callers.  NOTE: the two transposes round-trip
    the full activation through HBM; prefer the NHWC entry point."""
    x = jnp.transpose(x_nchw, (0, 2, 3, 1))
    return jnp.transpose(preact_block_pallas(x, params), (0, 3, 1, 2))


# --------------------------- pure-JAX references -----------------------------
def _conv3x3_nhwc_ref(x, w_hwio, dtype=None):
    if dtype is not None:
        x = x.astype(dtype)
        w_hwio = w_hwio.astype(dtype)
    return jax.lax.conv_general_dilated(
        x, w_hwio, window_strides=(1, 1), padding="SAME",
        dimension_numbers=("NHWC", "HWIO", "NHWC"),
        preferred_element_type=jnp.float32)


def preact_block_ref_f32(x, params):
    """Pure-f32 PyTorch-equivalent reference (NHWC)."""
    w1 = jnp.transpose(params["w1"], (2, 3, 1, 0))
    w2 = jnp.transpose(params["w2"], (2, 3, 1, 0))

    def bn(h, g, b, m, v):
        return (h - m) / jnp.sqrt(v + _BN_EPS) * g + b

    out = jnp.maximum(bn(x, params["bn1_gamma"], params["bn1_beta"],
                         params["bn1_mean"], params["bn1_var"]), 0.0)
    out = _conv3x3_nhwc_ref(out, w1)
    out = jnp.maximum(bn(out, params["bn2_gamma"], params["bn2_beta"],
                         params["bn2_mean"], params["bn2_var"]), 0.0)
    out = _conv3x3_nhwc_ref(out, w2)
    return out + x


def preact_block_ref_bf16(x, params):
    """Precision-matched reference: bf16 MXU operands, f32 accumulation,
    BN folded exactly as the kernel does (incl. BN2 scale folded into w1)."""
    s1, b1 = _fold_bn(params["bn1_gamma"], params["bn1_beta"],
                      params["bn1_mean"], params["bn1_var"])
    s2, b2 = _fold_bn(params["bn2_gamma"], params["bn2_beta"],
                      params["bn2_mean"], params["bn2_var"])
    w1 = jnp.transpose(params["w1"], (2, 3, 1, 0)) * s2          # fold into Co
    w2 = jnp.transpose(params["w2"], (2, 3, 1, 0))

    h1 = jnp.maximum(x * s1 + b1, 0.0)
    c1 = _conv3x3_nhwc_ref(h1, w1, jnp.bfloat16)
    h2 = jnp.maximum(c1 + b2, 0.0)
    c2 = _conv3x3_nhwc_ref(h2, w2, jnp.bfloat16)
    return c2 + x


def make_params(key, inplanes, planes):
    ks = jax.random.split(key, 10)
    return {
        # PyTorch OIHW layout (Co, Ci, Kh, Kw)
        "w1": jax.random.normal(ks[0], (planes, inplanes, 3, 3),
                                jnp.float32) / math.sqrt(9 * inplanes),
        "w2": jax.random.normal(ks[1], (planes, planes, 3, 3),
                                jnp.float32) / math.sqrt(9 * planes),
        "bn1_gamma": jax.random.uniform(ks[2], (inplanes,), jnp.float32, 0.5, 1.5),
        "bn1_beta": 0.1 * jax.random.normal(ks[3], (inplanes,), jnp.float32),
        "bn1_mean": 0.1 * jax.random.normal(ks[4], (inplanes,), jnp.float32),
        "bn1_var": jax.random.uniform(ks[5], (inplanes,), jnp.float32, 0.5, 1.5),
        "bn2_gamma": jax.random.uniform(ks[6], (planes,), jnp.float32, 0.5, 1.5),
        "bn2_beta": 0.1 * jax.random.normal(ks[7], (planes,), jnp.float32),
        "bn2_mean": 0.1 * jax.random.normal(ks[8], (planes,), jnp.float32),
        "bn2_var": jax.random.uniform(ks[9], (planes,), jnp.float32, 0.5, 1.5),
    }


if __name__ == "__main__":
    key = jax.random.PRNGKey(0)
    k_x, k_p = jax.random.split(key)

    # inplanes == planes == 128 (lane-dense channel block), stride=1, NHWC.
    # N=4 so the batch grid gives >1 pipeline step per TensorCore.
    N, H, W, C = 4, 16, 16, 128
    x = jax.random.normal(k_x, (N, H, W, C), jnp.float32)
    params = make_params(k_p, C, C)

    out = jax.block_until_ready(preact_block_pallas(x, params))
    assert out.shape == (N, H, W, C)

    # tight check vs a precision-matched reference (bf16 MXU operands, f32
    # accumulation, BN2 scale folded into w1 -- exactly what the kernel computes)
    ref_b = preact_block_ref_bf16(x, params)
    err_b = float(jnp.max(jnp.abs(out - ref_b)))
    assert jnp.allclose(out, ref_b, atol=2e-3, rtol=2e-3), err_b

    # loose check vs the pure-f32 PyTorch-equivalent reference
    ref_f = preact_block_ref_f32(x, params)
    err_f = float(jnp.max(jnp.abs(out - ref_f)))
    assert jnp.allclose(out, ref_f, atol=8e-2, rtol=8e-2), err_f

    print("KERNEL_OK")
</pallas_src>

<mosaic_0001>
module attributes {stable_mosaic.version = 11 : i64} {
  func.func @_preact_block_kernel(%arg0: i32, %arg1: memref<1x16x16x128xf32, #tpu.memory_space<vmem>>, %arg2: memref<1x1x128xf32, #tpu.memory_space<vmem>>, %arg3: memref<1x1x128xf32, #tpu.memory_space<vmem>>, %arg4: memref<3x384x128xbf16, #tpu.memory_space<vmem>>, %arg5: memref<1x1x128xf32, #tpu.memory_space<vmem>>, %arg6: memref<3x384x128xbf16, #tpu.memory_space<vmem>>, %arg7: memref<1x16x16x128xf32, #tpu.memory_space<vmem>>) attributes {dimension_semantics = [#tpu.dimension_semantics<parallel>], iteration_bounds = array<i64: 4>, scalar_prefetch = 0 : i64, scratch_operands = 0 : i64, tpu.core_type = #tpu.core_type<tc>, window_params = [{transform_indices = @transform_0, window_bounds = array<i64: 1, 16, 16, 128>}, {pipeline_mode = #tpu.pipeline_mode<synchronous>, transform_indices = @transform_1, window_bounds = array<i64: 1, 1, 128>}, {pipeline_mode = #tpu.pipeline_mode<synchronous>, transform_indices = @transform_2, window_bounds = array<i64: 1, 1, 128>}, {pipeline_mode = #tpu.pipeline_mode<synchronous>, transform_indices = @transform_3, window_bounds = array<i64: 3, 384, 128>}, {pipeline_mode = #tpu.pipeline_mode<synchronous>, transform_indices = @transform_4, window_bounds = array<i64: 1, 1, 128>}, {pipeline_mode = #tpu.pipeline_mode<synchronous>, transform_indices = @transform_5, window_bounds = array<i64: 3, 384, 128>}, {transform_indices = @transform_6, window_bounds = array<i64: 1, 16, 16, 128>}]} {
    %c0 = arith.constant 0 : index
    %c0_0 = arith.constant 0 : index
    %c0_1 = arith.constant 0 : index
    %c0_2 = arith.constant 0 : index
    %0 = vector.load %arg1[%c0, %c0_0, %c0_1, %c0_2] : memref<1x16x16x128xf32, #tpu.memory_space<vmem>>, vector<1x16x16x128xf32>
    %1 = vector.shape_cast %0 : vector<1x16x16x128xf32> to vector<16x16x128xf32>
    %c0_3 = arith.constant 0 : index
    %c0_4 = arith.constant 0 : index
    %c0_5 = arith.constant 0 : index
    %2 = vector.load %arg2[%c0_3, %c0_4, %c0_5] : memref<1x1x128xf32, #tpu.memory_space<vmem>>, vector<1x1x128xf32>
    %3 = vector.broadcast %2 : vector<1x1x128xf32> to vector<16x16x128xf32>
    %4 = arith.mulf %1, %3 : vector<16x16x128xf32>
    %c0_6 = arith.constant 0 : index
    %c0_7 = arith.constant 0 : index
    %c0_8 = arith.constant 0 : index
    %5 = vector.load %arg3[%c0_6, %c0_7, %c0_8] : memref<1x1x128xf32, #tpu.memory_space<vmem>>, vector<1x1x128xf32>
    %6 = vector.broadcast %5 : vector<1x1x128xf32> to vector<16x16x128xf32>
    %7 = arith.addf %4, %6 : vector<16x16x128xf32>
    %cst = arith.constant 0.000000e+00 : f32
    %8 = vector.broadcast %cst : f32 to vector<16x16x128xf32>
    %9 = arith.maximumf %7, %8 : vector<16x16x128xf32>
    %c0_9 = arith.constant 0 : index
    %c0_10 = arith.constant 0 : index
    %c0_11 = arith.constant 0 : index
    %10 = vector.load %arg4[%c0_9, %c0_10, %c0_11] : memref<3x384x128xbf16, #tpu.memory_space<vmem>>, vector<3x384x128xbf16>
    %11 = tpu.iota {dimensions = array<i32: 1>} : vector<16x16x128xi32>
    %c0_i32 = arith.constant 0 : i32
    %12 = vector.broadcast %c0_i32 : i32 to vector<16x16x128xi32>
    %13 = arith.cmpi eq, %11, %12 : vector<16x16x128xi32>
    %c1_i32 = arith.constant 1 : i32
    %14 = tpu.dynamic_rotate %9 by %c1_i32 dim 1 : vector<16x16x128xf32>, i32 -> vector<16x16x128xf32>
    %cst_12 = arith.constant 0.000000e+00 : f32
    %15 = vector.broadcast %cst_12 : f32 to vector<16x16x128xf32>
    %16 = arith.select %13, %15, %14 : vector<16x16x128xi1>, vector<16x16x128xf32>
    %c15_i32 = arith.constant 15 : i32
    %17 = vector.broadcast %c15_i32 : i32 to vector<16x16x128xi32>
    %18 = arith.cmpi eq, %11, %17 : vector<16x16x128xi32>
    %c15_i32_13 = arith.constant 15 : i32
    %19 = tpu.dynamic_rotate %9 by %c15_i32_13 dim 1 : vector<16x16x128xf32>, i32 -> vector<16x16x128xf32>
    %cst_14 = arith.constant 0.000000e+00 : f32
    %20 = vector.broadcast %cst_14 : f32 to vector<16x16x128xf32>
    %21 = arith.select %18, %20, %19 : vector<16x16x128xi1>, vector<16x16x128xf32>
    %22 = arith.truncf %16 : vector<16x16x128xf32> to vector<16x16x128xbf16>
    %23 = arith.truncf %9 : vector<16x16x128xf32> to vector<16x16x128xbf16>
    %24 = arith.truncf %21 : vector<16x16x128xf32> to vector<16x16x128xbf16>
    %25 = tpu.concatenate %22, %23, %24 in 2 : vector<16x16x128xbf16>, vector<16x16x128xbf16>, vector<16x16x128xbf16> -> vector<16x16x384xbf16>
    %cst_15 = arith.constant 0.000000e+00 : bf16
    %26 = vector.broadcast %cst_15 : bf16 to vector<1x16x384xbf16>
    %27 = tpu.concatenate %26, %25, %26 in 0 : vector<1x16x384xbf16>, vector<16x16x384xbf16>, vector<1x16x384xbf16> -> vector<18x16x384xbf16>
    %cst_16 = arith.constant 0.000000e+00 : f32
    %28 = vector.broadcast %cst_16 : f32 to vector<256x128xf32>
    %29 = vector.extract_strided_slice %27 {offsets = [0, 0, 0], sizes = [16, 16, 384], strides = [1, 1, 1]} : vector<18x16x384xbf16> to vector<16x16x384xbf16>
    %30 = vector.shape_cast %29 : vector<16x16x384xbf16> to vector<256x384xbf16>
    %31 = vector.extract_strided_slice %10 {offsets = [0, 0, 0], sizes = [1, 384, 128], strides = [1, 1, 1]} : vector<3x384x128xbf16> to vector<1x384x128xbf16>
    %32 = vector.shape_cast %31 : vector<1x384x128xbf16> to vector<384x128xbf16>
    %cst_17 = arith.constant dense<0.000000e+00> : vector<256x128xf32>
    %33 = tpu.matmul %30, %32, %cst_17 {dimension_numbers = #tpu.dot_dimension_numbers<[1], [0], [0], [1], [0, 0, 1, 1], [], []>} : vector<256x384xbf16>, vector<384x128xbf16>, vector<256x128xf32> -> vector<256x128xf32>
    %34 = arith.addf %28, %33 : vector<256x128xf32>
    %35 = vector.extract_strided_slice %27 {offsets = [1, 0, 0], sizes = [16, 16, 384], strides = [1, 1, 1]} : vector<18x16x384xbf16> to vector<16x16x384xbf16>
    %36 = vector.shape_cast %35 : vector<16x16x384xbf16> to vector<256x384xbf16>
    %37 = vector.extract_strided_slice %10 {offsets = [1, 0, 0], sizes = [1, 384, 128], strides = [1, 1, 1]} : vector<3x384x128xbf16> to vector<1x384x128xbf16>
    %38 = vector.shape_cast %37 : vector<1x384x128xbf16> to vector<384x128xbf16>
    %cst_18 = arith.constant dense<0.000000e+00> : vector<256x128xf32>
    %39 = tpu.matmul %36, %38, %cst_18 {dimension_numbers = #tpu.dot_dimension_numbers<[1], [0], [0], [1], [0, 0, 1, 1], [], []>} : vector<256x384xbf16>, vector<384x128xbf16>, vector<256x128xf32> -> vector<256x128xf32>
    %40 = arith.addf %34, %39 : vector<256x128xf32>
    %41 = vector.extract_strided_slice %27 {offsets = [2, 0, 0], sizes = [16, 16, 384], strides = [1, 1, 1]} : vector<18x16x384xbf16> to vector<16x16x384xbf16>
    %42 = vector.shape_cast %41 : vector<16x16x384xbf16> to vector<256x384xbf16>
    %43 = vector.extract_strided_slice %10 {offsets = [2, 0, 0], sizes = [1, 384, 128], strides = [1, 1, 1]} : vector<3x384x128xbf16> to vector<1x384x128xbf16>
    %44 = vector.shape_cast %43 : vector<1x384x128xbf16> to vector<384x128xbf16>
    %cst_19 = arith.constant dense<0.000000e+00> : vector<256x128xf32>
    %45 = tpu.matmul %42, %44, %cst_19 {dimension_numbers = #tpu.dot_dimension_numbers<[1], [0], [0], [1], [0, 0, 1, 1], [], []>} : vector<256x384xbf16>, vector<384x128xbf16>, vector<256x128xf32> -> vector<256x128xf32>
    %46 = arith.addf %40, %45 : vector<256x128xf32>
    %47 = vector.shape_cast %46 : vector<256x128xf32> to vector<16x16x128xf32>
    %c0_20 = arith.constant 0 : index
    %c0_21 = arith.constant 0 : index
    %c0_22 = arith.constant 0 : index
    %48 = vector.load %arg5[%c0_20, %c0_21, %c0_22] : memref<1x1x128xf32, #tpu.memory_space<vmem>>, vector<1x1x128xf32>
    %49 = vector.broadcast %48 : vector<1x1x128xf32> to vector<16x16x128xf32>
    %50 = arith.addf %47, %49 : vector<16x16x128xf32>
    %cst_23 = arith.constant 0.000000e+00 : f32
    %51 = vector.broadcast %cst_23 : f32 to vector<16x16x128xf32>
    %52 = arith.maximumf %50, %51 : vector<16x16x128xf32>
    %c0_24 = arith.constant 0 : index
    %c0_25 = arith.constant 0 : index
    %c0_26 = arith.constant 0 : index
    %53 = vector.load %arg6[%c0_24, %c0_25, %c0_26] : memref<3x384x128xbf16, #tpu.memory_space<vmem>>, vector<3x384x128xbf16>
    %54 = tpu.iota {dimensions = array<i32: 1>} : vector<16x16x128xi32>
    %c0_i32_27 = arith.constant 0 : i32
    %55 = vector.broadcast %c0_i32_27 : i32 to vector<16x16x128xi32>
    %56 = arith.cmpi eq, %54, %55 : vector<16x16x128xi32>
    %c1_i32_28 = arith.constant 1 : i32
    %57 = tpu.dynamic_rotate %52 by %c1_i32_28 dim 1 : vector<16x16x128xf32>, i32 -> vector<16x16x128xf32>
    %cst_29 = arith.constant 0.000000e+00 : f32
    %58 = vector.broadcast %cst_29 : f32 to vector<16x16x128xf32>
    %59 = arith.select %56, %58, %57 : vector<16x16x128xi1>, vector<16x16x128xf32>
    %c15_i32_30 = arith.constant 15 : i32
    %60 = vector.broadcast %c15_i32_30 : i32 to vector<16x16x128xi32>
    %61 = arith.cmpi eq, %54, %60 : vector<16x16x128xi32>
    %c15_i32_31 = arith.constant 15 : i32
    %62 = tpu.dynamic_rotate %52 by %c15_i32_31 dim 1 : vector<16x16x128xf32>, i32 -> vector<16x16x128xf32>
    %cst_32 = arith.constant 0.000000e+00 : f32
    %63 = vector.broadcast %cst_32 : f32 to vector<16x16x128xf32>
    %64 = arith.select %61, %63, %62 : vector<16x16x128xi1>, vector<16x16x128xf32>
    %65 = arith.truncf %59 : vector<16x16x128xf32> to vector<16x16x128xbf16>
    %66 = arith.truncf %52 : vector<16x16x128xf32> to vector<16x16x128xbf16>
    %67 = arith.truncf %64 : vector<16x16x128xf32> to vector<16x16x128xbf16>
    %68 = tpu.concatenate %65, %66, %67 in 2 : vector<16x16x128xbf16>, vector<16x16x128xbf16>, vector<16x16x128xbf16> -> vector<16x16x384xbf16>
    %cst_33 = arith.constant 0.000000e+00 : bf16
    %69 = vector.broadcast %cst_33 : bf16 to vector<1x16x384xbf16>
    %70 = tpu.concatenate %69, %68, %69 in 0 : vector<1x16x384xbf16>, vector<16x16x384xbf16>, vector<1x16x384xbf16> -> vector<18x16x384xbf16>
    %cst_34 = arith.constant 0.000000e+00 : f32
    %71 = vector.broadcast %cst_34 : f32 to vector<256x128xf32>
    %72 = vector.extract_strided_slice %70 {offsets = [0, 0, 0], sizes = [16, 16, 384], strides = [1, 1, 1]} : vector<18x16x384xbf16> to vector<16x16x384xbf16>
    %73 = vector.shape_cast %72 : vector<16x16x384xbf16> to vector<256x384xbf16>
    %74 = vector.extract_strided_slice %53 {offsets = [0, 0, 0], sizes = [1, 384, 128], strides = [1, 1, 1]} : vector<3x384x128xbf16> to vector<1x384x128xbf16>
    %75 = vector.shape_cast %74 : vector<1x384x128xbf16> to vector<384x128xbf16>
    %cst_35 = arith.constant dense<0.000000e+00> : vector<256x128xf32>
    %76 = tpu.matmul %73, %75, %cst_35 {dimension_numbers = #tpu.dot_dimension_numbers<[1], [0], [0], [1], [0, 0, 1, 1], [], []>} : vector<256x384xbf16>, vector<384x128xbf16>, vector<256x128xf32> -> vector<256x128xf32>
    %77 = arith.addf %71, %76 : vector<256x128xf32>
    %78 = vector.extract_strided_slice %70 {offsets = [1, 0, 0], sizes = [16, 16, 384], strides = [1, 1, 1]} : vector<18x16x384xbf16> to vector<16x16x384xbf16>
    %79 = vector.shape_cast %78 : vector<16x16x384xbf16> to vector<256x384xbf16>
    %80 = vector.extract_strided_slice %53 {offsets = [1, 0, 0], sizes = [1, 384, 128], strides = [1, 1, 1]} : vector<3x384x128xbf16> to vector<1x384x128xbf16>
    %81 = vector.shape_cast %80 : vector<1x384x128xbf16> to vector<384x128xbf16>
    %cst_36 = arith.constant dense<0.000000e+00> : vector<256x128xf32>
    %82 = tpu.matmul %79, %81, %cst_36 {dimension_numbers = #tpu.dot_dimension_numbers<[1], [0], [0], [1], [0, 0, 1, 1], [], []>} : vector<256x384xbf16>, vector<384x128xbf16>, vector<256x128xf32> -> vector<256x128xf32>
    %83 = arith.addf %77, %82 : vector<256x128xf32>
    %84 = vector.extract_strided_slice %70 {offsets = [2, 0, 0], sizes = [16, 16, 384], strides = [1, 1, 1]} : vector<18x16x384xbf16> to vector<16x16x384xbf16>
    %85 = vector.shape_cast %84 : vector<16x16x384xbf16> to vector<256x384xbf16>
    %86 = vector.extract_strided_slice %53 {offsets = [2, 0, 0], sizes = [1, 384, 128], strides = [1, 1, 1]} : vector<3x384x128xbf16> to vector<1x384x128xbf16>
    %87 = vector.shape_cast %86 : vector<1x384x128xbf16> to vector<384x128xbf16>
    %cst_37 = arith.constant dense<0.000000e+00> : vector<256x128xf32>
    %88 = tpu.matmul %85, %87, %cst_37 {dimension_numbers = #tpu.dot_dimension_numbers<[1], [0], [0], [1], [0, 0, 1, 1], [], []>} : vector<256x384xbf16>, vector<384x128xbf16>, vector<256x128xf32> -> vector<256x128xf32>
    %89 = arith.addf %83, %88 : vector<256x128xf32>
    %90 = vector.shape_cast %89 : vector<256x128xf32> to vector<16x16x128xf32>
    %c0_38 = arith.constant 0 : index
    %c0_39 = arith.constant 0 : index
    %c0_40 = arith.constant 0 : index
    %c0_41 = arith.constant 0 : index
    %91 = vector.load %arg1[%c0_38, %c0_39, %c0_40, %c0_41] : memref<1x16x16x128xf32, #tpu.memory_space<vmem>>, vector<1x16x16x128xf32>
    %92 = vector.shape_cast %91 : vector<1x16x16x128xf32> to vector<16x16x128xf32>
    %93 = arith.addf %90, %92 : vector<16x16x128xf32>
    %c0_42 = arith.constant 0 : index
    %c0_43 = arith.constant 0 : index
    %c0_44 = arith.constant 0 : index
    %c0_45 = arith.constant 0 : index
    %94 = vector.load %arg7[%c0_42, %c0_43, %c0_44, %c0_45] : memref<1x16x16x128xf32, #tpu.memory_space<vmem>>, vector<1x16x16x128xf32>
    %95 = vector.shape_cast %94 : vector<1x16x16x128xf32> to vector<16x16x128xf32>
    %96 = vector.shape_cast %93 : vector<16x16x128xf32> to vector<1x16x16x128xf32>
    tpu.vector_store %arg7[%c0_42, %c0_43, %c0_44, %c0_45], %96 {strides = array<i32>} : memref<1x16x16x128xf32, #tpu.memory_space<vmem>>, vector<1x16x16x128xf32>,
    return
  }
  func.func @transform_0(%arg0: i32) -> (i32, i32, i32, i32) {
    %c0_i32 = arith.constant 0 : i32
    %c0_i32_0 = arith.constant 0 : i32
    %c0_i32_1 = arith.constant 0 : i32
    %c0_i32_2 = arith.constant 0 : i32
    return %arg0, %c0_i32, %c0_i32_0, %c0_i32_1 : i32, i32, i32, i32
  }
  func.func @transform_1(%arg0: i32) -> (i32, i32, i32) {
    %c0_i32 = arith.constant 0 : i32
    %c0_i32_0 = arith.constant 0 : i32
    %c0_i32_1 = arith.constant 0 : i32
    %c0_i32_2 = arith.constant 0 : i32
    return %c0_i32, %c0_i32_0, %c0_i32_1 : i32, i32, i32
  }
  func.func @transform_2(%arg0: i32) -> (i32, i32, i32) {
    %c0_i32 = arith.constant 0 : i32
    %c0_i32_0 = arith.constant 0 : i32
    %c0_i32_1 = arith.constant 0 : i32
    %c0_i32_2 = arith.constant 0 : i32
    return %c0_i32, %c0_i32_0, %c0_i32_1 : i32, i32, i32
  }
  func.func @transform_3(%arg0: i32) -> (i32, i32, i32) {
    %c0_i32 = arith.constant 0 : i32
    %c0_i32_0 = arith.constant 0 : i32
    %c0_i32_1 = arith.constant 0 : i32
    %c0_i32_2 = arith.constant 0 : i32
    return %c0_i32, %c0_i32_0, %c0_i32_1 : i32, i32, i32
  }
  func.func @transform_4(%arg0: i32) -> (i32, i32, i32) {
    %c0_i32 = arith.constant 0 : i32
    %c0_i32_0 = arith.constant 0 : i32
    %c0_i32_1 = arith.constant 0 : i32
    %c0_i32_2 = arith.constant 0 : i32
    return %c0_i32, %c0_i32_0, %c0_i32_1 : i32, i32, i32
  }
  func.func @transform_5(%arg0: i32) -> (i32, i32, i32) {
    %c0_i32 = arith.constant 0 : i32
    %c0_i32_0 = arith.constant 0 : i32
    %c0_i32_1 = arith.constant 0 : i32
    %c0_i32_2 = arith.constant 0 : i32
    return %c0_i32, %c0_i32_0, %c0_i32_1 : i32, i32, i32
  }
  func.func @transform_6(%arg0: i32) -> (i32, i32, i32, i32) {
    %c0_i32 = arith.constant 0 : i32
    %c0_i32_0 = arith.constant 0 : i32
    %c0_i32_1 = arith.constant 0 : i32
    %c0_i32_2 = arith.constant 0 : i32
    return %arg0, %c0_i32, %c0_i32_0, %c0_i32_1 : i32, i32, i32, i32
  }
}

</mosaic_0001>

<llo_original>
// kernel: tpu_custom_call.1
$region0: #{tpu_custom_call.1}
  #allocation0 [shape = 'u32[]', space=smem, size = 0x4, offset = 0x4, fixed_abs, tag = 'smem constant byte address 0x4 - core index']
  #allocation1 [shape = 'u32[144,128]{1,0:T(1,128)}', space=vmem, size = 0x12000, scoped, tag = 'internal scratch']
  %s0 = inlined_call_operand.hbm [shape: f32[4,16,16,128], index: 0, kind: input, shape index: {}]
  %s1 = inlined_call_operand.vmem [shape: f32[1,1,128], index: 1, kind: input, shape index: {}]
  %s2 = inlined_call_operand.vmem [shape: f32[1,1,128], index: 2, kind: input, shape index: {}]
  %s3 = inlined_call_operand.hbm [shape: bf16[3,384,128], index: 3, kind: input, shape index: {}]
  %s4 = inlined_call_operand.vmem [shape: f32[1,1,128], index: 4, kind: input, shape index: {}]
  %s5 = inlined_call_operand.hbm [shape: bf16[3,384,128], index: 5, kind: input, shape index: {}]
  %s6 = inlined_call_operand.hbm [shape: f32[4,16,16,128], index: 6, kind: output, shape index: {}]
  %s7 = sld [smem:[#allocation0]]
  $region69: #{tpu_custom_call.1} parent=0
    _
  %s9 = ssub.s32 1, %s7
  %s10 = scalar_select 0, %s9, %s7
  $region1: #{tpu_custom_call.1} parent=0
    #allocation2 [shape = 'u8[262144]{0}', space=vmem, size = 0x40000, scoped, tag = 'input window, operand 0']
    #allocation3 [shape = 's32[2]{0}', space=sflag, size = 0x8, scoped, tag = 'scoped memory for tpu_custom_call.1']
    #allocation4 [shape = 's32[2]{0}', space=sflag, size = 0x8, scoped, tag = 'scoped memory for tpu_custom_call.1']
    #allocation5 [shape = 'u8[294912]{0}', space=vmem, size = 0x48000, scoped, tag = 'input window, operand 3, single buffered']
    #allocation6 [shape = 's32[1]{0}', space=sflag, size = 0x4, scoped, tag = 'scoped memory for tpu_custom_call.1']
    #allocation7 [shape = 'u8[294912]{0}', space=vmem, size = 0x48000, scoped, tag = 'input window, operand 5, single buffered']
    #allocation8 [shape = 'u8[262144]{0}', space=vmem, size = 0x40000, scoped, tag = 'output window, operand 0']
    %11 = vsyncpa [#allocation3], 0
    %s12 = scalar_lea.sflag [#allocation3], 1
    %13 = vsyncpa %s12, 0
    %14 = vsyncpa [#allocation6], 0
    %15 = vsyncpa [#allocation4], 0
    %s16 = scalar_lea.sflag [#allocation4], 1
    %17 = vsyncpa %s16, 0
    loop: start=0, step=1, limit=6
    $region2: #{tpu_custom_call.1} parent=1 // loop_pre_header
      _
    $region3: #{tpu_custom_call.1} parent=1 // loop_header
      %s19 = sphi 0, %s23
      %p20 = scmp.ge.s32.totalorder %s19, 6
      %s29 = sphi 0, %s31
      %s32 = sphi 0, %s29
      %s33 = sphi 0, %s32
      %s49 = sphi 0, %s33
      %s53 = sphi 0, %s53
      %s55 = sphi 0, %s53
      %s56 = sphi 0, %s55
      %s70 = sphi 0, %s56
      %s74 = sphi 0, %s74
      %s76 = sphi 0, %s74
      %s77 = sphi 0, %s76
      %s91 = sphi 0, %s77
      %s95 = sphi 0, %s95
      %s97 = sphi 0, %s95
      %s98 = sphi 0, %s97
      %s112 = sphi 0, %s98
      %s116 = sphi 0, %s116
      %s118 = sphi 0, %s116
      %s119 = sphi 0, %s118
      %s133 = sphi 0, %s119
      %s137 = sphi 0, %s137
      %s139 = sphi 0, %s137
      %s140 = sphi 0, %s139
      %s154 = sphi 0, %s140
      %s160 = sphi 0, %s162
      %s163 = sphi 0, %s160
      %s164 = sphi 0, %s163
      %s180 = sphi 0, %s164
    $region4: #{tpu_custom_call.1} parent=1 // loop_header_branch
      %22 = sbr.rel (%p20) target = $region8
    $region5: #{tpu_custom_call.1} parent=1 // loop_body
      %s24 = ssub.s32 %s19, 1
      %s25 = ssub.s32 %s19, 2
      %s26 = sadd.s32 %s19, 1
      %s27 = ssub.s32 %s19, %s26
      %p28 = scmp.eq.s32.totalorder %s27, 0
      %s30 = sadd.s32 %s29, 1
      %s31 = scalar_select %p28, %s29, %s30
      %p34 = pneg %p28
      %p35 = scmp.eq.s32.totalorder %s19, 3
      %p36 = por %p34, %p35
      %p37 = scmp.ne.s32.totalorder %s29, %s32
      %p38 = scmp.eq.s32.totalorder %s19, 0
      %p39 = por %p37, %p38
      %p40 = scmp.ne.s32.totalorder %s29, %s32
      %p41 = scmp.eq.s32.totalorder %s24, 3
      %p42 = por %p40, %p41
      %p43 = scmp.ne.s32.totalorder %s32, %s33
      %p44 = scmp.eq.s32.totalorder %s24, 0
      %p45 = por %p43, %p44
      %p46 = scmp.ne.s32.totalorder %s32, %s33
      %p47 = scmp.eq.s32.totalorder %s25, 3
      %p48 = por %p46, %p47
      %p50 = scmp.ne.s32.totalorder %s33, %s49
      %p51 = scmp.eq.s32.totalorder %s25, 0
      %p52 = por %p50, %p51
      %s54 = sadd.s32 %s53, 1
      %p57 = scmp.eq.s32.totalorder %s19, 3
      %p58 = scmp.ne.s32.totalorder %s53, %s55
      %p59 = scmp.eq.s32.totalorder %s19, 0
      %p60 = por %p58, %p59
      %p61 = scmp.ne.s32.totalorder %s53, %s55
      %p62 = scmp.eq.s32.totalorder %s24, 3
      %p63 = por %p61, %p62
      %p64 = scmp.ne.s32.totalorder %s55, %s56
      %p65 = scmp.eq.s32.totalorder %s24, 0
      %p66 = por %p64, %p65
      %p67 = scmp.ne.s32.totalorder %s55, %s56
      %p68 = scmp.eq.s32.totalorder %s25, 3
      %p69 = por %p67, %p68
      %p71 = scmp.ne.s32.totalorder %s56, %s70
      %p72 = scmp.eq.s32.totalorder %s25, 0
      %p73 = por %p71, %p72
      %s75 = sadd.s32 %s74, 1
      %p78 = scmp.eq.s32.totalorder %s19, 3
      %p79 = scmp.ne.s32.totalorder %s74, %s76
      %p80 = scmp.eq.s32.totalorder %s19, 0
      %p81 = por %p79, %p80
      %p82 = scmp.ne.s32.totalorder %s74, %s76
      %p83 = scmp.eq.s32.totalorder %s24, 3
      %p84 = por %p82, %p83
      %p85 = scmp.ne.s32.totalorder %s76, %s77
      %p86 = scmp.eq.s32.totalorder %s24, 0
      %p87 = por %p85, %p86
      %p88 = scmp.ne.s32.totalorder %s76, %s77
      %p89 = scmp.eq.s32.totalorder %s25, 3
      %p90 = por %p88, %p89
      %p92 = scmp.ne.s32.totalorder %s77, %s91
      %p93 = scmp.eq.s32.totalorder %s25, 0
      %p94 = por %p92, %p93
      %s96 = sadd.s32 %s95, 1
      %p99 = scmp.eq.s32.totalorder %s19, 3
      %p100 = scmp.ne.s32.totalorder %s95, %s97
      %p101 = scmp.eq.s32.totalorder %s19, 0
      %p102 = por %p100, %p101
      %p103 = scmp.ne.s32.totalorder %s95, %s97
      %p104 = scmp.eq.s32.totalorder %s24, 3
      %p105 = por %p103, %p104
      %p106 = scmp.ne.s32.totalorder %s97, %s98
      %p107 = scmp.eq.s32.totalorder %s24, 0
      %p108 = por %p106, %p107
      %p109 = scmp.ne.s32.totalorder %s97, %s98
      %p110 = scmp.eq.s32.totalorder %s25, 3
      %p111 = por %p109, %p110
      %p113 = scmp.ne.s32.totalorder %s98, %s112
      %p114 = scmp.eq.s32.totalorder %s25, 0
      %p115 = por %p113, %p114
      %s117 = sadd.s32 %s116, 1
      %p120 = scmp.eq.s32.totalorder %s19, 3
      %p121 = scmp.ne.s32.totalorder %s116, %s118
      %p122 = scmp.eq.s32.totalorder %s19, 0
      %p123 = por %p121, %p122
      %p124 = scmp.ne.s32.totalorder %s116, %s118
      %p125 = scmp.eq.s32.totalorder %s24, 3
      %p126 = por %p124, %p125
      %p127 = scmp.ne.s32.totalorder %s118, %s119
      %p128 = scmp.eq.s32.totalorder %s24, 0
      %p129 = por %p127, %p128
      %p130 = scmp.ne.s32.totalorder %s118, %s119
      %p131 = scmp.eq.s32.totalorder %s25, 3
      %p132 = por %p130, %p131
      %p134 = scmp.ne.s32.totalorder %s119, %s133
      %p135 = scmp.eq.s32.totalorder %s25, 0
      %p136 = por %p134, %p135
      %s138 = sadd.s32 %s137, 1
      %p141 = scmp.eq.s32.totalorder %s19, 3
      %p142 = scmp.ne.s32.totalorder %s137, %s139
      %p143 = scmp.eq.s32.totalorder %s19, 0
      %p144 = por %p142, %p143
      %p145 = scmp.ne.s32.totalorder %s137, %s139
      %p146 = scmp.eq.s32.totalorder %s24, 3
      %p147 = por %p145, %p146
      %p148 = scmp.ne.s32.totalorder %s139, %s140
      %p149 = scmp.eq.s32.totalorder %s24, 0
      %p150 = por %p148, %p149
      %p151 = scmp.ne.s32.totalorder %s139, %s140
      %p152 = scmp.eq.s32.totalorder %s25, 3
      %p153 = por %p151, %p152
      %p155 = scmp.ne.s32.totalorder %s140, %s154
      %p156 = scmp.eq.s32.totalorder %s25, 0
      %p157 = por %p155, %p156
      %s158 = ssub.s32 %s19, %s26
      %p159 = scmp.eq.s32.totalorder %s158, 0
      %s161 = sadd.s32 %s160, 1
      %s162 = scalar_select %p159, %s160, %s161
      %p165 = pneg %p159
      %p166 = scmp.eq.s32.totalorder %s19, 3
      %p167 = por %p165, %p166
      %p168 = scmp.ne.s32.totalorder %s160, %s163
      %p169 = scmp.eq.s32.totalorder %s19, 0
      %p170 = por %p168, %p169
      %p171 = scmp.ne.s32.totalorder %s160, %s163
      %p172 = scmp.eq.s32.totalorder %s24, 3
      %p173 = por %p171, %p172
      %p174 = scmp.ne.s32.totalorder %s163, %s164
      %p175 = scmp.eq.s32.totalorder %s24, 0
      %p176 = por %p174, %p175
      %p177 = scmp.ne.s32.totalorder %s163, %s164
      %p178 = scmp.eq.s32.totalorder %s25, 3
      %p179 = por %p177, %p178
      %p181 = scmp.ne.s32.totalorder %s164, %s180
      %p182 = scmp.eq.s32.totalorder %s25, 0
      %p183 = por %p181, %p182
      %p184 = scmp.le.s32.totalorder 1, %s19
      %p185 = scmp.lt.s32.totalorder %s19, 5
      %p186 = pnand %p184, %p185
      %p187 = pneg %p186
      // Predicated region
      $region9: #{tpu_custom_call.1} parent=5 // pred_check
        _
      $region10: #{tpu_custom_call.1} parent=5 // pred_check_branch
        %189 = sbr.rel (%p186) target = $region12
      $region11: #{tpu_custom_call.1} parent=5 // pred_region
        %s190 = ssub.s32 %s19, 1
        // Predicated region
        $region13: #{tpu_custom_call.1} parent=11 // pred_check
          %p191 = pneg %p66
        $region14: #{tpu_custom_call.1} parent=11 // pred_check_branch
          %193 = sbr.rel (%p191) target = $region16
        $region15: #{tpu_custom_call.1} parent=11 // pred_region
          _
        $region16: #{tpu_custom_call.1} parent=11 // pred_fallthru
          _
        // Predicated region
        $region17: #{tpu_custom_call.1} parent=11 // pred_check
          %p194 = pneg %p87
        $region18: #{tpu_custom_call.1} parent=11 // pred_check_branch
          %196 = sbr.rel (%p194) target = $region20
        $region19: #{tpu_custom_call.1} parent=11 // pred_region
          _
        $region20: #{tpu_custom_call.1} parent=11 // pred_fallthru
          _
        // Predicated region
        $region21: #{tpu_custom_call.1} parent=11 // pred_check
          %p197 = pneg %p108
        $region22: #{tpu_custom_call.1} parent=11 // pred_check_branch
          %199 = sbr.rel (%p197) target = $region24
        $region23: #{tpu_custom_call.1} parent=11 // pred_region
          %s201 = ssub.s32 9216, 9216
          %202 = vsyncadd [#allocation6], %s201
          %s203 = sshll.u32 [#allocation5], 4
          %s204 = int_to_ptr.vmem [resolvable:$true] %s203
          %209 = dma.hbm_to_vmem [thread:$0]  %s3, 9216, %s204, [#allocation6], 64, 64, 4
        $region24: #{tpu_custom_call.1} parent=11 // pred_fallthru
          _
        // Predicated region
        $region25: #{tpu_custom_call.1} parent=11 // pred_check
          %p210 = pneg %p129
        $region26: #{tpu_custom_call.1} parent=11 // pred_check_branch
          %212 = sbr.rel (%p210) target = $region28
        $region27: #{tpu_custom_call.1} parent=11 // pred_region
          _
        $region28: #{tpu_custom_call.1} parent=11 // pred_fallthru
          _
        // Predicated region
        $region29: #{tpu_custom_call.1} parent=11 // pred_check
          %p213 = pneg %p150
        $region30: #{tpu_custom_call.1} parent=11 // pred_check_branch
          %215 = sbr.rel (%p213) target = $region32
        $region31: #{tpu_custom_call.1} parent=11 // pred_region
          %s217 = ssub.s32 9216, 9216
          %218 = vsyncadd [#allocation6], %s217
          %s219 = sshll.u32 [#allocation7], 4
          %s220 = int_to_ptr.vmem [resolvable:$true] %s219
          %225 = dma.hbm_to_vmem [thread:$0]  %s5, 9216, %s220, [#allocation6], 64, 64, 4
        $region32: #{tpu_custom_call.1} parent=11 // pred_fallthru
          _
      $region12: #{tpu_custom_call.1} parent=5 // pred_fallthru
        _
      %p226 = scmp.lt.s32.totalorder %s19, 4
      // Predicated region
      $region33: #{tpu_custom_call.1} parent=5 // pred_check
        %p227 = pneg %p226
      $region34: #{tpu_custom_call.1} parent=5 // pred_check_branch
        %229 = sbr.rel (%p227) target = $region36
      $region35: #{tpu_custom_call.1} parent=5 // pred_region
        // Predicated region
        $region37: #{tpu_custom_call.1} parent=35 // pred_check
          %p230 = pneg %p39
        $region38: #{tpu_custom_call.1} parent=35 // pred_check_branch
          %232 = sbr.rel (%p230) target = $region40
        $region39: #{tpu_custom_call.1} parent=35 // pred_region
          %s233 = sand.u32 %s29, 1
          %s234 = scalar_lea.sflag [#allocation3], %s233
          %s235 = sand.u32 %s29, 1
          %s236 = smul.addr %s235, 256
          %s237 = scalar_lea.vmem [#allocation2], %s236
          %s239 = ssub.s32 4096, 4096
          %240 = vsyncadd %s234, %s239
          %s241 = smul.addr %s19, 32
          %s242 = smul.addr %s241, 128
          %s243 = scalar_lea.hbm %s0, %s242
          %s244 = sshll.u32 %s237, 4
          %s245 = int_to_ptr.vmem [resolvable:$true] %s244
          %250 = dma.hbm_to_vmem [thread:$0]  %s243, 4096, %s245, %s234, 128, 128, 8
        $region40: #{tpu_custom_call.1} parent=35 // pred_fallthru
          _
      $region36: #{tpu_custom_call.1} parent=5 // pred_fallthru
        _
      %p251 = scmp.le.s32.totalorder 1, %s19
      %p252 = scmp.lt.s32.totalorder %s19, 5
      %p253 = pnand %p251, %p252
      %p254 = pneg %p253
      // Predicated region
      $region41: #{tpu_custom_call.1} parent=5 // pred_check
        _
      $region42: #{tpu_custom_call.1} parent=5 // pred_check_branch
        %256 = sbr.rel (%p253) target = $region44
      $region43: #{tpu_custom_call.1} parent=5 // pred_region
        %s257 = ssub.s32 %s19, 1
        %s258 = sand.u32 %s32, 1
        %s259 = scalar_lea.sflag [#allocation3], %s258
        %s260 = sand.u32 %s32, 1
        %s261 = smul.addr %s260, 256
        %s262 = scalar_lea.vmem [#allocation2], %s261
        // Predicated region
        $region45: #{tpu_custom_call.1} parent=43 // pred_check
          %p263 = pneg %p45
        $region46: #{tpu_custom_call.1} parent=43 // pred_check_branch
          %265 = sbr.rel (%p263) target = $region48
        $region47: #{tpu_custom_call.1} parent=43 // pred_region
          %266 = dma.done %s259, 4096
        $region48: #{tpu_custom_call.1} parent=43 // pred_fallthru
          _
        // Predicated region
        $region49: #{tpu_custom_call.1} parent=43 // pred_check
          %p267 = pneg %p108
        $region50: #{tpu_custom_call.1} parent=43 // pred_check_branch
          %269 = sbr.rel (%p267) target = $region52
        $region51: #{tpu_custom_call.1} parent=43 // pred_region
          %270 = dma.done [#allocation6], 9216
        $region52: #{tpu_custom_call.1} parent=43 // pred_fallthru
          _
        // Predicated region
        $region53: #{tpu_custom_call.1} parent=43 // pred_check
          %p271 = pneg %p150
        $region54: #{tpu_custom_call.1} parent=43 // pred_check_branch
          %273 = sbr.rel (%p271) target = $region56
        $region55: #{tpu_custom_call.1} parent=43 // pred_region
          %274 = dma.done [#allocation6], 9216
        $region56: #{tpu_custom_call.1} parent=43 // pred_fallthru
          _
        %s275 = sand.u32 %s32, 1
        %s276 = scalar_lea.sflag [#allocation3], %s275
        %s277 = sand.u32 %s32, 1
        %s278 = smul.addr %s277, 256
        %s279 = scalar_lea.vmem [#allocation2], %s278
        %p280 = pneg %p45
        %p281 = pneg %p42
        %p282 = pneg %p66
        %p283 = pneg %p63
        %p284 = pneg %p87
        %p285 = pneg %p84
        %p286 = pneg %p108
        %p287 = pneg %p105
        %p288 = pneg %p129
        %p289 = pneg %p126
        %p290 = pneg %p150
        %p291 = pneg %p147
        %p292 = pneg %p176
        %p293 = pneg %p173
        %s294 = sand.u32 %s163, 1
        %s295 = scalar_lea.sflag [#allocation4], %s294
        %s296 = sand.u32 %s163, 1
        %s297 = smul.addr %s296, 256
        %s298 = scalar_lea.vmem [#allocation8], %s297
        %v300 = vld [vmem:[%s262] sm:$0xff]
        %v301 = vld [vmem:[%s262 + $0x8] sm:$0xff]
        %v302 = vld [vmem:[%s262 + $0x10] sm:$0xff]
        %v303 = vld [vmem:[%s262 + $0x18] sm:$0xff]
        %v304 = vld [vmem:[%s262 + $0x20] sm:$0xff]
        %v305 = vld [vmem:[%s262 + $0x28] sm:$0xff]
        %v306 = vld [vmem:[%s262 + $0x30] sm:$0xff]
        %v307 = vld [vmem:[%s262 + $0x38] sm:$0xff]
        %v308 = vld [vmem:[%s262 + $0x40] sm:$0xff]
        %v309 = vld [vmem:[%s262 + $0x48] sm:$0xff]
        %v310 = vld [vmem:[%s262 + $0x50] sm:$0xff]
        %v311 = vld [vmem:[%s262 + $0x58] sm:$0xff]
        %v312 = vld [vmem:[%s262 + $0x60] sm:$0xff]
        %v313 = vld [vmem:[%s262 + $0x68] sm:$0xff]
        %v314 = vld [vmem:[%s262 + $0x70] sm:$0xff]
        %v315 = vld [vmem:[%s262 + $0x78] sm:$0xff]
        %v316 = vld [vmem:[%s262 + $0x80] sm:$0xff]
        %v317 = vld [vmem:[%s262 + $0x88] sm:$0xff]
        %v318 = vld [vmem:[%s262 + $0x90] sm:$0xff]
        %v319 = vld [vmem:[%s262 + $0x98] sm:$0xff]
        %v320 = vld [vmem:[%s262 + $0xa0] sm:$0xff]
        %v321 = vld [vmem:[%s262 + $0xa8] sm:$0xff]
        %v322 = vld [vmem:[%s262 + $0xb0] sm:$0xff]
        %v323 = vld [vmem:[%s262 + $0xb8] sm:$0xff]
        %v324 = vld [vmem:[%s262 + $0xc0] sm:$0xff]
        %v325 = vld [vmem:[%s262 + $0xc8] sm:$0xff]
        %v326 = vld [vmem:[%s262 + $0xd0] sm:$0xff]
        %v327 = vld [vmem:[%s262 + $0xd8] sm:$0xff]
        %v328 = vld [vmem:[%s262 + $0xe0] sm:$0xff]
        %v329 = vld [vmem:[%s262 + $0xe8] sm:$0xff]
        %v330 = vld [vmem:[%s262 + $0xf0] sm:$0xff]
        %v331 = vld [vmem:[%s262 + $0xf8] sm:$0xff]
        %v332 = vld [vmem:[%s1] sm:$0x1]
        %v334 = vlaneseq
        %v335 = vshrl.u32 %v334, 7
        %v336 = vsub.s32 0, %v335
        %v337 = vrot.slane %v332, %v336
        %v339 = vmul.f32 %v300, %v337
        %v340 = vmul.f32 %v301, %v337
        %v341 = vmul.f32 %v302, %v337
        %v342 = vmul.f32 %v303, %v337
        %v343 = vmul.f32 %v304, %v337
        %v344 = vmul.f32 %v305, %v337
        %v345 = vmul.f32 %v306, %v337
        %v346 = vmul.f32 %v307, %v337
        %v347 = vmul.f32 %v308, %v337
        %v348 = vmul.f32 %v309, %v337
        %v349 = vmul.f32 %v310, %v337
        %v350 = vmul.f32 %v311, %v337
        %v351 = vmul.f32 %v312, %v337
        %v352 = vmul.f32 %v313, %v337
        %v353 = vmul.f32 %v314, %v337
        %v354 = vmul.f32 %v315, %v337
        %v355 = vmul.f32 %v316, %v337
        %v356 = vmul.f32 %v317, %v337
        %v357 = vmul.f32 %v318, %v337
        %v358 = vmul.f32 %v319, %v337
        %v359 = vmul.f32 %v320, %v337
        %v360 = vmul.f32 %v321, %v337
        %v361 = vmul.f32 %v322, %v337
        %v362 = vmul.f32 %v323, %v337
        %v363 = vmul.f32 %v324, %v337
        %v364 = vmul.f32 %v325, %v337
        %v365 = vmul.f32 %v326, %v337
        %v366 = vmul.f32 %v327, %v337
        %v367 = vmul.f32 %v328, %v337
        %v368 = vmul.f32 %v329, %v337
        %v369 = vmul.f32 %v330, %v337
        %v370 = vmul.f32 %v331, %v337
        %v371 = vld [vmem:[%s2] sm:$0x1]
        %v373 = vlaneseq
        %v374 = vshrl.u32 %v373, 7
        %v375 = vsub.s32 0, %v374
        %v376 = vrot.slane %v371, %v375
        %v378 = vadd.f32 %v339, %v376
        %v379 = vadd.f32 %v340, %v376
        %v380 = vadd.f32 %v341, %v376
        %v381 = vadd.f32 %v342, %v376
        %v382 = vadd.f32 %v343, %v376
        %v383 = vadd.f32 %v344, %v376
        %v384 = vadd.f32 %v345, %v376
        %v385 = vadd.f32 %v346, %v376
        %v386 = vadd.f32 %v347, %v376
        %v387 = vadd.f32 %v348, %v376
        %v388 = vadd.f32 %v349, %v376
        %v389 = vadd.f32 %v350, %v376
        %v390 = vadd.f32 %v351, %v376
        %v391 = vadd.f32 %v352, %v376
        %v392 = vadd.f32 %v353, %v376
        %v393 = vadd.f32 %v354, %v376
        %v394 = vadd.f32 %v355, %v376
        %v395 = vadd.f32 %v356, %v376
        %v396 = vadd.f32 %v357, %v376
        %v397 = vadd.f32 %v358, %v376
        %v398 = vadd.f32 %v359, %v376
        %v399 = vadd.f32 %v360, %v376
        %v400 = vadd.f32 %v361, %v376
        %v401 = vadd.f32 %v362, %v376
        %v402 = vadd.f32 %v363, %v376
        %v403 = vadd.f32 %v364, %v376
        %v404 = vadd.f32 %v365, %v376
        %v405 = vadd.f32 %v366, %v376
        %v406 = vadd.f32 %v367, %v376
        %v407 = vadd.f32 %v368, %v376
        %v408 = vadd.f32 %v369, %v376
        %v409 = vadd.f32 %v370, %v376
        %v410 = vmax.f32 %v378, 0.0
        %v411 = vmax.f32 %v379, 0.0
        %v412 = vmax.f32 %v380, 0.0
        %v413 = vmax.f32 %v381, 0.0
        %v414 = vmax.f32 %v382, 0.0
        %v415 = vmax.f32 %v383, 0.0
        %v416 = vmax.f32 %v384, 0.0
        %v417 = vmax.f32 %v385, 0.0
        %v418 = vmax.f32 %v386, 0.0
        %v419 = vmax.f32 %v387, 0.0
        %v420 = vmax.f32 %v388, 0.0
        %v421 = vmax.f32 %v389, 0.0
        %v422 = vmax.f32 %v390, 0.0
        %v423 = vmax.f32 %v391, 0.0
        %v424 = vmax.f32 %v392, 0.0
        %v425 = vmax.f32 %v393, 0.0
        %v426 = vmax.f32 %v394, 0.0
        %v427 = vmax.f32 %v395, 0.0
        %v428 = vmax.f32 %v396, 0.0
        %v429 = vmax.f32 %v397, 0.0
        %v430 = vmax.f32 %v398, 0.0
        %v431 = vmax.f32 %v399, 0.0
        %v432 = vmax.f32 %v400, 0.0
        %v433 = vmax.f32 %v401, 0.0
        %v434 = vmax.f32 %v402, 0.0
        %v435 = vmax.f32 %v403, 0.0
        %v436 = vmax.f32 %v404, 0.0
        %v437 = vmax.f32 %v405, 0.0
        %v438 = vmax.f32 %v406, 0.0
        %v439 = vmax.f32 %v407, 0.0
        %v440 = vmax.f32 %v408, 0.0
        %v441 = vmax.f32 %v409, 0.0
        %v442 = vld [vmem:[#allocation5] sm:$0xf]
        %v443 = vld [vmem:[#allocation5 + $0x4] sm:$0xf]
        %v444 = vld [vmem:[#allocation5 + $0x8] sm:$0xf]
        %v445 = vld [vmem:[#allocation5 + $0xc] sm:$0xf]
        %v446 = vld [vmem:[#allocation5 + $0x10] sm:$0xf]
        %v447 = vld [vmem:[#allocation5 + $0x14] sm:$0xf]
        %v448 = vld [vmem:[#allocation5 + $0x18] sm:$0xf]
        %v449 = vld [vmem:[#allocation5 + $0x1c] sm:$0xf]
        %v450 = vld [vmem:[#allocation5 + $0x20] sm:$0xf]
        %v451 = vld [vmem:[#allocation5 + $0x24] sm:$0xf]
        %v452 = vld [vmem:[#allocation5 + $0x28] sm:$0xf]
        %v453 = vld [vmem:[#allocation5 + $0x2c] sm:$0xf]
        %v454 = vld [vmem:[#allocation5 + $0x30] sm:$0xf]
        %v455 = vld [vmem:[#allocation5 + $0x34] sm:$0xf]
        %v456 = vld [vmem:[#allocation5 + $0x38] sm:$0xf]
        %v457 = vld [vmem:[#allocation5 + $0x3c] sm:$0xf]
        %v458 = vld [vmem:[#allocation5 + $0x40] sm:$0xf]
        %v459 = vld [vmem:[#allocation5 + $0x44] sm:$0xf]
        %v460 = vld [vmem:[#allocation5 + $0x48] sm:$0xf]
        %v461 = vld [vmem:[#allocation5 + $0x4c] sm:$0xf]
        %v462 = vld [vmem:[#allocation5 + $0x50] sm:$0xf]
        %v463 = vld [vmem:[#allocation5 + $0x54] sm:$0xf]
        %v464 = vld [vmem:[#allocation5 + $0x58] sm:$0xf]
        %v465 = vld [vmem:[#allocation5 + $0x5c] sm:$0xf]
        %v466 = vld [vmem:[#allocation5 + $0x60] sm:$0xf]
        %v467 = vld [vmem:[#allocation5 + $0x64] sm:$0xf]
        %v468 = vld [vmem:[#allocation5 + $0x68] sm:$0xf]
        %v469 = vld [vmem:[#allocation5 + $0x6c] sm:$0xf]
        %v470 = vld [vmem:[#allocation5 + $0x70] sm:$0xf]
        %v471 = vld [vmem:[#allocation5 + $0x74] sm:$0xf]
        %v472 = vld [vmem:[#allocation5 + $0x78] sm:$0xf]
        %v473 = vld [vmem:[#allocation5 + $0x7c] sm:$0xf]
        %v474 = vld [vmem:[#allocation5 + $0x80] sm:$0xf]
        %v475 = vld [vmem:[#allocation5 + $0x84] sm:$0xf]
        %v476 = vld [vmem:[#allocation5 + $0x88] sm:$0xf]
        %v477 = vld [vmem:[#allocation5 + $0x8c] sm:$0xf]
        %v478 = vld [vmem:[#allocation5 + $0x90] sm:$0xf]
        %v479 = vld [vmem:[#allocation5 + $0x94] sm:$0xf]
        %v480 = vld [vmem:[#allocation5 + $0x98] sm:$0xf]
        %v481 = vld [vmem:[#allocation5 + $0x9c] sm:$0xf]
        %v482 = vld [vmem:[#allocation5 + $0xa0] sm:$0xf]
        %v483 = vld [vmem:[#allocation5 + $0xa4] sm:$0xf]
        %v484 = vld [vmem:[#allocation5 + $0xa8] sm:$0xf]
        %v485 = vld [vmem:[#allocation5 + $0xac] sm:$0xf]
        %v486 = vld [vmem:[#allocation5 + $0xb0] sm:$0xf]
        %v487 = vld [vmem:[#allocation5 + $0xb4] sm:$0xf]
        %v488 = vld [vmem:[#allocation5 + $0xb8] sm:$0xf]
        %v489 = vld [vmem:[#allocation5 + $0xbc] sm:$0xf]
        %v490 = vld [vmem:[#allocation5 + $0xc0] sm:$0xf]
        %v491 = vld [vmem:[#allocation5 + $0xc4] sm:$0xf]
        %v492 = vld [vmem:[#allocation5 + $0xc8] sm:$0xf]
        %v493 = vld [vmem:[#allocation5 + $0xcc] sm:$0xf]
        %v494 = vld [vmem:[#allocation5 + $0xd0] sm:$0xf]
        %v495 = vld [vmem:[#allocation5 + $0xd4] sm:$0xf]
        %v496 = vld [vmem:[#allocation5 + $0xd8] sm:$0xf]
        %v497 = vld [vmem:[#allocation5 + $0xdc] sm:$0xf]
        %v498 = vld [vmem:[#allocation5 + $0xe0] sm:$0xf]
        %v499 = vld [vmem:[#allocation5 + $0xe4] sm:$0xf]
        %v500 = vld [vmem:[#allocation5 + $0xe8] sm:$0xf]
        %v501 = vld [vmem:[#allocation5 + $0xec] sm:$0xf]
        %v502 = vld [vmem:[#allocation5 + $0xf0] sm:$0xf]
        %v503 = vld [vmem:[#allocation5 + $0xf4] sm:$0xf]
        %v504 = vld [vmem:[#allocation5 + $0xf8] sm:$0xf]
        %v505 = vld [vmem:[#allocation5 + $0xfc] sm:$0xf]
        %v506 = vld [vmem:[#allocation5 + $0x100] sm:$0xf]
        %v507 = vld [vmem:[#allocation5 + $0x104] sm:$0xf]
        %v508 = vld [vmem:[#allocation5 + $0x108] sm:$0xf]
        %v509 = vld [vmem:[#allocation5 + $0x10c] sm:$0xf]
        %v510 = vld [vmem:[#allocation5 + $0x110] sm:$0xf]
        %v511 = vld [vmem:[#allocation5 + $0x114] sm:$0xf]
        %v512 = vld [vmem:[#allocation5 + $0x118] sm:$0xf]
        %v513 = vld [vmem:[#allocation5 + $0x11c] sm:$0xf]
        %v514 = vld [vmem:[#allocation5 + $0x120] sm:$0xf]
        %v515 = vld [vmem:[#allocation5 + $0x124] sm:$0xf]
        %v516 = vld [vmem:[#allocation5 + $0x128] sm:$0xf]
        %v517 = vld [vmem:[#allocation5 + $0x12c] sm:$0xf]
        %v518 = vld [vmem:[#allocation5 + $0x130] sm:$0xf]
        %v519 = vld [vmem:[#allocation5 + $0x134] sm:$0xf]
        %v520 = vld [vmem:[#allocation5 + $0x138] sm:$0xf]
        %v521 = vld [vmem:[#allocation5 + $0x13c] sm:$0xf]
        %v522 = vld [vmem:[#allocation5 + $0x140] sm:$0xf]
        %v523 = vld [vmem:[#allocation5 + $0x144] sm:$0xf]
        %v524 = vld [vmem:[#allocation5 + $0x148] sm:$0xf]
        %v525 = vld [vmem:[#allocation5 + $0x14c] sm:$0xf]
        %v526 = vld [vmem:[#allocation5 + $0x150] sm:$0xf]
        %v527 = vld [vmem:[#allocation5 + $0x154] sm:$0xf]
        %v528 = vld [vmem:[#allocation5 + $0x158] sm:$0xf]
        %v529 = vld [vmem:[#allocation5 + $0x15c] sm:$0xf]
        %v530 = vld [vmem:[#allocation5 + $0x160] sm:$0xf]
        %v531 = vld [vmem:[#allocation5 + $0x164] sm:$0xf]
        %v532 = vld [vmem:[#allocation5 + $0x168] sm:$0xf]
        %v533 = vld [vmem:[#allocation5 + $0x16c] sm:$0xf]
        %v534 = vld [vmem:[#allocation5 + $0x170] sm:$0xf]
        %v535 = vld [vmem:[#allocation5 + $0x174] sm:$0xf]
        %v536 = vld [vmem:[#allocation5 + $0x178] sm:$0xf]
        %v537 = vld [vmem:[#allocation5 + $0x17c] sm:$0xf]
        %v538 = vld [vmem:[#allocation5 + $0x180] sm:$0xf]
        %v539 = vld [vmem:[#allocation5 + $0x184] sm:$0xf]
        %v540 = vld [vmem:[#allocation5 + $0x188] sm:$0xf]
        %v541 = vld [vmem:[#allocation5 + $0x18c] sm:$0xf]
        %v542 = vld [vmem:[#allocation5 + $0x190] sm:$0xf]
        %v543 = vld [vmem:[#allocation5 + $0x194] sm:$0xf]
        %v544 = vld [vmem:[#allocation5 + $0x198] sm:$0xf]
        %v545 = vld [vmem:[#allocation5 + $0x19c] sm:$0xf]
        %v546 = vld [vmem:[#allocation5 + $0x1a0] sm:$0xf]
        %v547 = vld [vmem:[#allocation5 + $0x1a4] sm:$0xf]
        %v548 = vld [vmem:[#allocation5 + $0x1a8] sm:$0xf]
        %v549 = vld [vmem:[#allocation5 + $0x1ac] sm:$0xf]
        %v550 = vld [vmem:[#allocation5 + $0x1b0] sm:$0xf]
        %v551 = vld [vmem:[#allocation5 + $0x1b4] sm:$0xf]
        %v552 = vld [vmem:[#allocation5 + $0x1b8] sm:$0xf]
        %v553 = vld [vmem:[#allocation5 + $0x1bc] sm:$0xf]
        %v554 = vld [vmem:[#allocation5 + $0x1c0] sm:$0xf]
        %v555 = vld [vmem:[#allocation5 + $0x1c4] sm:$0xf]
        %v556 = vld [vmem:[#allocation5 + $0x1c8] sm:$0xf]
        %v557 = vld [vmem:[#allocation5 + $0x1cc] sm:$0xf]
        %v558 = vld [vmem:[#allocation5 + $0x1d0] sm:$0xf]
        %v559 = vld [vmem:[#allocation5 + $0x1d4] sm:$0xf]
        %v560 = vld [vmem:[#allocation5 + $0x1d8] sm:$0xf]
        %v561 = vld [vmem:[#allocation5 + $0x1dc] sm:$0xf]
        %v562 = vld [vmem:[#allocation5 + $0x1e0] sm:$0xf]
        %v563 = vld [vmem:[#allocation5 + $0x1e4] sm:$0xf]
        %v564 = vld [vmem:[#allocation5 + $0x1e8] sm:$0xf]
        %v565 = vld [vmem:[#allocation5 + $0x1ec] sm:$0xf]
        %v566 = vld [vmem:[#allocation5 + $0x1f0] sm:$0xf]
        %v567 = vld [vmem:[#allocation5 + $0x1f4] sm:$0xf]
        %v568 = vld [vmem:[#allocation5 + $0x1f8] sm:$0xf]
        %v569 = vld [vmem:[#allocation5 + $0x1fc] sm:$0xf]
        %v570 = vld [vmem:[#allocation5 + $0x200] sm:$0xf]
        %v571 = vld [vmem:[#allocation5 + $0x204] sm:$0xf]
        %v572 = vld [vmem:[#allocation5 + $0x208] sm:$0xf]
        %v573 = vld [vmem:[#allocation5 + $0x20c] sm:$0xf]
        %v574 = vld [vmem:[#allocation5 + $0x210] sm:$0xf]
        %v575 = vld [vmem:[#allocation5 + $0x214] sm:$0xf]
        %v576 = vld [vmem:[#allocation5 + $0x218] sm:$0xf]
        %v577 = vld [vmem:[#allocation5 + $0x21c] sm:$0xf]
        %v578 = vld [vmem:[#allocation5 + $0x220] sm:$0xf]
        %v579 = vld [vmem:[#allocation5 + $0x224] sm:$0xf]
        %v580 = vld [vmem:[#allocation5 + $0x228] sm:$0xf]
        %v581 = vld [vmem:[#allocation5 + $0x22c] sm:$0xf]
        %v582 = vld [vmem:[#allocation5 + $0x230] sm:$0xf]
        %v583 = vld [vmem:[#allocation5 + $0x234] sm:$0xf]
        %v584 = vld [vmem:[#allocation5 + $0x238] sm:$0xf]
        %v585 = vld [vmem:[#allocation5 + $0x23c] sm:$0xf]
        %v586 = vlaneseq
        %v587 = vshrl.u32 %v586, 7
        %v588 = vadd.s32 %v587, 8
        %vm589 = vcmp.eq.s32.totalorder %v587, 0
        %vm590 = vcmp.eq.s32.totalorder %v588, 0
        %v591 = vrot.slane %v410, 7
        %v592 = vrot.slane %v412, 7
        %v593 = vrot.slane %v414, 7
        %v594 = vrot.slane %v416, 7
        %v595 = vrot.slane %v418, 7
        %v596 = vrot.slane %v420, 7
        %v597 = vrot.slane %v422, 7
        %v598 = vrot.slane %v424, 7
        %v599 = vrot.slane %v426, 7
        %v600 = vrot.slane %v428, 7
        %v601 = vrot.slane %v430, 7
        %v602 = vrot.slane %v432, 7
        %v603 = vrot.slane %v434, 7
        %v604 = vrot.slane %v436, 7
        %v605 = vrot.slane %v438, 7
        %v606 = vrot.slane %v440, 7
        %v607 = vrot.slane %v411, 7
        %v608 = vrot.slane %v413, 7
        %v609 = vrot.slane %v415, 7
        %v610 = vrot.slane %v417, 7
        %v611 = vrot.slane %v419, 7
        %v612 = vrot.slane %v421, 7
        %v613 = vrot.slane %v423, 7
        %v614 = vrot.slane %v425, 7
        %v615 = vrot.slane %v427, 7
        %v616 = vrot.slane %v429, 7
        %v617 = vrot.slane %v431, 7
        %v618 = vrot.slane %v433, 7
        %v619 = vrot.slane %v435, 7
        %v620 = vrot.slane %v437, 7
        %v621 = vrot.slane %v439, 7
        %v622 = vrot.slane %v441, 7
        %vm623 = vcmp.lt.s32.totalorder %v587, 1
        %v624 = vsel %vm623, %v591, %v607
        %v625 = vsel %vm623, %v592, %v608
        %v626 = vsel %vm623, %v593, %v609
        %v627 = vsel %vm623, %v594, %v610
        %v628 = vsel %vm623, %v595, %v611
        %v629 = vsel %vm623, %v596, %v612
        %v630 = vsel %vm623, %v597, %v613
        %v631 = vsel %vm623, %v598, %v614
        %v632 = vsel %vm623, %v599, %v615
        %v633 = vsel %vm623, %v600, %v616
        %v634 = vsel %vm623, %v601, %v617
        %v635 = vsel %vm623, %v602, %v618
        %v636 = vsel %vm623, %v603, %v619
        %v637 = vsel %vm623, %v604, %v620
        %v638 = vsel %vm623, %v605, %v621
        %v639 = vsel %vm623, %v606, %v622
        %v640 = vsel %vm623, %v607, %v591
        %v641 = vsel %vm623, %v608, %v592
        %v642 = vsel %vm623, %v609, %v593
        %v643 = vsel %vm623, %v610, %v594
        %v644 = vsel %vm623, %v611, %v595
        %v645 = vsel %vm623, %v612, %v596
        %v646 = vsel %vm623, %v613, %v597
        %v647 = vsel %vm623, %v614, %v598
        %v648 = vsel %vm623, %v615, %v599
        %v649 = vsel %vm623, %v616, %v600
        %v650 = vsel %vm623, %v617, %v601
        %v651 = vsel %vm623, %v618, %v602
        %v652 = vsel %vm623, %v619, %v603
        %v653 = vsel %vm623, %v620, %v604
        %v654 = vsel %vm623, %v621, %v605
        %v655 = vsel %vm623, %v622, %v606
        %v656 = vsel %vm589, 0.0, %v640
        %v657 = vsel %vm590, 0.0, %v624
        %v658 = vsel %vm589, 0.0, %v641
        %v659 = vsel %vm590, 0.0, %v625
        %v660 = vsel %vm589, 0.0, %v642
        %v661 = vsel %vm590, 0.0, %v626
        %v662 = vsel %vm589, 0.0, %v643
        %v663 = vsel %vm590, 0.0, %v627
        %v664 = vsel %vm589, 0.0, %v644
        %v665 = vsel %vm590, 0.0, %v628
        %v666 = vsel %vm589, 0.0, %v645
        %v667 = vsel %vm590, 0.0, %v629
        %v668 = vsel %vm589, 0.0, %v646
        %v669 = vsel %vm590, 0.0, %v630
        %v670 = vsel %vm589, 0.0, %v647
        %v671 = vsel %vm590, 0.0, %v631
        %v672 = vsel %vm589, 0.0, %v648
        %v673 = vsel %vm590, 0.0, %v632
        %v674 = vsel %vm589, 0.0, %v649
        %v675 = vsel %vm590, 0.0, %v633
        %v676 = vsel %vm589, 0.0, %v650
        %v677 = vsel %vm590, 0.0, %v634
        %v678 = vsel %vm589, 0.0, %v651
        %v679 = vsel %vm590, 0.0, %v635
        %v680 = vsel %vm589, 0.0, %v652
        %v681 = vsel %vm590, 0.0, %v636
        %v682 = vsel %vm589, 0.0, %v653
        %v683 = vsel %vm590, 0.0, %v637
        %v684 = vsel %vm589, 0.0, %v654
        %v685 = vsel %vm590, 0.0, %v638
        %v686 = vsel %vm589, 0.0, %v655
        %v687 = vsel %vm590, 0.0, %v639
        %vm688 = vcmp.eq.s32.totalorder %v587, 15
        %vm689 = vcmp.eq.s32.totalorder %v588, 15
        %v690 = vrot.slane %v410, 1
        %v691 = vrot.slane %v412, 1
        %v692 = vrot.slane %v414, 1
        %v693 = vrot.slane %v416, 1
        %v694 = vrot.slane %v418, 1
        %v695 = vrot.slane %v420, 1
        %v696 = vrot.slane %v422, 1
        %v697 = vrot.slane %v424, 1
        %v698 = vrot.slane %v426, 1
        %v699 = vrot.slane %v428, 1
        %v700 = vrot.slane %v430, 1
        %v701 = vrot.slane %v432, 1
        %v702 = vrot.slane %v434, 1
        %v703 = vrot.slane %v436, 1
        %v704 = vrot.slane %v438, 1
        %v705 = vrot.slane %v440, 1
        %v706 = vrot.slane %v411, 1
        %v707 = vrot.slane %v413, 1
        %v708 = vrot.slane %v415, 1
        %v709 = vrot.slane %v417, 1
        %v710 = vrot.slane %v419, 1
        %v711 = vrot.slane %v421, 1
        %v712 = vrot.slane %v423, 1
        %v713 = vrot.slane %v425, 1
        %v714 = vrot.slane %v427, 1
        %v715 = vrot.slane %v429, 1
        %v716 = vrot.slane %v431, 1
        %v717 = vrot.slane %v433, 1
        %v718 = vrot.slane %v435, 1
        %v719 = vrot.slane %v437, 1
        %v720 = vrot.slane %v439, 1
        %v721 = vrot.slane %v441, 1
        %vm722 = vcmp.lt.s32.totalorder %v587, 7
        %v723 = vsel %vm722, %v690, %v706
        %v724 = vsel %vm722, %v691, %v707
        %v725 = vsel %vm722, %v692, %v708
        %v726 = vsel %vm722, %v693, %v709
        %v727 = vsel %vm722, %v694, %v710
        %v728 = vsel %vm722, %v695, %v711
        %v729 = vsel %vm722, %v696, %v712
        %v730 = vsel %vm722, %v697, %v713
        %v731 = vsel %vm722, %v698, %v714
        %v732 = vsel %vm722, %v699, %v715
        %v733 = vsel %vm722, %v700, %v716
        %v734 = vsel %vm722, %v701, %v717
        %v735 = vsel %vm722, %v702, %v718
        %v736 = vsel %vm722, %v703, %v719
        %v737 = vsel %vm722, %v704, %v720
        %v738 = vsel %vm722, %v705, %v721
        %v739 = vsel %vm722, %v706, %v690
        %v740 = vsel %vm722, %v707, %v691
        %v741 = vsel %vm722, %v708, %v692
        %v742 = vsel %vm722, %v709, %v693
        %v743 = vsel %vm722, %v710, %v694
        %v744 = vsel %vm722, %v711, %v695
        %v745 = vsel %vm722, %v712, %v696
        %v746 = vsel %vm722, %v713, %v697
        %v747 = vsel %vm722, %v714, %v698
        %v748 = vsel %vm722, %v715, %v699
        %v749 = vsel %vm722, %v716, %v700
        %v750 = vsel %vm722, %v717, %v701
        %v751 = vsel %vm722, %v718, %v702
        %v752 = vsel %vm722, %v719, %v703
        %v753 = vsel %vm722, %v720, %v704
        %v754 = vsel %vm722, %v721, %v705
        %v755 = vsel %vm688, 0.0, %v723
        %v756 = vsel %vm689, 0.0, %v739
        %v757 = vsel %vm688, 0.0, %v724
        %v758 = vsel %vm689, 0.0, %v740
        %v759 = vsel %vm688, 0.0, %v725
        %v760 = vsel %vm689, 0.0, %v741
        %v761 = vsel %vm688, 0.0, %v726
        %v762 = vsel %vm689, 0.0, %v742
        %v763 = vsel %vm688, 0.0, %v727
        %v764 = vsel %vm689, 0.0, %v743
        %v765 = vsel %vm688, 0.0, %v728
        %v766 = vsel %vm689, 0.0, %v744
        %v767 = vsel %vm688, 0.0, %v729
        %v768 = vsel %vm689, 0.0, %v745
        %v769 = vsel %vm688, 0.0, %v730
        %v770 = vsel %vm689, 0.0, %v746
        %v771 = vsel %vm688, 0.0, %v731
        %v772 = vsel %vm689, 0.0, %v747
        %v773 = vsel %vm688, 0.0, %v732
        %v774 = vsel %vm689, 0.0, %v748
        %v775 = vsel %vm688, 0.0, %v733
        %v776 = vsel %vm689, 0.0, %v749
        %v777 = vsel %vm688, 0.0, %v734
        %v778 = vsel %vm689, 0.0, %v750
        %v779 = vsel %vm688, 0.0, %v735
        %v780 = vsel %vm689, 0.0, %v751
        %v781 = vsel %vm688, 0.0, %v736
        %v782 = vsel %vm689, 0.0, %v752
        %v783 = vsel %vm688, 0.0, %v737
        %v784 = vsel %vm689, 0.0, %v753
        %v785 = vsel %vm688, 0.0, %v738
        %v786 = vsel %vm689, 0.0, %v754
        %v787 = vpack.c.bf16 %v657, %v656
        %v788 = vpack.c.bf16 %v659, %v658
        %v789 = vpack.c.bf16 %v661, %v660
        %v790 = vpack.c.bf16 %v663, %v662
        %v791 = vpack.c.bf16 %v665, %v664
        %v792 = vpack.c.bf16 %v667, %v666
        %v793 = vpack.c.bf16 %v669, %v668
        %v794 = vpack.c.bf16 %v671, %v670
        %v795 = vpack.c.bf16 %v673, %v672
        %v796 = vpack.c.bf16 %v675, %v674
        %v797 = vpack.c.bf16 %v677, %v676
        %v798 = vpack.c.bf16 %v679, %v678
        %v799 = vpack.c.bf16 %v681, %v680
        %v800 = vpack.c.bf16 %v683, %v682
        %v801 = vpack.c.bf16 %v685, %v684
        %v802 = vpack.c.bf16 %v687, %v686
        %v803 = vpack.c.bf16 %v411, %v410
        %v804 = vpack.c.bf16 %v413, %v412
        %v805 = vpack.c.bf16 %v415, %v414
        %v806 = vpack.c.bf16 %v417, %v416
        %v807 = vpack.c.bf16 %v419, %v418
        %v808 = vpack.c.bf16 %v421, %v420
        %v809 = vpack.c.bf16 %v423, %v422
        %v810 = vpack.c.bf16 %v425, %v424
        %v811 = vpack.c.bf16 %v427, %v426
        %v812 = vpack.c.bf16 %v429, %v428
        %v813 = vpack.c.bf16 %v431, %v430
        %v814 = vpack.c.bf16 %v433, %v432
        %v815 = vpack.c.bf16 %v435, %v434
        %v816 = vpack.c.bf16 %v437, %v436
        %v817 = vpack.c.bf16 %v439, %v438
        %v818 = vpack.c.bf16 %v441, %v440
        %v819 = vpack.c.bf16 %v756, %v755
        %v820 = vpack.c.bf16 %v758, %v757
        %v821 = vpack.c.bf16 %v760, %v759
        %v822 = vpack.c.bf16 %v762, %v761
        %v823 = vpack.c.bf16 %v764, %v763
        %v824 = vpack.c.bf16 %v766, %v765
        %v825 = vpack.c.bf16 %v768, %v767
        %v826 = vpack.c.bf16 %v770, %v769
        %v827 = vpack.c.bf16 %v772, %v771
        %v828 = vpack.c.bf16 %v774, %v773
        %v829 = vpack.c.bf16 %v776, %v775
        %v830 = vpack.c.bf16 %v778, %v777
        %v831 = vpack.c.bf16 %v780, %v779
        %v832 = vpack.c.bf16 %v782, %v781
        %v833 = vpack.c.bf16 %v784, %v783
        %v834 = vpack.c.bf16 %v786, %v785
        %v883 = vunpack.c.l.b16 %v490
        %v884 = vunpack.c.l.b16 %v491
        %v885 = vunpack.c.l.b16 %v492
        %v886 = vunpack.c.l.b16 %v493
        %v887 = vunpack.c.l.b16 %v494
        %v888 = vunpack.c.l.b16 %v495
        %v889 = vunpack.c.l.b16 %v496
        %v890 = vunpack.c.l.b16 %v497
        %v891 = vunpack.c.l.b16 %v498
        %v892 = vunpack.c.l.b16 %v499
        %v893 = vunpack.c.l.b16 %v500
        %v894 = vunpack.c.l.b16 %v501
        %v895 = vunpack.c.l.b16 %v502
        %v896 = vunpack.c.l.b16 %v503
        %v897 = vunpack.c.l.b16 %v504
        %v898 = vunpack.c.l.b16 %v505
        %v899 = vunpack.c.l.b16 %v506
        %v900 = vunpack.c.l.b16 %v507
        %v901 = vunpack.c.l.b16 %v508
        %v902 = vunpack.c.l.b16 %v509
        %v903 = vunpack.c.l.b16 %v510
        %v904 = vunpack.c.l.b16 %v511
        %v905 = vunpack.c.l.b16 %v512
        %v906 = vunpack.c.l.b16 %v513
        %v907 = vunpack.c.l.b16 %v514
        %v908 = vunpack.c.l.b16 %v515
        %v909 = vunpack.c.l.b16 %v516
        %v910 = vunpack.c.l.b16 %v517
        %v911 = vunpack.c.l.b16 %v518
        %v912 = vunpack.c.l.b16 %v519
        %v913 = vunpack.c.l.b16 %v520
        %v914 = vunpack.c.l.b16 %v521
        %v915 = vunpack.c.l.b16 %v522
        %v916 = vunpack.c.l.b16 %v523
        %v917 = vunpack.c.l.b16 %v524
        %v918 = vunpack.c.l.b16 %v525
        %v919 = vunpack.c.l.b16 %v526
        %v920 = vunpack.c.l.b16 %v527
        %v921 = vunpack.c.l.b16 %v528
        %v922 = vunpack.c.l.b16 %v529
        %v923 = vunpack.c.l.b16 %v530
        %v924 = vunpack.c.l.b16 %v531
        %v925 = vunpack.c.l.b16 %v532
        %v926 = vunpack.c.l.b16 %v533
        %v927 = vunpack.c.l.b16 %v534
        %v928 = vunpack.c.l.b16 %v535
        %v929 = vunpack.c.l.b16 %v536
        %v930 = vunpack.c.l.b16 %v537
        %v931 = vpack.c.b16 %v884, %v883
        %v932 = vpack.c.b16 %v886, %v885
        %v933 = vpack.c.b16 %v888, %v887
        %v934 = vpack.c.b16 %v890, %v889
        %v935 = vpack.c.b16 %v892, %v891
        %v936 = vpack.c.b16 %v894, %v893
        %v937 = vpack.c.b16 %v896, %v895
        %v938 = vpack.c.b16 %v898, %v897
        %v939 = vpack.c.b16 %v900, %v899
        %v940 = vpack.c.b16 %v902, %v901
        %v941 = vpack.c.b16 %v904, %v903
        %v942 = vpack.c.b16 %v906, %v905
        %v943 = vpack.c.b16 %v908, %v907
        %v944 = vpack.c.b16 %v910, %v909
        %v945 = vpack.c.b16 %v912, %v911
        %v946 = vpack.c.b16 %v914, %v913
        %v947 = vpack.c.b16 %v916, %v915
        %v948 = vpack.c.b16 %v918, %v917
        %v949 = vpack.c.b16 %v920, %v919
        %v950 = vpack.c.b16 %v922, %v921
        %v951 = vpack.c.b16 %v924, %v923
        %v952 = vpack.c.b16 %v926, %v925
        %v953 = vpack.c.b16 %v928, %v927
        %v954 = vpack.c.b16 %v930, %v929
        %979 = vmatprep.subr.bf16.mxu0 0
        %980 = vmatpush1.bf16.msra.mxu0 %v938
        %981 = vmatprep.subr.bf16.mxu0 0
        %982 = vmatpush1.bf16.msra.mxu0 %v937
        %983 = vmatprep.subr.bf16.mxu0 0
        %984 = vmatpush1.bf16.msra.mxu0 %v936
        %985 = vmatprep.subr.bf16.mxu0 0
        %986 = vmatpush1.bf16.msra.mxu0 %v935
        %987 = vmatprep.subr.bf16.mxu0 0
        %988 = vmatpush1.bf16.msra.mxu0 %v934
        %989 = vmatprep.subr.bf16.mxu0 0
        %990 = vmatpush1.bf16.msra.mxu0 %v933
        %991 = vmatprep.subr.bf16.mxu0 0
        %992 = vmatpush1.bf16.msra.mxu0 %v932
        %993 = vmatprep.subr.bf16.mxu0 0
        %994 = vmatpush1.bf16.msra.mxu0 %v931
        %995 = vmatprep.subr.bf16.mxu0 0
        %996 = vmatpush2.bf16.msra.mxu0 %v946
        %997 = vmatprep.subr.bf16.mxu0 0
        %998 = vmatpush2.bf16.msra.mxu0 %v945
        %999 = vmatprep.subr.bf16.mxu0 0
        %1000 = vmatpush2.bf16.msra.mxu0 %v944
        %1001 = vmatprep.subr.bf16.mxu0 0
        %1002 = vmatpush2.bf16.msra.mxu0 %v943
        %1003 = vmatprep.subr.bf16.mxu0 0
        %1004 = vmatpush2.bf16.msra.mxu0 %v942
        %1005 = vmatprep.subr.bf16.mxu0 0
        %1006 = vmatpush2.bf16.msra.mxu0 %v941
        %1007 = vmatprep.subr.bf16.mxu0 0
        %1008 = vmatpush2.bf16.msra.mxu0 %v940
        %1009 = vmatprep.subr.bf16.mxu0 0
        %1010 = vmatpush2.bf16.msra.mxu0 %v939
        %1011 = vmatprep.mubr.bf16.mxu0 %v803
        %1012 = vmatmul.mubr.bf16.gmra.mxu0 %v787
        %v1013 = vpop.f32.mrf.mxu0
        %v1014 = vadd.f32 0.0, %v1013
        %v1015 = vpop.f32.mrf.mxu0
        %v1016 = vpop.f32.mrf.mxu0
        %v1017 = vadd.f32 0.0, %v1016
        %v1018 = vpop.f32.mrf.mxu0
        %1019 = vmatprep.mubr.bf16.mxu0 %v804
        %1020 = vmatmul.mubr.bf16.gmra.mxu0 %v788
        %v1021 = vpop.f32.mrf.mxu0
        %v1022 = vadd.f32 0.0, %v1021
        %v1023 = vpop.f32.mrf.mxu0
        %v1024 = vpop.f32.mrf.mxu0
        %v1025 = vadd.f32 0.0, %v1024
        %v1026 = vpop.f32.mrf.mxu0
        %1027 = vmatprep.mubr.bf16.mxu0 %v805
        %1028 = vmatmul.mubr.bf16.gmra.mxu0 %v789
        %v1029 = vpop.f32.mrf.mxu0
        %v1030 = vadd.f32 0.0, %v1029
        %v1031 = vpop.f32.mrf.mxu0
        %v1032 = vpop.f32.mrf.mxu0
        %v1033 = vadd.f32 0.0, %v1032
        %v1034 = vpop.f32.mrf.mxu0
        %1035 = vmatprep.mubr.bf16.mxu0 %v806
        %1036 = vmatmul.mubr.bf16.gmra.mxu0 %v790
        %v1037 = vpop.f32.mrf.mxu0
        %v1038 = vadd.f32 0.0, %v1037
        %v1039 = vpop.f32.mrf.mxu0
        %v1040 = vpop.f32.mrf.mxu0
        %v1041 = vadd.f32 0.0, %v1040
        %v1042 = vpop.f32.mrf.mxu0
        %1043 = vmatprep.mubr.bf16.mxu0 %v807
        %1044 = vmatmul.mubr.bf16.gmra.mxu0 %v791
        %v1045 = vpop.f32.mrf.mxu0
        %v1046 = vadd.f32 0.0, %v1045
        %v1047 = vpop.f32.mrf.mxu0
        %v1048 = vpop.f32.mrf.mxu0
        %v1049 = vadd.f32 0.0, %v1048
        %v1050 = vpop.f32.mrf.mxu0
        %1051 = vmatprep.mubr.bf16.mxu0 %v808
        %1052 = vmatmul.mubr.bf16.gmra.mxu0 %v792
        %v1053 = vpop.f32.mrf.mxu0
        %v1054 = vadd.f32 0.0, %v1053
        %v1055 = vpop.f32.mrf.mxu0
        %v1056 = vpop.f32.mrf.mxu0
        %v1057 = vadd.f32 0.0, %v1056
        %v1058 = vpop.f32.mrf.mxu0
        %1059 = vmatprep.mubr.bf16.mxu0 %v809
        %1060 = vmatmul.mubr.bf16.gmra.mxu0 %v793
        %v1061 = vpop.f32.mrf.mxu0
        %v1062 = vadd.f32 0.0, %v1061
        %v1063 = vpop.f32.mrf.mxu0
        %v1064 = vpop.f32.mrf.mxu0
        %v1065 = vadd.f32 0.0, %v1064
        %v1066 = vpop.f32.mrf.mxu0
        %1067 = vmatprep.mubr.bf16.mxu0 %v810
        %1068 = vmatmul.mubr.bf16.gmra.mxu0 %v794
        %v1069 = vpop.f32.mrf.mxu0
        %v1070 = vadd.f32 0.0, %v1069
        %v1071 = vpop.f32.mrf.mxu0
        %v1072 = vpop.f32.mrf.mxu0
        %v1073 = vadd.f32 0.0, %v1072
        %v1074 = vpop.f32.mrf.mxu0
        %1075 = vmatprep.mubr.bf16.mxu0 %v811
        %1076 = vmatmul.mubr.bf16.gmra.mxu0 %v795
        %v1077 = vpop.f32.mrf.mxu0
        %v1078 = vadd.f32 0.0, %v1077
        %v1079 = vpop.f32.mrf.mxu0
        %v1080 = vpop.f32.mrf.mxu0
        %v1081 = vadd.f32 0.0, %v1080
        %v1082 = vpop.f32.mrf.mxu0
        %1083 = vmatprep.mubr.bf16.mxu0 %v812
        %1084 = vmatmul.mubr.bf16.gmra.mxu0 %v796
        %v1085 = vpop.f32.mrf.mxu0
        %v1086 = vadd.f32 0.0, %v1085
        %v1087 = vpop.f32.mrf.mxu0
        %v1088 = vpop.f32.mrf.mxu0
        %v1089 = vadd.f32 0.0, %v1088
        %v1090 = vpop.f32.mrf.mxu0
        %1091 = vmatprep.mubr.bf16.mxu0 %v813
        %1092 = vmatmul.mubr.bf16.gmra.mxu0 %v797
        %v1093 = vpop.f32.mrf.mxu0
        %v1094 = vadd.f32 0.0, %v1093
        %v1095 = vpop.f32.mrf.mxu0
        %v1096 = vpop.f32.mrf.mxu0
        %v1097 = vadd.f32 0.0, %v1096
        %v1098 = vpop.f32.mrf.mxu0
        %1099 = vmatprep.mubr.bf16.mxu0 %v814
        %1100 = vmatmul.mubr.bf16.gmra.mxu0 %v798
        %v1101 = vpop.f32.mrf.mxu0
        %v1102 = vadd.f32 0.0, %v1101
        %v1103 = vpop.f32.mrf.mxu0
        %v1104 = vpop.f32.mrf.mxu0
        %v1105 = vadd.f32 0.0, %v1104
        %v1106 = vpop.f32.mrf.mxu0
        %1107 = vmatprep.mubr.bf16.mxu0 %v815
        %1108 = vmatmul.mubr.bf16.gmra.mxu0 %v799
        %v1109 = vpop.f32.mrf.mxu0
        %v1110 = vadd.f32 0.0, %v1109
        %v1111 = vpop.f32.mrf.mxu0
        %v1112 = vpop.f32.mrf.mxu0
        %v1113 = vadd.f32 0.0, %v1112
        %v1114 = vpop.f32.mrf.mxu0
        %1115 = vmatprep.mubr.bf16.mxu0 %v816
        %1116 = vmatmul.mubr.bf16.gmra.mxu0 %v800
        %v1117 = vpop.f32.mrf.mxu0
        %v1118 = vadd.f32 0.0, %v1117
        %v1119 = vpop.f32.mrf.mxu0
        %v1120 = vpop.f32.mrf.mxu0
        %v1121 = vadd.f32 0.0, %v1120
        %v1122 = vpop.f32.mrf.mxu0
        %1123 = vmatprep.mubr.bf16.mxu0 %v817
        %1124 = vmatmul.mubr.bf16.gmra.mxu0 %v801
        %v1125 = vpop.f32.mrf.mxu0
        %v1126 = vadd.f32 0.0, %v1125
        %v1127 = vpop.f32.mrf.mxu0
        %v1128 = vpop.f32.mrf.mxu0
        %v1129 = vadd.f32 0.0, %v1128
        %v1130 = vpop.f32.mrf.mxu0
        %1131 = vmatprep.mubr.bf16.mxu0 %v818
        %1132 = vmatmul.mubr.bf16.gmra.mxu0 %v802
        %v1133 = vpop.f32.mrf.mxu0
        %v1134 = vadd.f32 0.0, %v1133
        %v1135 = vpop.f32.mrf.mxu0
        %v1136 = vpop.f32.mrf.mxu0
        %v1137 = vadd.f32 0.0, %v1136
        %v1138 = vpop.f32.mrf.mxu0
        %1139 = vdwg.mxu0
        %1140 = vmatprep.subr.bf16.mxu0 0
        %1141 = vmatpush1.bf16.msra.mxu0 %v954
        %1142 = vmatprep.subr.bf16.mxu0 0
        %1143 = vmatpush1.bf16.msra.mxu0 %v953
        %1144 = vmatprep.subr.bf16.mxu0 0
        %1145 = vmatpush1.bf16.msra.mxu0 %v952
        %1146 = vmatprep.subr.bf16.mxu0 0
        %1147 = vmatpush1.bf16.msra.mxu0 %v951
        %1148 = vmatprep.subr.bf16.mxu0 0
        %1149 = vmatpush1.bf16.msra.mxu0 %v950
        %1150 = vmatprep.subr.bf16.mxu0 0
        %1151 = vmatpush1.bf16.msra.mxu0 %v949
        %1152 = vmatprep.subr.bf16.mxu0 0
        %1153 = vmatpush1.bf16.msra.mxu0 %v948
        %1154 = vmatprep.subr.bf16.mxu0 0
        %1155 = vmatpush1.bf16.msra.mxu0 %v947
        %1156 = vmatprep.subr.bf16.mxu0 0
        %1157 = vmatpush2.bf16.msra.mxu0 0
        %1158 = vmatprep.subr.bf16.mxu0 0
        %1159 = vmatpush2.bf16.msra.mxu0 0
        %1160 = vmatprep.subr.bf16.mxu0 0
        %1161 = vmatpush2.bf16.msra.mxu0 0
        %1162 = vmatprep.subr.bf16.mxu0 0
        %1163 = vmatpush2.bf16.msra.mxu0 0
        %1164 = vmatprep.subr.bf16.mxu0 0
        %1165 = vmatpush2.bf16.msra.mxu0 0
        %1166 = vmatprep.subr.bf16.mxu0 0
        %1167 = vmatpush2.bf16.msra.mxu0 0
        %1168 = vmatprep.subr.bf16.mxu0 0
        %1169 = vmatpush2.bf16.msra.mxu0 0
        %1170 = vmatprep.subr.bf16.mxu0 0
        %1171 = vmatpush2.bf16.msra.mxu0 0
        %1172 = vmatprep.mubr.bf16.mxu0 0
        %1173 = vmatmul.mubr.bf16.gmra.mxu0 %v819
        %v1174 = vpop.f32.mrf.mxu0
        %v1175 = vadd.f32 %v1014, %v1174
        %v1176 = vpop.f32.mrf.mxu0
        %v1177 = vpop.f32.mrf.mxu0
        %v1178 = vadd.f32 %v1017, %v1177
        %v1179 = vpop.f32.mrf.mxu0
        %1180 = vmatprep.mubr.bf16.mxu0 0
        %1181 = vmatmul.mubr.bf16.gmra.mxu0 %v820
        %v1182 = vpop.f32.mrf.mxu0
        %v1183 = vadd.f32 %v1022, %v1182
        %v1184 = vpop.f32.mrf.mxu0
        %v1185 = vpop.f32.mrf.mxu0
        %v1186 = vadd.f32 %v1025, %v1185
        %v1187 = vpop.f32.mrf.mxu0
        %1188 = vmatprep.mubr.bf16.mxu0 0
        %1189 = vmatmul.mubr.bf16.gmra.mxu0 %v821
        %v1190 = vpop.f32.mrf.mxu0
        %v1191 = vadd.f32 %v1030, %v1190
        %v1192 = vpop.f32.mrf.mxu0
        %v1193 = vpop.f32.mrf.mxu0
        %v1194 = vadd.f32 %v1033, %v1193
        %v1195 = vpop.f32.mrf.mxu0
        %1196 = vmatprep.mubr.bf16.mxu0 0
        %1197 = vmatmul.mubr.bf16.gmra.mxu0 %v822
        %v1198 = vpop.f32.mrf.mxu0
        %v1199 = vadd.f32 %v1038, %v1198
        %v1200 = vpop.f32.mrf.mxu0
        %v1201 = vpop.f32.mrf.mxu0
        %v1202 = vadd.f32 %v1041, %v1201
        %v1203 = vpop.f32.mrf.mxu0
        %1204 = vmatprep.mubr.bf16.mxu0 0
        %1205 = vmatmul.mubr.bf16.gmra.mxu0 %v823
        %v1206 = vpop.f32.mrf.mxu0
        %v1207 = vadd.f32 %v1046, %v1206
        %v1208 = vpop.f32.mrf.mxu0
        %v1209 = vpop.f32.mrf.mxu0
        %v1210 = vadd.f32 %v1049, %v1209
        %v1211 = vpop.f32.mrf.mxu0
        %1212 = vmatprep.mubr.bf16.mxu0 0
        %1213 = vmatmul.mubr.bf16.gmra.mxu0 %v824
        %v1214 = vpop.f32.mrf.mxu0
        %v1215 = vadd.f32 %v1054, %v1214
        %v1216 = vpop.f32.mrf.mxu0
        %v1217 = vpop.f32.mrf.mxu0
        %v1218 = vadd.f32 %v1057, %v1217
        %v1219 = vpop.f32.mrf.mxu0
        %1220 = vmatprep.mubr.bf16.mxu0 0
        %1221 = vmatmul.mubr.bf16.gmra.mxu0 %v825
        %v1222 = vpop.f32.mrf.mxu0
        %v1223 = vadd.f32 %v1062, %v1222
        %v1224 = vpop.f32.mrf.mxu0
        %v1225 = vpop.f32.mrf.mxu0
        %v1226 = vadd.f32 %v1065, %v1225
        %v1227 = vpop.f32.mrf.mxu0
        %1228 = vmatprep.mubr.bf16.mxu0 0
        %1229 = vmatmul.mubr.bf16.gmra.mxu0 %v826
        %v1230 = vpop.f32.mrf.mxu0
        %v1231 = vadd.f32 %v1070, %v1230
        %v1232 = vpop.f32.mrf.mxu0
        %v1233 = vpop.f32.mrf.mxu0
        %v1234 = vadd.f32 %v1073, %v1233
        %v1235 = vpop.f32.mrf.mxu0
        %1236 = vmatprep.mubr.bf16.mxu0 0
        %1237 = vmatmul.mubr.bf16.gmra.mxu0 %v827
        %v1238 = vpop.f32.mrf.mxu0
        %v1239 = vadd.f32 %v1078, %v1238
        %v1240 = vpop.f32.mrf.mxu0
        %v1241 = vpop.f32.mrf.mxu0
        %v1242 = vadd.f32 %v1081, %v1241
        %v1243 = vpop.f32.mrf.mxu0
        %1244 = vmatprep.mubr.bf16.mxu0 0
        %1245 = vmatmul.mubr.bf16.gmra.mxu0 %v828
        %v1246 = vpop.f32.mrf.mxu0
        %v1247 = vadd.f32 %v1086, %v1246
        %v1248 = vpop.f32.mrf.mxu0
        %v1249 = vpop.f32.mrf.mxu0
        %v1250 = vadd.f32 %v1089, %v1249
        %v1251 = vpop.f32.mrf.mxu0
        %1252 = vmatprep.mubr.bf16.mxu0 0
        %1253 = vmatmul.mubr.bf16.gmra.mxu0 %v829
        %v1254 = vpop.f32.mrf.mxu0
        %v1255 = vadd.f32 %v1094, %v1254
        %v1256 = vpop.f32.mrf.mxu0
        %v1257 = vpop.f32.mrf.mxu0
        %v1258 = vadd.f32 %v1097, %v1257
        %v1259 = vpop.f32.mrf.mxu0
        %1260 = vmatprep.mubr.bf16.mxu0 0
        %1261 = vmatmul.mubr.bf16.gmra.mxu0 %v830
        %v1262 = vpop.f32.mrf.mxu0
        %v1263 = vadd.f32 %v1102, %v1262
        %v1264 = vpop.f32.mrf.mxu0
        %v1265 = vpop.f32.mrf.mxu0
        %v1266 = vadd.f32 %v1105, %v1265
        %v1267 = vpop.f32.mrf.mxu0
        %1268 = vmatprep.mubr.bf16.mxu0 0
        %1269 = vmatmul.mubr.bf16.gmra.mxu0 %v831
        %v1270 = vpop.f32.mrf.mxu0
        %v1271 = vadd.f32 %v1110, %v1270
        %v1272 = vpop.f32.mrf.mxu0
        %v1273 = vpop.f32.mrf.mxu0
        %v1274 = vadd.f32 %v1113, %v1273
        %v1275 = vpop.f32.mrf.mxu0
        %1276 = vmatprep.mubr.bf16.mxu0 0
        %1277 = vmatmul.mubr.bf16.gmra.mxu0 %v832
        %v1278 = vpop.f32.mrf.mxu0
        %v1279 = vadd.f32 %v1118, %v1278
        %v1280 = vpop.f32.mrf.mxu0
        %v1281 = vpop.f32.mrf.mxu0
        %v1282 = vadd.f32 %v1121, %v1281
        %v1283 = vpop.f32.mrf.mxu0
        %1284 = vmatprep.mubr.bf16.mxu0 0
        %1285 = vmatmul.mubr.bf16.gmra.mxu0 %v833
        %v1286 = vpop.f32.mrf.mxu0
        %v1287 = vadd.f32 %v1126, %v1286
        %v1288 = vpop.f32.mrf.mxu0
        %v1289 = vpop.f32.mrf.mxu0
        %v1290 = vadd.f32 %v1129, %v1289
        %v1291 = vpop.f32.mrf.mxu0
        %1292 = vmatprep.mubr.bf16.mxu0 0
        %1293 = vmatmul.mubr.bf16.gmra.mxu0 %v834
        %v1294 = vpop.f32.mrf.mxu0
        %v1295 = vadd.f32 %v1134, %v1294
        %v1296 = vpop.f32.mrf.mxu0
        %v1297 = vpop.f32.mrf.mxu0
        %v1298 = vadd.f32 %v1137, %v1297
        %v1299 = vpop.f32.mrf.mxu0
        %1300 = vdwg.mxu0
        %v1349 = vunpack.c.l.b16 %v442
        %v1350 = vunpack.c.l.b16 %v443
        %v1351 = vunpack.c.l.b16 %v444
        %v1352 = vunpack.c.l.b16 %v445
        %v1353 = vunpack.c.l.b16 %v446
        %v1354 = vunpack.c.l.b16 %v447
        %v1355 = vunpack.c.l.b16 %v448
        %v1356 = vunpack.c.l.b16 %v449
        %v1357 = vunpack.c.l.b16 %v450
        %v1358 = vunpack.c.l.b16 %v451
        %v1359 = vunpack.c.l.b16 %v452
        %v1360 = vunpack.c.l.b16 %v453
        %v1361 = vunpack.c.l.b16 %v454
        %v1362 = vunpack.c.l.b16 %v455
        %v1363 = vunpack.c.l.b16 %v456
        %v1364 = vunpack.c.l.b16 %v457
        %v1365 = vunpack.c.l.b16 %v458
        %v1366 = vunpack.c.l.b16 %v459
        %v1367 = vunpack.c.l.b16 %v460
        %v1368 = vunpack.c.l.b16 %v461
        %v1369 = vunpack.c.l.b16 %v462
        %v1370 = vunpack.c.l.b16 %v463
        %v1371 = vunpack.c.l.b16 %v464
        %v1372 = vunpack.c.l.b16 %v465
        %v1373 = vunpack.c.l.b16 %v466
        %v1374 = vunpack.c.l.b16 %v467
        %v1375 = vunpack.c.l.b16 %v468
        %v1376 = vunpack.c.l.b16 %v469
        %v1377 = vunpack.c.l.b16 %v470
        %v1378 = vunpack.c.l.b16 %v471
        %v1379 = vunpack.c.l.b16 %v472
        %v1380 = vunpack.c.l.b16 %v473
        %v1381 = vunpack.c.l.b16 %v474
        %v1382 = vunpack.c.l.b16 %v475
        %v1383 = vunpack.c.l.b16 %v476
        %v1384 = vunpack.c.l.b16 %v477
        %v1385 = vunpack.c.l.b16 %v478
        %v1386 = vunpack.c.l.b16 %v479
        %v1387 = vunpack.c.l.b16 %v480
        %v1388 = vunpack.c.l.b16 %v481
        %v1389 = vunpack.c.l.b16 %v482
        %v1390 = vunpack.c.l.b16 %v483
        %v1391 = vunpack.c.l.b16 %v484
        %v1392 = vunpack.c.l.b16 %v485
        %v1393 = vunpack.c.l.b16 %v486
        %v1394 = vunpack.c.l.b16 %v487
        %v1395 = vunpack.c.l.b16 %v488
        %v1396 = vunpack.c.l.b16 %v489
        %v1397 = vpack.c.b16 %v1350, %v1349
        %v1398 = vpack.c.b16 %v1352, %v1351
        %v1399 = vpack.c.b16 %v1354, %v1353
        %v1400 = vpack.c.b16 %v1356, %v1355
        %v1401 = vpack.c.b16 %v1358, %v1357
        %v1402 = vpack.c.b16 %v1360, %v1359
        %v1403 = vpack.c.b16 %v1362, %v1361
        %v1404 = vpack.c.b16 %v1364, %v1363
        %v1405 = vpack.c.b16 %v1366, %v1365
        %v1406 = vpack.c.b16 %v1368, %v1367
        %v1407 = vpack.c.b16 %v1370, %v1369
        %v1408 = vpack.c.b16 %v1372, %v1371
        %v1409 = vpack.c.b16 %v1374, %v1373
        %v1410 = vpack.c.b16 %v1376, %v1375
        %v1411 = vpack.c.b16 %v1378, %v1377
        %v1412 = vpack.c.b16 %v1380, %v1379
        %v1413 = vpack.c.b16 %v1382, %v1381
        %v1414 = vpack.c.b16 %v1384, %v1383
        %v1415 = vpack.c.b16 %v1386, %v1385
        %v1416 = vpack.c.b16 %v1388, %v1387
        %v1417 = vpack.c.b16 %v1390, %v1389
        %v1418 = vpack.c.b16 %v1392, %v1391
        %v1419 = vpack.c.b16 %v1394, %v1393
        %v1420 = vpack.c.b16 %v1396, %v1395
        %1445 = vmatprep.subr.bf16.mxu0 0
        %1446 = vmatpush1.bf16.msra.mxu0 %v1404
        %1447 = vmatprep.subr.bf16.mxu0 0
        %1448 = vmatpush1.bf16.msra.mxu0 %v1403
        %1449 = vmatprep.subr.bf16.mxu0 0
        %1450 = vmatpush1.bf16.msra.mxu0 %v1402
        %1451 = vmatprep.subr.bf16.mxu0 0
        %1452 = vmatpush1.bf16.msra.mxu0 %v1401
        %1453 = vmatprep.subr.bf16.mxu0 0
        %1454 = vmatpush1.bf16.msra.mxu0 %v1400
        %1455 = vmatprep.subr.bf16.mxu0 0
        %1456 = vmatpush1.bf16.msra.mxu0 %v1399
        %1457 = vmatprep.subr.bf16.mxu0 0
        %1458 = vmatpush1.bf16.msra.mxu0 %v1398
        %1459 = vmatprep.subr.bf16.mxu0 0
        %1460 = vmatpush1.bf16.msra.mxu0 %v1397
        %1461 = vmatprep.subr.bf16.mxu0 0
        %1462 = vmatpush2.bf16.msra.mxu0 %v1412
        %1463 = vmatprep.subr.bf16.mxu0 0
        %1464 = vmatpush2.bf16.msra.mxu0 %v1411
        %1465 = vmatprep.subr.bf16.mxu0 0
        %1466 = vmatpush2.bf16.msra.mxu0 %v1410
        %1467 = vmatprep.subr.bf16.mxu0 0
        %1468 = vmatpush2.bf16.msra.mxu0 %v1409
        %1469 = vmatprep.subr.bf16.mxu0 0
        %1470 = vmatpush2.bf16.msra.mxu0 %v1408
        %1471 = vmatprep.subr.bf16.mxu0 0
        %1472 = vmatpush2.bf16.msra.mxu0 %v1407
        %1473 = vmatprep.subr.bf16.mxu0 0
        %1474 = vmatpush2.bf16.msra.mxu0 %v1406
        %1475 = vmatprep.subr.bf16.mxu0 0
        %1476 = vmatpush2.bf16.msra.mxu0 %v1405
        %1477 = vmatprep.mubr.bf16.mxu0 0
        %1478 = vmatmul.mubr.bf16.gmra.mxu0 0
        %v1479 = vpop.f32.mrf.mxu0
        %v1480 = vadd.f32 %v1175, %v1479
        %v1481 = vpop.f32.mrf.mxu0
        %v1482 = vpop.f32.mrf.mxu0
        %v1483 = vadd.f32 %v1178, %v1482
        %v1484 = vpop.f32.mrf.mxu0
        %1485 = vmatprep.mubr.bf16.mxu0 %v803
        %1486 = vmatmul.mubr.bf16.gmra.mxu0 %v787
        %v1487 = vpop.f32.mrf.mxu0
        %v1488 = vadd.f32 %v1183, %v1487
        %v1489 = vpop.f32.mrf.mxu0
        %v1490 = vpop.f32.mrf.mxu0
        %v1491 = vadd.f32 %v1186, %v1490
        %v1492 = vpop.f32.mrf.mxu0
        %1493 = vmatprep.mubr.bf16.mxu0 %v804
        %1494 = vmatmul.mubr.bf16.gmra.mxu0 %v788
        %v1495 = vpop.f32.mrf.mxu0
        %v1496 = vadd.f32 %v1191, %v1495
        %v1497 = vpop.f32.mrf.mxu0
        %v1498 = vpop.f32.mrf.mxu0
        %v1499 = vadd.f32 %v1194, %v1498
        %v1500 = vpop.f32.mrf.mxu0
        %1501 = vmatprep.mubr.bf16.mxu0 %v805
        %1502 = vmatmul.mubr.bf16.gmra.mxu0 %v789
        %v1503 = vpop.f32.mrf.mxu0
        %v1504 = vadd.f32 %v1199, %v1503
        %v1505 = vpop.f32.mrf.mxu0
        %v1506 = vpop.f32.mrf.mxu0
        %v1507 = vadd.f32 %v1202, %v1506
        %v1508 = vpop.f32.mrf.mxu0
        %1509 = vmatprep.mubr.bf16.mxu0 %v806
        %1510 = vmatmul.mubr.bf16.gmra.mxu0 %v790
        %v1511 = vpop.f32.mrf.mxu0
        %v1512 = vadd.f32 %v1207, %v1511
        %v1513 = vpop.f32.mrf.mxu0
        %v1514 = vpop.f32.mrf.mxu0
        %v1515 = vadd.f32 %v1210, %v1514
        %v1516 = vpop.f32.mrf.mxu0
        %1517 = vmatprep.mubr.bf16.mxu0 %v807
        %1518 = vmatmul.mubr.bf16.gmra.mxu0 %v791
        %v1519 = vpop.f32.mrf.mxu0
        %v1520 = vadd.f32 %v1215, %v1519
        %v1521 = vpop.f32.mrf.mxu0
        %v1522 = vpop.f32.mrf.mxu0
        %v1523 = vadd.f32 %v1218, %v1522
        %v1524 = vpop.f32.mrf.mxu0
        %1525 = vmatprep.mubr.bf16.mxu0 %v808
        %1526 = vmatmul.mubr.bf16.gmra.mxu0 %v792
        %v1527 = vpop.f32.mrf.mxu0
        %v1528 = vadd.f32 %v1223, %v1527
        %v1529 = vpop.f32.mrf.mxu0
        %v1530 = vpop.f32.mrf.mxu0
        %v1531 = vadd.f32 %v1226, %v1530
        %v1532 = vpop.f32.mrf.mxu0
        %1533 = vmatprep.mubr.bf16.mxu0 %v809
        %1534 = vmatmul.mubr.bf16.gmra.mxu0 %v793
        %v1535 = vpop.f32.mrf.mxu0
        %v1536 = vadd.f32 %v1231, %v1535
        %v1537 = vpop.f32.mrf.mxu0
        %v1538 = vpop.f32.mrf.mxu0
        %v1539 = vadd.f32 %v1234, %v1538
        %v1540 = vpop.f32.mrf.mxu0
        %1541 = vmatprep.mubr.bf16.mxu0 %v810
        %1542 = vmatmul.mubr.bf16.gmra.mxu0 %v794
        %v1543 = vpop.f32.mrf.mxu0
        %v1544 = vadd.f32 %v1239, %v1543
        %v1545 = vpop.f32.mrf.mxu0
        %v1546 = vpop.f32.mrf.mxu0
        %v1547 = vadd.f32 %v1242, %v1546
        %v1548 = vpop.f32.mrf.mxu0
        %1549 = vmatprep.mubr.bf16.mxu0 %v811
        %1550 = vmatmul.mubr.bf16.gmra.mxu0 %v795
        %v1551 = vpop.f32.mrf.mxu0
        %v1552 = vadd.f32 %v1247, %v1551
        %v1553 = vpop.f32.mrf.mxu0
        %v1554 = vpop.f32.mrf.mxu0
        %v1555 = vadd.f32 %v1250, %v1554
        %v1556 = vpop.f32.mrf.mxu0
        %1557 = vmatprep.mubr.bf16.mxu0 %v812
        %1558 = vmatmul.mubr.bf16.gmra.mxu0 %v796
        %v1559 = vpop.f32.mrf.mxu0
        %v1560 = vadd.f32 %v1255, %v1559
        %v1561 = vpop.f32.mrf.mxu0
        %v1562 = vpop.f32.mrf.mxu0
        %v1563 = vadd.f32 %v1258, %v1562
        %v1564 = vpop.f32.mrf.mxu0
        %1565 = vmatprep.mubr.bf16.mxu0 %v813
        %1566 = vmatmul.mubr.bf16.gmra.mxu0 %v797
        %v1567 = vpop.f32.mrf.mxu0
        %v1568 = vadd.f32 %v1263, %v1567
        %v1569 = vpop.f32.mrf.mxu0
        %v1570 = vpop.f32.mrf.mxu0
        %v1571 = vadd.f32 %v1266, %v1570
        %v1572 = vpop.f32.mrf.mxu0
        %1573 = vmatprep.mubr.bf16.mxu0 %v814
        %1574 = vmatmul.mubr.bf16.gmra.mxu0 %v798
        %v1575 = vpop.f32.mrf.mxu0
        %v1576 = vadd.f32 %v1271, %v1575
        %v1577 = vpop.f32.mrf.mxu0
        %v1578 = vpop.f32.mrf.mxu0
        %v1579 = vadd.f32 %v1274, %v1578
        %v1580 = vpop.f32.mrf.mxu0
        %1581 = vmatprep.mubr.bf16.mxu0 %v815
        %1582 = vmatmul.mubr.bf16.gmra.mxu0 %v799
        %v1583 = vpop.f32.mrf.mxu0
        %v1584 = vadd.f32 %v1279, %v1583
        %v1585 = vpop.f32.mrf.mxu0
        %v1586 = vpop.f32.mrf.mxu0
        %v1587 = vadd.f32 %v1282, %v1586
        %v1588 = vpop.f32.mrf.mxu0
        %1589 = vmatprep.mubr.bf16.mxu0 %v816
        %1590 = vmatmul.mubr.bf16.gmra.mxu0 %v800
        %v1591 = vpop.f32.mrf.mxu0
        %v1592 = vadd.f32 %v1287, %v1591
        %v1593 = vpop.f32.mrf.mxu0
        %v1594 = vpop.f32.mrf.mxu0
        %v1595 = vadd.f32 %v1290, %v1594
        %v1596 = vpop.f32.mrf.mxu0
        %1597 = vmatprep.mubr.bf16.mxu0 %v817
        %1598 = vmatmul.mubr.bf16.gmra.mxu0 %v801
        %v1599 = vpop.f32.mrf.mxu0
        %v1600 = vadd.f32 %v1295, %v1599
        %v1601 = vpop.f32.mrf.mxu0
        %v1602 = vpop.f32.mrf.mxu0
        %v1603 = vadd.f32 %v1298, %v1602
        %v1604 = vpop.f32.mrf.mxu0
        %1605 = vdwg.mxu0
        %1606 = vmatprep.subr.bf16.mxu0 0
        %1607 = vmatpush1.bf16.msra.mxu0 %v1420
        %1608 = vmatprep.subr.bf16.mxu0 0
        %1609 = vmatpush1.bf16.msra.mxu0 %v1419
        %1610 = vmatprep.subr.bf16.mxu0 0
        %1611 = vmatpush1.bf16.msra.mxu0 %v1418
        %1612 = vmatprep.subr.bf16.mxu0 0
        %1613 = vmatpush1.bf16.msra.mxu0 %v1417
        %1614 = vmatprep.subr.bf16.mxu0 0
        %1615 = vmatpush1.bf16.msra.mxu0 %v1416
        %1616 = vmatprep.subr.bf16.mxu0 0
        %1617 = vmatpush1.bf16.msra.mxu0 %v1415
        %1618 = vmatprep.subr.bf16.mxu0 0
        %1619 = vmatpush1.bf16.msra.mxu0 %v1414
        %1620 = vmatprep.subr.bf16.mxu0 0
        %1621 = vmatpush1.bf16.msra.mxu0 %v1413
        %1622 = vmatprep.subr.bf16.mxu0 0
        %1623 = vmatpush2.bf16.msra.mxu0 0
        %1624 = vmatprep.subr.bf16.mxu0 0
        %1625 = vmatpush2.bf16.msra.mxu0 0
        %1626 = vmatprep.subr.bf16.mxu0 0
        %1627 = vmatpush2.bf16.msra.mxu0 0
        %1628 = vmatprep.subr.bf16.mxu0 0
        %1629 = vmatpush2.bf16.msra.mxu0 0
        %1630 = vmatprep.subr.bf16.mxu0 0
        %1631 = vmatpush2.bf16.msra.mxu0 0
        %1632 = vmatprep.subr.bf16.mxu0 0
        %1633 = vmatpush2.bf16.msra.mxu0 0
        %1634 = vmatprep.subr.bf16.mxu0 0
        %1635 = vmatpush2.bf16.msra.mxu0 0
        %1636 = vmatprep.subr.bf16.mxu0 0
        %1637 = vmatpush2.bf16.msra.mxu0 0
        %1638 = vmatprep.mubr.bf16.mxu0 0
        %1639 = vmatmul.mubr.bf16.gmra.mxu0 0
        %v1640 = vpop.f32.mrf.mxu0
        %v1641 = vadd.f32 %v1480, %v1640
        %v1642 = vpop.f32.mrf.mxu0
        %v1643 = vpop.f32.mrf.mxu0
        %v1644 = vadd.f32 %v1483, %v1643
        %v1645 = vpop.f32.mrf.mxu0
        %1646 = vmatprep.mubr.bf16.mxu0 0
        %1647 = vmatmul.mubr.bf16.gmra.mxu0 %v819
        %v1648 = vpop.f32.mrf.mxu0
        %v1649 = vadd.f32 %v1488, %v1648
        %v1650 = vpop.f32.mrf.mxu0
        %v1651 = vpop.f32.mrf.mxu0
        %v1652 = vadd.f32 %v1491, %v1651
        %v1653 = vpop.f32.mrf.mxu0
        %1654 = vmatprep.mubr.bf16.mxu0 0
        %1655 = vmatmul.mubr.bf16.gmra.mxu0 %v820
        %v1656 = vpop.f32.mrf.mxu0
        %v1657 = vadd.f32 %v1496, %v1656
        %v1658 = vpop.f32.mrf.mxu0
        %v1659 = vpop.f32.mrf.mxu0
        %v1660 = vadd.f32 %v1499, %v1659
        %v1661 = vpop.f32.mrf.mxu0
        %1662 = vmatprep.mubr.bf16.mxu0 0
        %1663 = vmatmul.mubr.bf16.gmra.mxu0 %v821
        %v1664 = vpop.f32.mrf.mxu0
        %v1665 = vadd.f32 %v1504, %v1664
        %v1666 = vpop.f32.mrf.mxu0
        %v1667 = vpop.f32.mrf.mxu0
        %v1668 = vadd.f32 %v1507, %v1667
        %v1669 = vpop.f32.mrf.mxu0
        %1670 = vmatprep.mubr.bf16.mxu0 0
        %1671 = vmatmul.mubr.bf16.gmra.mxu0 %v822
        %v1672 = vpop.f32.mrf.mxu0
        %v1673 = vadd.f32 %v1512, %v1672
        %v1674 = vpop.f32.mrf.mxu0
        %v1675 = vpop.f32.mrf.mxu0
        %v1676 = vadd.f32 %v1515, %v1675
        %v1677 = vpop.f32.mrf.mxu0
        %1678 = vmatprep.mubr.bf16.mxu0 0
        %1679 = vmatmul.mubr.bf16.gmra.mxu0 %v823
        %v1680 = vpop.f32.mrf.mxu0
        %v1681 = vadd.f32 %v1520, %v1680
        %v1682 = vpop.f32.mrf.mxu0
        %v1683 = vpop.f32.mrf.mxu0
        %v1684 = vadd.f32 %v1523, %v1683
        %v1685 = vpop.f32.mrf.mxu0
        %1686 = vmatprep.mubr.bf16.mxu0 0
        %1687 = vmatmul.mubr.bf16.gmra.mxu0 %v824
        %v1688 = vpop.f32.mrf.mxu0
        %v1689 = vadd.f32 %v1528, %v1688
        %v1690 = vpop.f32.mrf.mxu0
        %v1691 = vpop.f32.mrf.mxu0
        %v1692 = vadd.f32 %v1531, %v1691
        %v1693 = vpop.f32.mrf.mxu0
        %1694 = vmatprep.mubr.bf16.mxu0 0
        %1695 = vmatmul.mubr.bf16.gmra.mxu0 %v825
        %v1696 = vpop.f32.mrf.mxu0
        %v1697 = vadd.f32 %v1536, %v1696
        %v1698 = vpop.f32.mrf.mxu0
        %v1699 = vpop.f32.mrf.mxu0
        %v1700 = vadd.f32 %v1539, %v1699
        %v1701 = vpop.f32.mrf.mxu0
        %1702 = vmatprep.mubr.bf16.mxu0 0
        %1703 = vmatmul.mubr.bf16.gmra.mxu0 %v826
        %v1704 = vpop.f32.mrf.mxu0
        %v1705 = vadd.f32 %v1544, %v1704
        %v1706 = vpop.f32.mrf.mxu0
        %v1707 = vpop.f32.mrf.mxu0
        %v1708 = vadd.f32 %v1547, %v1707
        %v1709 = vpop.f32.mrf.mxu0
        %1710 = vmatprep.mubr.bf16.mxu0 0
        %1711 = vmatmul.mubr.bf16.gmra.mxu0 %v827
        %v1712 = vpop.f32.mrf.mxu0
        %v1713 = vadd.f32 %v1552, %v1712
        %v1714 = vpop.f32.mrf.mxu0
        %v1715 = vpop.f32.mrf.mxu0
        %v1716 = vadd.f32 %v1555, %v1715
        %v1717 = vpop.f32.mrf.mxu0
        %1718 = vmatprep.mubr.bf16.mxu0 0
        %1719 = vmatmul.mubr.bf16.gmra.mxu0 %v828
        %v1720 = vpop.f32.mrf.mxu0
        %v1721 = vadd.f32 %v1560, %v1720
        %v1722 = vpop.f32.mrf.mxu0
        %v1723 = vpop.f32.mrf.mxu0
        %v1724 = vadd.f32 %v1563, %v1723
        %v1725 = vpop.f32.mrf.mxu0
        %1726 = vmatprep.mubr.bf16.mxu0 0
        %1727 = vmatmul.mubr.bf16.gmra.mxu0 %v829
        %v1728 = vpop.f32.mrf.mxu0
        %v1729 = vadd.f32 %v1568, %v1728
        %v1730 = vpop.f32.mrf.mxu0
        %v1731 = vpop.f32.mrf.mxu0
        %v1732 = vadd.f32 %v1571, %v1731
        %v1733 = vpop.f32.mrf.mxu0
        %1734 = vmatprep.mubr.bf16.mxu0 0
        %1735 = vmatmul.mubr.bf16.gmra.mxu0 %v830
        %v1736 = vpop.f32.mrf.mxu0
        %v1737 = vadd.f32 %v1576, %v1736
        %v1738 = vpop.f32.mrf.mxu0
        %v1739 = vpop.f32.mrf.mxu0
        %v1740 = vadd.f32 %v1579, %v1739
        %v1741 = vpop.f32.mrf.mxu0
        %1742 = vmatprep.mubr.bf16.mxu0 0
        %1743 = vmatmul.mubr.bf16.gmra.mxu0 %v831
        %v1744 = vpop.f32.mrf.mxu0
        %v1745 = vadd.f32 %v1584, %v1744
        %v1746 = vpop.f32.mrf.mxu0
        %v1747 = vpop.f32.mrf.mxu0
        %v1748 = vadd.f32 %v1587, %v1747
        %v1749 = vpop.f32.mrf.mxu0
        %1750 = vmatprep.mubr.bf16.mxu0 0
        %1751 = vmatmul.mubr.bf16.gmra.mxu0 %v832
        %v1752 = vpop.f32.mrf.mxu0
        %v1753 = vadd.f32 %v1592, %v1752
        %v1754 = vpop.f32.mrf.mxu0
        %v1755 = vpop.f32.mrf.mxu0
        %v1756 = vadd.f32 %v1595, %v1755
        %v1757 = vpop.f32.mrf.mxu0
        %1758 = vmatprep.mubr.bf16.mxu0 0
        %1759 = vmatmul.mubr.bf16.gmra.mxu0 %v833
        %v1760 = vpop.f32.mrf.mxu0
        %v1761 = vadd.f32 %v1600, %v1760
        %v1762 = vpop.f32.mrf.mxu0
        %v1763 = vpop.f32.mrf.mxu0
        %v1764 = vadd.f32 %v1603, %v1763
        %v1765 = vpop.f32.mrf.mxu0
        %1766 = vdwg.mxu0
        %v1815 = vunpack.c.l.b16 %v538
        %v1816 = vunpack.c.l.b16 %v539
        %v1817 = vunpack.c.l.b16 %v540
        %v1818 = vunpack.c.l.b16 %v541
        %v1819 = vunpack.c.l.b16 %v542
        %v1820 = vunpack.c.l.b16 %v543
        %v1821 = vunpack.c.l.b16 %v544
        %v1822 = vunpack.c.l.b16 %v545
        %v1823 = vunpack.c.l.b16 %v546
        %v1824 = vunpack.c.l.b16 %v547
        %v1825 = vunpack.c.l.b16 %v548
        %v1826 = vunpack.c.l.b16 %v549
        %v1827 = vunpack.c.l.b16 %v550
        %v1828 = vunpack.c.l.b16 %v551
        %v1829 = vunpack.c.l.b16 %v552
        %v1830 = vunpack.c.l.b16 %v553
        %v1831 = vunpack.c.l.b16 %v554
        %v1832 = vunpack.c.l.b16 %v555
        %v1833 = vunpack.c.l.b16 %v556
        %v1834 = vunpack.c.l.b16 %v557
        %v1835 = vunpack.c.l.b16 %v558
        %v1836 = vunpack.c.l.b16 %v559
        %v1837 = vunpack.c.l.b16 %v560
        %v1838 = vunpack.c.l.b16 %v561
        %v1839 = vunpack.c.l.b16 %v562
        %v1840 = vunpack.c.l.b16 %v563
        %v1841 = vunpack.c.l.b16 %v564
        %v1842 = vunpack.c.l.b16 %v565
        %v1843 = vunpack.c.l.b16 %v566
        %v1844 = vunpack.c.l.b16 %v567
        %v1845 = vunpack.c.l.b16 %v568
        %v1846 = vunpack.c.l.b16 %v569
        %v1847 = vunpack.c.l.b16 %v570
        %v1848 = vunpack.c.l.b16 %v571
        %v1849 = vunpack.c.l.b16 %v572
        %v1850 = vunpack.c.l.b16 %v573
        %v1851 = vunpack.c.l.b16 %v574
        %v1852 = vunpack.c.l.b16 %v575
        %v1853 = vunpack.c.l.b16 %v576
        %v1854 = vunpack.c.l.b16 %v577
        %v1855 = vunpack.c.l.b16 %v578
        %v1856 = vunpack.c.l.b16 %v579
        %v1857 = vunpack.c.l.b16 %v580
        %v1858 = vunpack.c.l.b16 %v581
        %v1859 = vunpack.c.l.b16 %v582
        %v1860 = vunpack.c.l.b16 %v583
        %v1861 = vunpack.c.l.b16 %v584
        %v1862 = vunpack.c.l.b16 %v585
        %v1863 = vpack.c.b16 %v1816, %v1815
        %v1864 = vpack.c.b16 %v1818, %v1817
        %v1865 = vpack.c.b16 %v1820, %v1819
        %v1866 = vpack.c.b16 %v1822, %v1821
        %v1867 = vpack.c.b16 %v1824, %v1823
        %v1868 = vpack.c.b16 %v1826, %v1825
        %v1869 = vpack.c.b16 %v1828, %v1827
        %v1870 = vpack.c.b16 %v1830, %v1829
        %v1871 = vpack.c.b16 %v1832, %v1831
        %v1872 = vpack.c.b16 %v1834, %v1833
        %v1873 = vpack.c.b16 %v1836, %v1835
        %v1874 = vpack.c.b16 %v1838, %v1837
        %v1875 = vpack.c.b16 %v1840, %v1839
        %v1876 = vpack.c.b16 %v1842, %v1841
        %v1877 = vpack.c.b16 %v1844, %v1843
        %v1878 = vpack.c.b16 %v1846, %v1845
        %v1879 = vpack.c.b16 %v1848, %v1847
        %v1880 = vpack.c.b16 %v1850, %v1849
        %v1881 = vpack.c.b16 %v1852, %v1851
        %v1882 = vpack.c.b16 %v1854, %v1853
        %v1883 = vpack.c.b16 %v1856, %v1855
        %v1884 = vpack.c.b16 %v1858, %v1857
        %v1885 = vpack.c.b16 %v1860, %v1859
        %v1886 = vpack.c.b16 %v1862, %v1861
        %1911 = vmatprep.subr.bf16.mxu0 0
        %1912 = vmatpush1.bf16.msra.mxu0 %v1870
        %1913 = vmatprep.subr.bf16.mxu0 0
        %1914 = vmatpush1.bf16.msra.mxu0 %v1869
        %1915 = vmatprep.subr.bf16.mxu0 0
        %1916 = vmatpush1.bf16.msra.mxu0 %v1868
        %1917 = vmatprep.subr.bf16.mxu0 0
        %1918 = vmatpush1.bf16.msra.mxu0 %v1867
        %1919 = vmatprep.subr.bf16.mxu0 0
        %1920 = vmatpush1.bf16.msra.mxu0 %v1866
        %1921 = vmatprep.subr.bf16.mxu0 0
        %1922 = vmatpush1.bf16.msra.mxu0 %v1865
        %1923 = vmatprep.subr.bf16.mxu0 0
        %1924 = vmatpush1.bf16.msra.mxu0 %v1864
        %1925 = vmatprep.subr.bf16.mxu0 0
        %1926 = vmatpush1.bf16.msra.mxu0 %v1863
        %1927 = vmatprep.subr.bf16.mxu0 0
        %1928 = vmatpush2.bf16.msra.mxu0 %v1878
        %1929 = vmatprep.subr.bf16.mxu0 0
        %1930 = vmatpush2.bf16.msra.mxu0 %v1877
        %1931 = vmatprep.subr.bf16.mxu0 0
        %1932 = vmatpush2.bf16.msra.mxu0 %v1876
        %1933 = vmatprep.subr.bf16.mxu0 0
        %1934 = vmatpush2.bf16.msra.mxu0 %v1875
        %1935 = vmatprep.subr.bf16.mxu0 0
        %1936 = vmatpush2.bf16.msra.mxu0 %v1874
        %1937 = vmatprep.subr.bf16.mxu0 0
        %1938 = vmatpush2.bf16.msra.mxu0 %v1873
        %1939 = vmatprep.subr.bf16.mxu0 0
        %1940 = vmatpush2.bf16.msra.mxu0 %v1872
        %1941 = vmatprep.subr.bf16.mxu0 0
        %1942 = vmatpush2.bf16.msra.mxu0 %v1871
        %1943 = vmatprep.mubr.bf16.mxu0 %v804
        %1944 = vmatmul.mubr.bf16.gmra.mxu0 %v788
        %v1945 = vpop.f32.mrf.mxu0
        %v1946 = vadd.f32 0.0, %v1945
        %v1947 = vpop.f32.mrf.mxu0
        %v1948 = vpop.f32.mrf.mxu0
        %v1949 = vadd.f32 0.0, %v1948
        %v1950 = vpop.f32.mrf.mxu0
        %1951 = vmatprep.mubr.bf16.mxu0 %v805
        %1952 = vmatmul.mubr.bf16.gmra.mxu0 %v789
        %v1953 = vpop.f32.mrf.mxu0
        %v1954 = vadd.f32 0.0, %v1953
        %v1955 = vpop.f32.mrf.mxu0
        %v1956 = vpop.f32.mrf.mxu0
        %v1957 = vadd.f32 0.0, %v1956
        %v1958 = vpop.f32.mrf.mxu0
        %1959 = vmatprep.mubr.bf16.mxu0 %v806
        %1960 = vmatmul.mubr.bf16.gmra.mxu0 %v790
        %v1961 = vpop.f32.mrf.mxu0
        %v1962 = vadd.f32 0.0, %v1961
        %v1963 = vpop.f32.mrf.mxu0
        %v1964 = vpop.f32.mrf.mxu0
        %v1965 = vadd.f32 0.0, %v1964
        %v1966 = vpop.f32.mrf.mxu0
        %1967 = vmatprep.mubr.bf16.mxu0 %v807
        %1968 = vmatmul.mubr.bf16.gmra.mxu0 %v791
        %v1969 = vpop.f32.mrf.mxu0
        %v1970 = vadd.f32 0.0, %v1969
        %v1971 = vpop.f32.mrf.mxu0
        %v1972 = vpop.f32.mrf.mxu0
        %v1973 = vadd.f32 0.0, %v1972
        %v1974 = vpop.f32.mrf.mxu0
        %1975 = vmatprep.mubr.bf16.mxu0 %v808
        %1976 = vmatmul.mubr.bf16.gmra.mxu0 %v792
        %v1977 = vpop.f32.mrf.mxu0
        %v1978 = vadd.f32 0.0, %v1977
        %v1979 = vpop.f32.mrf.mxu0
        %v1980 = vpop.f32.mrf.mxu0
        %v1981 = vadd.f32 0.0, %v1980
        %v1982 = vpop.f32.mrf.mxu0
        %1983 = vmatprep.mubr.bf16.mxu0 %v809
        %1984 = vmatmul.mubr.bf16.gmra.mxu0 %v793
        %v1985 = vpop.f32.mrf.mxu0
        %v1986 = vadd.f32 0.0, %v1985
        %v1987 = vpop.f32.mrf.mxu0
        %v1988 = vpop.f32.mrf.mxu0
        %v1989 = vadd.f32 0.0, %v1988
        %v1990 = vpop.f32.mrf.mxu0
        %1991 = vmatprep.mubr.bf16.mxu0 %v810
        %1992 = vmatmul.mubr.bf16.gmra.mxu0 %v794
        %v1993 = vpop.f32.mrf.mxu0
        %v1994 = vadd.f32 0.0, %v1993
        %v1995 = vpop.f32.mrf.mxu0
        %v1996 = vpop.f32.mrf.mxu0
        %v1997 = vadd.f32 0.0, %v1996
        %v1998 = vpop.f32.mrf.mxu0
        %1999 = vmatprep.mubr.bf16.mxu0 %v811
        %2000 = vmatmul.mubr.bf16.gmra.mxu0 %v795
        %v2001 = vpop.f32.mrf.mxu0
        %v2002 = vadd.f32 0.0, %v2001
        %v2003 = vpop.f32.mrf.mxu0
        %v2004 = vpop.f32.mrf.mxu0
        %v2005 = vadd.f32 0.0, %v2004
        %v2006 = vpop.f32.mrf.mxu0
        %2007 = vmatprep.mubr.bf16.mxu0 %v812
        %2008 = vmatmul.mubr.bf16.gmra.mxu0 %v796
        %v2009 = vpop.f32.mrf.mxu0
        %v2010 = vadd.f32 0.0, %v2009
        %v2011 = vpop.f32.mrf.mxu0
        %v2012 = vpop.f32.mrf.mxu0
        %v2013 = vadd.f32 0.0, %v2012
        %v2014 = vpop.f32.mrf.mxu0
        %2015 = vmatprep.mubr.bf16.mxu0 %v813
        %2016 = vmatmul.mubr.bf16.gmra.mxu0 %v797
        %v2017 = vpop.f32.mrf.mxu0
        %v2018 = vadd.f32 0.0, %v2017
        %v2019 = vpop.f32.mrf.mxu0
        %v2020 = vpop.f32.mrf.mxu0
        %v2021 = vadd.f32 0.0, %v2020
        %v2022 = vpop.f32.mrf.mxu0
        %2023 = vmatprep.mubr.bf16.mxu0 %v814
        %2024 = vmatmul.mubr.bf16.gmra.mxu0 %v798
        %v2025 = vpop.f32.mrf.mxu0
        %v2026 = vadd.f32 0.0, %v2025
        %v2027 = vpop.f32.mrf.mxu0
        %v2028 = vpop.f32.mrf.mxu0
        %v2029 = vadd.f32 0.0, %v2028
        %v2030 = vpop.f32.mrf.mxu0
        %2031 = vmatprep.mubr.bf16.mxu0 %v815
        %2032 = vmatmul.mubr.bf16.gmra.mxu0 %v799
        %v2033 = vpop.f32.mrf.mxu0
        %v2034 = vadd.f32 0.0, %v2033
        %v2035 = vpop.f32.mrf.mxu0
        %v2036 = vpop.f32.mrf.mxu0
        %v2037 = vadd.f32 0.0, %v2036
        %v2038 = vpop.f32.mrf.mxu0
        %2039 = vmatprep.mubr.bf16.mxu0 %v816
        %2040 = vmatmul.mubr.bf16.gmra.mxu0 %v800
        %v2041 = vpop.f32.mrf.mxu0
        %v2042 = vadd.f32 0.0, %v2041
        %v2043 = vpop.f32.mrf.mxu0
        %v2044 = vpop.f32.mrf.mxu0
        %v2045 = vadd.f32 0.0, %v2044
        %v2046 = vpop.f32.mrf.mxu0
        %2047 = vmatprep.mubr.bf16.mxu0 %v817
        %2048 = vmatmul.mubr.bf16.gmra.mxu0 %v801
        %v2049 = vpop.f32.mrf.mxu0
        %v2050 = vadd.f32 0.0, %v2049
        %v2051 = vpop.f32.mrf.mxu0
        %v2052 = vpop.f32.mrf.mxu0
        %v2053 = vadd.f32 0.0, %v2052
        %v2054 = vpop.f32.mrf.mxu0
        %2055 = vmatprep.mubr.bf16.mxu0 %v818
        %2056 = vmatmul.mubr.bf16.gmra.mxu0 %v802
        %v2057 = vpop.f32.mrf.mxu0
        %v2058 = vadd.f32 0.0, %v2057
        %v2059 = vpop.f32.mrf.mxu0
        %v2060 = vpop.f32.mrf.mxu0
        %v2061 = vadd.f32 0.0, %v2060
        %v2062 = vpop.f32.mrf.mxu0
        %2063 = vmatprep.mubr.bf16.mxu0 0
        %2064 = vmatmul.mubr.bf16.gmra.mxu0 0
        %v2065 = vpop.f32.mrf.mxu0
        %v2066 = vadd.f32 0.0, %v2065
        %v2067 = vpop.f32.mrf.mxu0
        %v2068 = vpop.f32.mrf.mxu0
        %v2069 = vadd.f32 0.0, %v2068
        %v2070 = vpop.f32.mrf.mxu0
        %2071 = vdwg.mxu0
        %2072 = vmatprep.subr.bf16.mxu0 0
        %2073 = vmatpush1.bf16.msra.mxu0 %v1886
        %2074 = vmatprep.subr.bf16.mxu0 0
        %2075 = vmatpush1.bf16.msra.mxu0 %v1885
        %2076 = vmatprep.subr.bf16.mxu0 0
        %2077 = vmatpush1.bf16.msra.mxu0 %v1884
        %2078 = vmatprep.subr.bf16.mxu0 0
        %2079 = vmatpush1.bf16.msra.mxu0 %v1883
        %2080 = vmatprep.subr.bf16.mxu0 0
        %2081 = vmatpush1.bf16.msra.mxu0 %v1882
        %2082 = vmatprep.subr.bf16.mxu0 0
        %2083 = vmatpush1.bf16.msra.mxu0 %v1881
        %2084 = vmatprep.subr.bf16.mxu0 0
        %2085 = vmatpush1.bf16.msra.mxu0 %v1880
        %2086 = vmatprep.subr.bf16.mxu0 0
        %2087 = vmatpush1.bf16.msra.mxu0 %v1879
        %2088 = vmatprep.subr.bf16.mxu0 0
        %2089 = vmatpush2.bf16.msra.mxu0 0
        %2090 = vmatprep.subr.bf16.mxu0 0
        %2091 = vmatpush2.bf16.msra.mxu0 0
        %2092 = vmatprep.subr.bf16.mxu0 0
        %2093 = vmatpush2.bf16.msra.mxu0 0
        %2094 = vmatprep.subr.bf16.mxu0 0
        %2095 = vmatpush2.bf16.msra.mxu0 0
        %2096 = vmatprep.subr.bf16.mxu0 0
        %2097 = vmatpush2.bf16.msra.mxu0 0
        %2098 = vmatprep.subr.bf16.mxu0 0
        %2099 = vmatpush2.bf16.msra.mxu0 0
        %2100 = vmatprep.subr.bf16.mxu0 0
        %2101 = vmatpush2.bf16.msra.mxu0 0
        %2102 = vmatprep.subr.bf16.mxu0 0
        %2103 = vmatpush2.bf16.msra.mxu0 0
        %2104 = vmatprep.mubr.bf16.mxu0 0
        %2105 = vmatmul.mubr.bf16.gmra.mxu0 %v820
        %v2106 = vpop.f32.mrf.mxu0
        %v2107 = vadd.f32 %v1946, %v2106
        %v2108 = vpop.f32.mrf.mxu0
        %v2109 = vpop.f32.mrf.mxu0
        %v2110 = vadd.f32 %v1949, %v2109
        %v2111 = vpop.f32.mrf.mxu0
        %2112 = vmatprep.mubr.bf16.mxu0 0
        %2113 = vmatmul.mubr.bf16.gmra.mxu0 %v821
        %v2114 = vpop.f32.mrf.mxu0
        %v2115 = vadd.f32 %v1954, %v2114
        %v2116 = vpop.f32.mrf.mxu0
        %v2117 = vpop.f32.mrf.mxu0
        %v2118 = vadd.f32 %v1957, %v2117
        %v2119 = vpop.f32.mrf.mxu0
        %2120 = vmatprep.mubr.bf16.mxu0 0
        %2121 = vmatmul.mubr.bf16.gmra.mxu0 %v822
        %v2122 = vpop.f32.mrf.mxu0
        %v2123 = vadd.f32 %v1962, %v2122
        %v2124 = vpop.f32.mrf.mxu0
        %v2125 = vpop.f32.mrf.mxu0
        %v2126 = vadd.f32 %v1965, %v2125
        %v2127 = vpop.f32.mrf.mxu0
        %2128 = vmatprep.mubr.bf16.mxu0 0
        %2129 = vmatmul.mubr.bf16.gmra.mxu0 %v823
        %v2130 = vpop.f32.mrf.mxu0
        %v2131 = vadd.f32 %v1970, %v2130
        %v2132 = vpop.f32.mrf.mxu0
        %v2133 = vpop.f32.mrf.mxu0
        %v2134 = vadd.f32 %v1973, %v2133
        %v2135 = vpop.f32.mrf.mxu0
        %2136 = vmatprep.mubr.bf16.mxu0 0
        %2137 = vmatmul.mubr.bf16.gmra.mxu0 %v824
        %v2138 = vpop.f32.mrf.mxu0
        %v2139 = vadd.f32 %v1978, %v2138
        %v2140 = vpop.f32.mrf.mxu0
        %v2141 = vpop.f32.mrf.mxu0
        %v2142 = vadd.f32 %v1981, %v2141
        %v2143 = vpop.f32.mrf.mxu0
        %2144 = vmatprep.mubr.bf16.mxu0 0
        %2145 = vmatmul.mubr.bf16.gmra.mxu0 %v825
        %v2146 = vpop.f32.mrf.mxu0
        %v2147 = vadd.f32 %v1986, %v2146
        %v2148 = vpop.f32.mrf.mxu0
        %v2149 = vpop.f32.mrf.mxu0
        %v2150 = vadd.f32 %v1989, %v2149
        %v2151 = vpop.f32.mrf.mxu0
        %2152 = vmatprep.mubr.bf16.mxu0 0
        %2153 = vmatmul.mubr.bf16.gmra.mxu0 %v826
        %v2154 = vpop.f32.mrf.mxu0
        %v2155 = vadd.f32 %v1994, %v2154
        %v2156 = vpop.f32.mrf.mxu0
        %v2157 = vpop.f32.mrf.mxu0
        %v2158 = vadd.f32 %v1997, %v2157
        %v2159 = vpop.f32.mrf.mxu0
        %2160 = vmatprep.mubr.bf16.mxu0 0
        %2161 = vmatmul.mubr.bf16.gmra.mxu0 %v827
        %v2162 = vpop.f32.mrf.mxu0
        %v2163 = vadd.f32 %v2002, %v2162
        %v2164 = vpop.f32.mrf.mxu0
        %v2165 = vpop.f32.mrf.mxu0
        %v2166 = vadd.f32 %v2005, %v2165
        %v2167 = vpop.f32.mrf.mxu0
        %2168 = vmatprep.mubr.bf16.mxu0 0
        %2169 = vmatmul.mubr.bf16.gmra.mxu0 %v828
        %v2170 = vpop.f32.mrf.mxu0
        %v2171 = vadd.f32 %v2010, %v2170
        %v2172 = vpop.f32.mrf.mxu0
        %v2173 = vpop.f32.mrf.mxu0
        %v2174 = vadd.f32 %v2013, %v2173
        %v2175 = vpop.f32.mrf.mxu0
        %2176 = vmatprep.mubr.bf16.mxu0 0
        %2177 = vmatmul.mubr.bf16.gmra.mxu0 %v829
        %v2178 = vpop.f32.mrf.mxu0
        %v2179 = vadd.f32 %v2018, %v2178
        %v2180 = vpop.f32.mrf.mxu0
        %v2181 = vpop.f32.mrf.mxu0
        %v2182 = vadd.f32 %v2021, %v2181
        %v2183 = vpop.f32.mrf.mxu0
        %2184 = vmatprep.mubr.bf16.mxu0 0
        %2185 = vmatmul.mubr.bf16.gmra.mxu0 %v830
        %v2186 = vpop.f32.mrf.mxu0
        %v2187 = vadd.f32 %v2026, %v2186
        %v2188 = vpop.f32.mrf.mxu0
        %v2189 = vpop.f32.mrf.mxu0
        %v2190 = vadd.f32 %v2029, %v2189
        %v2191 = vpop.f32.mrf.mxu0
        %2192 = vmatprep.mubr.bf16.mxu0 0
        %2193 = vmatmul.mubr.bf16.gmra.mxu0 %v831
        %v2194 = vpop.f32.mrf.mxu0
        %v2195 = vadd.f32 %v2034, %v2194
        %v2196 = vpop.f32.mrf.mxu0
        %v2197 = vpop.f32.mrf.mxu0
        %v2198 = vadd.f32 %v2037, %v2197
        %v2199 = vpop.f32.mrf.mxu0
        %2200 = vmatprep.mubr.bf16.mxu0 0
        %2201 = vmatmul.mubr.bf16.gmra.mxu0 %v832
        %v2202 = vpop.f32.mrf.mxu0
        %v2203 = vadd.f32 %v2042, %v2202
        %v2204 = vpop.f32.mrf.mxu0
        %v2205 = vpop.f32.mrf.mxu0
        %v2206 = vadd.f32 %v2045, %v2205
        %v2207 = vpop.f32.mrf.mxu0
        %2208 = vmatprep.mubr.bf16.mxu0 0
        %2209 = vmatmul.mubr.bf16.gmra.mxu0 %v833
        %v2210 = vpop.f32.mrf.mxu0
        %v2211 = vadd.f32 %v2050, %v2210
        %v2212 = vpop.f32.mrf.mxu0
        %v2213 = vpop.f32.mrf.mxu0
        %v2214 = vadd.f32 %v2053, %v2213
        %v2215 = vpop.f32.mrf.mxu0
        %2216 = vmatprep.mubr.bf16.mxu0 0
        %2217 = vmatmul.mubr.bf16.gmra.mxu0 %v834
        %v2218 = vpop.f32.mrf.mxu0
        %v2219 = vadd.f32 %v2058, %v2218
        %v2220 = vpop.f32.mrf.mxu0
        %v2221 = vpop.f32.mrf.mxu0
        %v2222 = vadd.f32 %v2061, %v2221
        %v2223 = vpop.f32.mrf.mxu0
        %2224 = vmatprep.mubr.bf16.mxu0 0
        %2225 = vmatmul.mubr.bf16.gmra.mxu0 0
        %v2226 = vpop.f32.mrf.mxu0
        %v2227 = vadd.f32 %v2066, %v2226
        %v2228 = vpop.f32.mrf.mxu0
        %v2229 = vpop.f32.mrf.mxu0
        %v2230 = vadd.f32 %v2069, %v2229
        %v2231 = vpop.f32.mrf.mxu0
        %2232 = vdwg.mxu0
        %v2233 = vadd.f32 %v1641, %v2107
        %v2234 = vadd.f32 %v1644, %v2110
        %v2235 = vadd.f32 %v1649, %v2115
        %v2236 = vadd.f32 %v1652, %v2118
        %v2237 = vadd.f32 %v1657, %v2123
        %v2238 = vadd.f32 %v1660, %v2126
        %v2239 = vadd.f32 %v1665, %v2131
        %v2240 = vadd.f32 %v1668, %v2134
        %v2241 = vadd.f32 %v1673, %v2139
        %v2242 = vadd.f32 %v1676, %v2142
        %v2243 = vadd.f32 %v1681, %v2147
        %v2244 = vadd.f32 %v1684, %v2150
        %v2245 = vadd.f32 %v1689, %v2155
        %v2246 = vadd.f32 %v1692, %v2158
        %v2247 = vadd.f32 %v1697, %v2163
        %v2248 = vadd.f32 %v1700, %v2166
        %v2249 = vadd.f32 %v1705, %v2171
        %v2250 = vadd.f32 %v1708, %v2174
        %v2251 = vadd.f32 %v1713, %v2179
        %v2252 = vadd.f32 %v1716, %v2182
        %v2253 = vadd.f32 %v1721, %v2187
        %v2254 = vadd.f32 %v1724, %v2190
        %v2255 = vadd.f32 %v1729, %v2195
        %v2256 = vadd.f32 %v1732, %v2198
        %v2257 = vadd.f32 %v1737, %v2203
        %v2258 = vadd.f32 %v1740, %v2206
        %v2259 = vadd.f32 %v1745, %v2211
        %v2260 = vadd.f32 %v1748, %v2214
        %v2261 = vadd.f32 %v1753, %v2219
        %v2262 = vadd.f32 %v1756, %v2222
        %v2263 = vadd.f32 %v1761, %v2227
        %v2264 = vadd.f32 %v1764, %v2230
        %v2265 = vld [vmem:[%s4] sm:$0x1]
        %v2267 = vlaneseq
        %v2268 = vshrl.u32 %v2267, 7
        %v2269 = vsub.s32 0, %v2268
        %v2270 = vrot.slane %v2265, %v2269
        %v2272 = vadd.f32 %v2233, %v2270
        %v2273 = vadd.f32 %v2234, %v2270
        %v2274 = vadd.f32 %v2235, %v2270
        %v2275 = vadd.f32 %v2236, %v2270
        %v2276 = vadd.f32 %v2237, %v2270
        %v2277 = vadd.f32 %v2238, %v2270
        %v2278 = vadd.f32 %v2239, %v2270
        %v2279 = vadd.f32 %v2240, %v2270
        %v2280 = vadd.f32 %v2241, %v2270
        %v2281 = vadd.f32 %v2242, %v2270
        %v2282 = vadd.f32 %v2243, %v2270
        %v2283 = vadd.f32 %v2244, %v2270
        %v2284 = vadd.f32 %v2245, %v2270
        %v2285 = vadd.f32 %v2246, %v2270
        %v2286 = vadd.f32 %v2247, %v2270
        %v2287 = vadd.f32 %v2248, %v2270
        %v2288 = vadd.f32 %v2249, %v2270
        %v2289 = vadd.f32 %v2250, %v2270
        %v2290 = vadd.f32 %v2251, %v2270
        %v2291 = vadd.f32 %v2252, %v2270
        %v2292 = vadd.f32 %v2253, %v2270
        %v2293 = vadd.f32 %v2254, %v2270
        %v2294 = vadd.f32 %v2255, %v2270
        %v2295 = vadd.f32 %v2256, %v2270
        %v2296 = vadd.f32 %v2257, %v2270
        %v2297 = vadd.f32 %v2258, %v2270
        %v2298 = vadd.f32 %v2259, %v2270
        %v2299 = vadd.f32 %v2260, %v2270
        %v2300 = vadd.f32 %v2261, %v2270
        %v2301 = vadd.f32 %v2262, %v2270
        %v2302 = vadd.f32 %v2263, %v2270
        %v2303 = vadd.f32 %v2264, %v2270
        %v2304 = vmax.f32 %v2272, 0.0
        %v2305 = vmax.f32 %v2273, 0.0
        %v2306 = vmax.f32 %v2274, 0.0
        %v2307 = vmax.f32 %v2275, 0.0
        %v2308 = vmax.f32 %v2276, 0.0
        %v2309 = vmax.f32 %v2277, 0.0
        %v2310 = vmax.f32 %v2278, 0.0
        %v2311 = vmax.f32 %v2279, 0.0
        %v2312 = vmax.f32 %v2280, 0.0
        %v2313 = vmax.f32 %v2281, 0.0
        %v2314 = vmax.f32 %v2282, 0.0
        %v2315 = vmax.f32 %v2283, 0.0
        %v2316 = vmax.f32 %v2284, 0.0
        %v2317 = vmax.f32 %v2285, 0.0
        %v2318 = vmax.f32 %v2286, 0.0
        %v2319 = vmax.f32 %v2287, 0.0
        %v2320 = vmax.f32 %v2288, 0.0
        %v2321 = vmax.f32 %v2289, 0.0
        %v2322 = vmax.f32 %v2290, 0.0
        %v2323 = vmax.f32 %v2291, 0.0
        %v2324 = vmax.f32 %v2292, 0.0
        %v2325 = vmax.f32 %v2293, 0.0
        %v2326 = vmax.f32 %v2294, 0.0
        %v2327 = vmax.f32 %v2295, 0.0
        %v2328 = vmax.f32 %v2296, 0.0
        %v2329 = vmax.f32 %v2297, 0.0
        %v2330 = vmax.f32 %v2298, 0.0
        %v2331 = vmax.f32 %v2299, 0.0
        %v2332 = vmax.f32 %v2300, 0.0
        %v2333 = vmax.f32 %v2301, 0.0
        %v2334 = vmax.f32 %v2302, 0.0
        %v2335 = vmax.f32 %v2303, 0.0
        %v2336 = vld [vmem:[#allocation7] sm:$0xf]
        %v2337 = vld [vmem:[#allocation7 + $0x4] sm:$0xf]
        %v2338 = vld [vmem:[#allocation7 + $0x8] sm:$0xf]
        %v2339 = vld [vmem:[#allocation7 + $0xc] sm:$0xf]
        %v2340 = vld [vmem:[#allocation7 + $0x10] sm:$0xf]
        %v2341 = vld [vmem:[#allocation7 + $0x14] sm:$0xf]
        %v2342 = vld [vmem:[#allocation7 + $0x18] sm:$0xf]
        %v2343 = vld [vmem:[#allocation7 + $0x1c] sm:$0xf]
        %v2344 = vld [vmem:[#allocation7 + $0x20] sm:$0xf]
        %v2345 = vld [vmem:[#allocation7 + $0x24] sm:$0xf]
        %v2346 = vld [vmem:[#allocation7 + $0x28] sm:$0xf]
        %v2347 = vld [vmem:[#allocation7 + $0x2c] sm:$0xf]
        %v2348 = vld [vmem:[#allocation7 + $0x30] sm:$0xf]
        %v2349 = vld [vmem:[#allocation7 + $0x34] sm:$0xf]
        %v2350 = vld [vmem:[#allocation7 + $0x38] sm:$0xf]
        %v2351 = vld [vmem:[#allocation7 + $0x3c] sm:$0xf]
        %v2352 = vld [vmem:[#allocation7 + $0x40] sm:$0xf]
        %v2353 = vld [vmem:[#allocation7 + $0x44] sm:$0xf]
        %v2354 = vld [vmem:[#allocation7 + $0x48] sm:$0xf]
        %v2355 = vld [vmem:[#allocation7 + $0x4c] sm:$0xf]
        %v2356 = vld [vmem:[#allocation7 + $0x50] sm:$0xf]
        %v2357 = vld [vmem:[#allocation7 + $0x54] sm:$0xf]
        %v2358 = vld [vmem:[#allocation7 + $0x58] sm:$0xf]
        %v2359 = vld [vmem:[#allocation7 + $0x5c] sm:$0xf]
        %v2360 = vld [vmem:[#allocation7 + $0x60] sm:$0xf]
        %v2361 = vld [vmem:[#allocation7 + $0x64] sm:$0xf]
        %v2362 = vld [vmem:[#allocation7 + $0x68] sm:$0xf]
        %v2363 = vld [vmem:[#allocation7 + $0x6c] sm:$0xf]
        %v2364 = vld [vmem:[#allocation7 + $0x70] sm:$0xf]
        %v2365 = vld [vmem:[#allocation7 + $0x74] sm:$0xf]
        %v2366 = vld [vmem:[#allocation7 + $0x78] sm:$0xf]
        %v2367 = vld [vmem:[#allocation7 + $0x7c] sm:$0xf]
        %v2368 = vld [vmem:[#allocation7 + $0x80] sm:$0xf]
        %v2369 = vld [vmem:[#allocation7 + $0x84] sm:$0xf]
        %v2370 = vld [vmem:[#allocation7 + $0x88] sm:$0xf]
        %v2371 = vld [vmem:[#allocation7 + $0x8c] sm:$0xf]
        %v2372 = vld [vmem:[#allocation7 + $0x90] sm:$0xf]
        %v2373 = vld [vmem:[#allocation7 + $0x94] sm:$0xf]
        %v2374 = vld [vmem:[#allocation7 + $0x98] sm:$0xf]
        %v2375 = vld [vmem:[#allocation7 + $0x9c] sm:$0xf]
        %v2376 = vld [vmem:[#allocation7 + $0xa0] sm:$0xf]
        %v2377 = vld [vmem:[#allocation7 + $0xa4] sm:$0xf]
        %v2378 = vld [vmem:[#allocation7 + $0xa8] sm:$0xf]
        %v2379 = vld [vmem:[#allocation7 + $0xac] sm:$0xf]
        %v2380 = vld [vmem:[#allocation7 + $0xb0] sm:$0xf]
        %v2381 = vld [vmem:[#allocation7 + $0xb4] sm:$0xf]
        %v2382 = vld [vmem:[#allocation7 + $0xb8] sm:$0xf]
        %v2383 = vld [vmem:[#allocation7 + $0xbc] sm:$0xf]
        %v2384 = vld [vmem:[#allocation7 + $0xc0] sm:$0xf]
        %v2385 = vld [vmem:[#allocation7 + $0xc4] sm:$0xf]
        %v2386 = vld [vmem:[#allocation7 + $0xc8] sm:$0xf]
        %v2387 = vld [vmem:[#allocation7 + $0xcc] sm:$0xf]
        %v2388 = vld [vmem:[#allocation7 + $0xd0] sm:$0xf]
        %v2389 = vld [vmem:[#allocation7 + $0xd4] sm:$0xf]
        %v2390 = vld [vmem:[#allocation7 + $0xd8] sm:$0xf]
        %v2391 = vld [vmem:[#allocation7 + $0xdc] sm:$0xf]
        %v2392 = vld [vmem:[#allocation7 + $0xe0] sm:$0xf]
        %v2393 = vld [vmem:[#allocation7 + $0xe4] sm:$0xf]
        %v2394 = vld [vmem:[#allocation7 + $0xe8] sm:$0xf]
        %v2395 = vld [vmem:[#allocation7 + $0xec] sm:$0xf]
        %v2396 = vld [vmem:[#allocation7 + $0xf0] sm:$0xf]
        %v2397 = vld [vmem:[#allocation7 + $0xf4] sm:$0xf]
        %v2398 = vld [vmem:[#allocation7 + $0xf8] sm:$0xf]
        %v2399 = vld [vmem:[#allocation7 + $0xfc] sm:$0xf]
        %v2400 = vld [vmem:[#allocation7 + $0x100] sm:$0xf]
        %v2401 = vld [vmem:[#allocation7 + $0x104] sm:$0xf]
        %v2402 = vld [vmem:[#allocation7 + $0x108] sm:$0xf]
        %v2403 = vld [vmem:[#allocation7 + $0x10c] sm:$0xf]
        %v2404 = vld [vmem:[#allocation7 + $0x110] sm:$0xf]
        %v2405 = vld [vmem:[#allocation7 + $0x114] sm:$0xf]
        %v2406 = vld [vmem:[#allocation7 + $0x118] sm:$0xf]
        %v2407 = vld [vmem:[#allocation7 + $0x11c] sm:$0xf]
        %v2408 = vld [vmem:[#allocation7 + $0x120] sm:$0xf]
        %v2409 = vld [vmem:[#allocation7 + $0x124] sm:$0xf]
        %v2410 = vld [vmem:[#allocation7 + $0x128] sm:$0xf]
        %v2411 = vld [vmem:[#allocation7 + $0x12c] sm:$0xf]
        %v2412 = vld [vmem:[#allocation7 + $0x130] sm:$0xf]
        %v2413 = vld [vmem:[#allocation7 + $0x134] sm:$0xf]
        %v2414 = vld [vmem:[#allocation7 + $0x138] sm:$0xf]
        %v2415 = vld [vmem:[#allocation7 + $0x13c] sm:$0xf]
        %v2416 = vld [vmem:[#allocation7 + $0x140] sm:$0xf]
        %v2417 = vld [vmem:[#allocation7 + $0x144] sm:$0xf]
        %v2418 = vld [vmem:[#allocation7 + $0x148] sm:$0xf]
        %v2419 = vld [vmem:[#allocation7 + $0x14c] sm:$0xf]
        %v2420 = vld [vmem:[#allocation7 + $0x150] sm:$0xf]
        %v2421 = vld [vmem:[#allocation7 + $0x154] sm:$0xf]
        %v2422 = vld [vmem:[#allocation7 + $0x158] sm:$0xf]
        %v2423 = vld [vmem:[#allocation7 + $0x15c] sm:$0xf]
        %v2424 = vld [vmem:[#allocation7 + $0x160] sm:$0xf]
        %v2425 = vld [vmem:[#allocation7 + $0x164] sm:$0xf]
        %v2426 = vld [vmem:[#allocation7 + $0x168] sm:$0xf]
        %v2427 = vld [vmem:[#allocation7 + $0x16c] sm:$0xf]
        %v2428 = vld [vmem:[#allocation7 + $0x170] sm:$0xf]
        %v2429 = vld [vmem:[#allocation7 + $0x174] sm:$0xf]
        %v2430 = vld [vmem:[#allocation7 + $0x178] sm:$0xf]
        %v2431 = vld [vmem:[#allocation7 + $0x17c] sm:$0xf]
        %v2432 = vld [vmem:[#allocation7 + $0x180] sm:$0xf]
        %v2433 = vld [vmem:[#allocation7 + $0x184] sm:$0xf]
        %v2434 = vld [vmem:[#allocation7 + $0x188] sm:$0xf]
        %v2435 = vld [vmem:[#allocation7 + $0x18c] sm:$0xf]
        %v2436 = vld [vmem:[#allocation7 + $0x190] sm:$0xf]
        %v2437 = vld [vmem:[#allocation7 + $0x194] sm:$0xf]
        %v2438 = vld [vmem:[#allocation7 + $0x198] sm:$0xf]
        %v2439 = vld [vmem:[#allocation7 + $0x19c] sm:$0xf]
        %v2440 = vld [vmem:[#allocation7 + $0x1a0] sm:$0xf]
        %v2441 = vld [vmem:[#allocation7 + $0x1a4] sm:$0xf]
        %v2442 = vld [vmem:[#allocation7 + $0x1a8] sm:$0xf]
        %v2443 = vld [vmem:[#allocation7 + $0x1ac] sm:$0xf]
        %v2444 = vld [vmem:[#allocation7 + $0x1b0] sm:$0xf]
        %v2445 = vld [vmem:[#allocation7 + $0x1b4] sm:$0xf]
        %v2446 = vld [vmem:[#allocation7 + $0x1b8] sm:$0xf]
        %v2447 = vld [vmem:[#allocation7 + $0x1bc] sm:$0xf]
        %v2448 = vld [vmem:[#allocation7 + $0x1c0] sm:$0xf]
        %v2449 = vld [vmem:[#allocation7 + $0x1c4] sm:$0xf]
        %v2450 = vld [vmem:[#allocation7 + $0x1c8] sm:$0xf]
        %v2451 = vld [vmem:[#allocation7 + $0x1cc] sm:$0xf]
        %v2452 = vld [vmem:[#allocation7 + $0x1d0] sm:$0xf]
        %v2453 = vld [vmem:[#allocation7 + $0x1d4] sm:$0xf]
        %v2454 = vld [vmem:[#allocation7 + $0x1d8] sm:$0xf]
        %v2455 = vld [vmem:[#allocation7 + $0x1dc] sm:$0xf]
        %v2456 = vld [vmem:[#allocation7 + $0x1e0] sm:$0xf]
        %v2457 = vld [vmem:[#allocation7 + $0x1e4] sm:$0xf]
        %v2458 = vld [vmem:[#allocation7 + $0x1e8] sm:$0xf]
        %v2459 = vld [vmem:[#allocation7 + $0x1ec] sm:$0xf]
        %v2460 = vld [vmem:[#allocation7 + $0x1f0] sm:$0xf]
        %v2461 = vld [vmem:[#allocation7 + $0x1f4] sm:$0xf]
        %v2462 = vld [vmem:[#allocation7 + $0x1f8] sm:$0xf]
        %v2463 = vld [vmem:[#allocation7 + $0x1fc] sm:$0xf]
        %v2464 = vld [vmem:[#allocation7 + $0x200] sm:$0xf]
        %v2465 = vld [vmem:[#allocation7 + $0x204] sm:$0xf]
        %v2466 = vld [vmem:[#allocation7 + $0x208] sm:$0xf]
        %v2467 = vld [vmem:[#allocation7 + $0x20c] sm:$0xf]
        %v2468 = vld [vmem:[#allocation7 + $0x210] sm:$0xf]
        %v2469 = vld [vmem:[#allocation7 + $0x214] sm:$0xf]
        %v2470 = vld [vmem:[#allocation7 + $0x218] sm:$0xf]
        %v2471 = vld [vmem:[#allocation7 + $0x21c] sm:$0xf]
        %v2472 = vld [vmem:[#allocation7 + $0x220] sm:$0xf]
        %v2473 = vld [vmem:[#allocation7 + $0x224] sm:$0xf]
        %v2474 = vld [vmem:[#allocation7 + $0x228] sm:$0xf]
        %v2475 = vld [vmem:[#allocation7 + $0x22c] sm:$0xf]
        %v2476 = vld [vmem:[#allocation7 + $0x230] sm:$0xf]
        %v2477 = vld [vmem:[#allocation7 + $0x234] sm:$0xf]
        %v2478 = vld [vmem:[#allocation7 + $0x238] sm:$0xf]
        %v2479 = vld [vmem:[#allocation7 + $0x23c] sm:$0xf]
        %v2480 = vrot.slane %v2304, 7
        %v2481 = vrot.slane %v2306, 7
        %v2482 = vrot.slane %v2308, 7
        %v2483 = vrot.slane %v2310, 7
        %v2484 = vrot.slane %v2312, 7
        %v2485 = vrot.slane %v2314, 7
        %v2486 = vrot.slane %v2316, 7
        %v2487 = vrot.slane %v2318, 7
        %v2488 = vrot.slane %v2320, 7
        %v2489 = vrot.slane %v2322, 7
        %v2490 = vrot.slane %v2324, 7
        %v2491 = vrot.slane %v2326, 7
        %v2492 = vrot.slane %v2328, 7
        %v2493 = vrot.slane %v2330, 7
        %v2494 = vrot.slane %v2332, 7
        %v2495 = vrot.slane %v2334, 7
        %v2496 = vrot.slane %v2305, 7
        %v2497 = vrot.slane %v2307, 7
        %v2498 = vrot.slane %v2309, 7
        %v2499 = vrot.slane %v2311, 7
        %v2500 = vrot.slane %v2313, 7
        %v2501 = vrot.slane %v2315, 7
        %v2502 = vrot.slane %v2317, 7
        %v2503 = vrot.slane %v2319, 7
        %v2504 = vrot.slane %v2321, 7
        %v2505 = vrot.slane %v2323, 7
        %v2506 = vrot.slane %v2325, 7
        %v2507 = vrot.slane %v2327, 7
        %v2508 = vrot.slane %v2329, 7
        %v2509 = vrot.slane %v2331, 7
        %v2510 = vrot.slane %v2333, 7
        %v2511 = vrot.slane %v2335, 7
        %v2512 = vsel %vm623, %v2480, %v2496
        %v2513 = vsel %vm623, %v2481, %v2497
        %v2514 = vsel %vm623, %v2482, %v2498
        %v2515 = vsel %vm623, %v2483, %v2499
        %v2516 = vsel %vm623, %v2484, %v2500
        %v2517 = vsel %vm623, %v2485, %v2501
        %v2518 = vsel %vm623, %v2486, %v2502
        %v2519 = vsel %vm623, %v2487, %v2503
        %v2520 = vsel %vm623, %v2488, %v2504
        %v2521 = vsel %vm623, %v2489, %v2505
        %v2522 = vsel %vm623, %v2490, %v2506
        %v2523 = vsel %vm623, %v2491, %v2507
        %v2524 = vsel %vm623, %v2492, %v2508
        %v2525 = vsel %vm623, %v2493, %v2509
        %v2526 = vsel %vm623, %v2494, %v2510
        %v2527 = vsel %vm623, %v2495, %v2511
        %v2528 = vsel %vm623, %v2496, %v2480
        %v2529 = vsel %vm623, %v2497, %v2481
        %v2530 = vsel %vm623, %v2498, %v2482
        %v2531 = vsel %vm623, %v2499, %v2483
        %v2532 = vsel %vm623, %v2500, %v2484
        %v2533 = vsel %vm623, %v2501, %v2485
        %v2534 = vsel %vm623, %v2502, %v2486
        %v2535 = vsel %vm623, %v2503, %v2487
        %v2536 = vsel %vm623, %v2504, %v2488
        %v2537 = vsel %vm623, %v2505, %v2489
        %v2538 = vsel %vm623, %v2506, %v2490
        %v2539 = vsel %vm623, %v2507, %v2491
        %v2540 = vsel %vm623, %v2508, %v2492
        %v2541 = vsel %vm623, %v2509, %v2493
        %v2542 = vsel %vm623, %v2510, %v2494
        %v2543 = vsel %vm623, %v2511, %v2495
        %v2544 = vsel %vm589, 0.0, %v2528
        %v2545 = vsel %vm590, 0.0, %v2512
        %v2546 = vsel %vm589, 0.0, %v2529
        %v2547 = vsel %vm590, 0.0, %v2513
        %v2548 = vsel %vm589, 0.0, %v2530
        %v2549 = vsel %vm590, 0.0, %v2514
        %v2550 = vsel %vm589, 0.0, %v2531
        %v2551 = vsel %vm590, 0.0, %v2515
        %v2552 = vsel %vm589, 0.0, %v2532
        %v2553 = vsel %vm590, 0.0, %v2516
        %v2554 = vsel %vm589, 0.0, %v2533
        %v2555 = vsel %vm590, 0.0, %v2517
        %v2556 = vsel %vm589, 0.0, %v2534
        %v2557 = vsel %vm590, 0.0, %v2518
        %v2558 = vsel %vm589, 0.0, %v2535
        %v2559 = vsel %vm590, 0.0, %v2519
        %v2560 = vsel %vm589, 0.0, %v2536
        %v2561 = vsel %vm590, 0.0, %v2520
        %v2562 = vsel %vm589, 0.0, %v2537
        %v2563 = vsel %vm590, 0.0, %v2521
        %v2564 = vsel %vm589, 0.0, %v2538
        %v2565 = vsel %vm590, 0.0, %v2522
        %v2566 = vsel %vm589, 0.0, %v2539
        %v2567 = vsel %vm590, 0.0, %v2523
        %v2568 = vsel %vm589, 0.0, %v2540
        %v2569 = vsel %vm590, 0.0, %v2524
        %v2570 = vsel %vm589, 0.0, %v2541
        %v2571 = vsel %vm590, 0.0, %v2525
        %v2572 = vsel %vm589, 0.0, %v2542
        %v2573 = vsel %vm590, 0.0, %v2526
        %v2574 = vsel %vm589, 0.0, %v2543
        %v2575 = vsel %vm590, 0.0, %v2527
        %v2576 = vrot.slane %v2304, 1
        %v2577 = vrot.slane %v2306, 1
        %v2578 = vrot.slane %v2308, 1
        %v2579 = vrot.slane %v2310, 1
        %v2580 = vrot.slane %v2312, 1
        %v2581 = vrot.slane %v2314, 1
        %v2582 = vrot.slane %v2316, 1
        %v2583 = vrot.slane %v2318, 1
        %v2584 = vrot.slane %v2320, 1
        %v2585 = vrot.slane %v2322, 1
        %v2586 = vrot.slane %v2324, 1
        %v2587 = vrot.slane %v2326, 1
        %v2588 = vrot.slane %v2328, 1
        %v2589 = vrot.slane %v2330, 1
        %v2590 = vrot.slane %v2332, 1
        %v2591 = vrot.slane %v2334, 1
        %v2592 = vrot.slane %v2305, 1
        %v2593 = vrot.slane %v2307, 1
        %v2594 = vrot.slane %v2309, 1
        %v2595 = vrot.slane %v2311, 1
        %v2596 = vrot.slane %v2313, 1
        %v2597 = vrot.slane %v2315, 1
        %v2598 = vrot.slane %v2317, 1
        %v2599 = vrot.slane %v2319, 1
        %v2600 = vrot.slane %v2321, 1
        %v2601 = vrot.slane %v2323, 1
        %v2602 = vrot.slane %v2325, 1
        %v2603 = vrot.slane %v2327, 1
        %v2604 = vrot.slane %v2329, 1
        %v2605 = vrot.slane %v2331, 1
        %v2606 = vrot.slane %v2333, 1
        %v2607 = vrot.slane %v2335, 1
        %v2608 = vsel %vm722, %v2576, %v2592
        %v2609 = vsel %vm722, %v2577, %v2593
        %v2610 = vsel %vm722, %v2578, %v2594
        %v2611 = vsel %vm722, %v2579, %v2595
        %v2612 = vsel %vm722, %v2580, %v2596
        %v2613 = vsel %vm722, %v2581, %v2597
        %v2614 = vsel %vm722, %v2582, %v2598
        %v2615 = vsel %vm722, %v2583, %v2599
        %v2616 = vsel %vm722, %v2584, %v2600
        %v2617 = vsel %vm722, %v2585, %v2601
        %v2618 = vsel %vm722, %v2586, %v2602
        %v2619 = vsel %vm722, %v2587, %v2603
        %v2620 = vsel %vm722, %v2588, %v2604
        %v2621 = vsel %vm722, %v2589, %v2605
        %v2622 = vsel %vm722, %v2590, %v2606
        %v2623 = vsel %vm722, %v2591, %v2607
        %v2624 = vsel %vm722, %v2592, %v2576
        %v2625 = vsel %vm722, %v2593, %v2577
        %v2626 = vsel %vm722, %v2594, %v2578
        %v2627 = vsel %vm722, %v2595, %v2579
        %v2628 = vsel %vm722, %v2596, %v2580
        %v2629 = vsel %vm722, %v2597, %v2581
        %v2630 = vsel %vm722, %v2598, %v2582
        %v2631 = vsel %vm722, %v2599, %v2583
        %v2632 = vsel %vm722, %v2600, %v2584
        %v2633 = vsel %vm722, %v2601, %v2585
        %v2634 = vsel %vm722, %v2602, %v2586
        %v2635 = vsel %vm722, %v2603, %v2587
        %v2636 = vsel %vm722, %v2604, %v2588
        %v2637 = vsel %vm722, %v2605, %v2589
        %v2638 = vsel %vm722, %v2606, %v2590
        %v2639 = vsel %vm722, %v2607, %v2591
        %v2640 = vsel %vm688, 0.0, %v2608
        %v2641 = vsel %vm689, 0.0, %v2624
        %v2642 = vsel %vm688, 0.0, %v2609
        %v2643 = vsel %vm689, 0.0, %v2625
        %v2644 = vsel %vm688, 0.0, %v2610
        %v2645 = vsel %vm689, 0.0, %v2626
        %v2646 = vsel %vm688, 0.0, %v2611
        %v2647 = vsel %vm689, 0.0, %v2627
        %v2648 = vsel %vm688, 0.0, %v2612
        %v2649 = vsel %vm689, 0.0, %v2628
        %v2650 = vsel %vm688, 0.0, %v2613
        %v2651 = vsel %vm689, 0.0, %v2629
        %v2652 = vsel %vm688, 0.0, %v2614
        %v2653 = vsel %vm689, 0.0, %v2630
        %v2654 = vsel %vm688, 0.0, %v2615
        %v2655 = vsel %vm689, 0.0, %v2631
        %v2656 = vsel %vm688, 0.0, %v2616
        %v2657 = vsel %vm689, 0.0, %v2632
        %v2658 = vsel %vm688, 0.0, %v2617
        %v2659 = vsel %vm689, 0.0, %v2633
        %v2660 = vsel %vm688, 0.0, %v2618
        %v2661 = vsel %vm689, 0.0, %v2634
        %v2662 = vsel %vm688, 0.0, %v2619
        %v2663 = vsel %vm689, 0.0, %v2635
        %v2664 = vsel %vm688, 0.0, %v2620
        %v2665 = vsel %vm689, 0.0, %v2636
        %v2666 = vsel %vm688, 0.0, %v2621
        %v2667 = vsel %vm689, 0.0, %v2637
        %v2668 = vsel %vm688, 0.0, %v2622
        %v2669 = vsel %vm689, 0.0, %v2638
        %v2670 = vsel %vm688, 0.0, %v2623
        %v2671 = vsel %vm689, 0.0, %v2639
        %v2672 = vpack.c.bf16 %v2545, %v2544
        %v2673 = vpack.c.bf16 %v2547, %v2546
        %v2674 = vpack.c.bf16 %v2549, %v2548
        %v2675 = vpack.c.bf16 %v2551, %v2550
        %v2676 = vpack.c.bf16 %v2553, %v2552
        %v2677 = vpack.c.bf16 %v2555, %v2554
        %v2678 = vpack.c.bf16 %v2557, %v2556
        %v2679 = vpack.c.bf16 %v2559, %v2558
        %v2680 = vpack.c.bf16 %v2561, %v2560
        %v2681 = vpack.c.bf16 %v2563, %v2562
        %v2682 = vpack.c.bf16 %v2565, %v2564
        %v2683 = vpack.c.bf16 %v2567, %v2566
        %v2684 = vpack.c.bf16 %v2569, %v2568
        %v2685 = vpack.c.bf16 %v2571, %v2570
        %v2686 = vpack.c.bf16 %v2573, %v2572
        %v2687 = vpack.c.bf16 %v2575, %v2574
        %v2688 = vpack.c.bf16 %v2305, %v2304
        %v2689 = vpack.c.bf16 %v2307, %v2306
        %v2690 = vpack.c.bf16 %v2309, %v2308
        %v2691 = vpack.c.bf16 %v2311, %v2310
        %v2692 = vpack.c.bf16 %v2313, %v2312
        %v2693 = vpack.c.bf16 %v2315, %v2314
        %v2694 = vpack.c.bf16 %v2317, %v2316
        %v2695 = vpack.c.bf16 %v2319, %v2318
        %v2696 = vpack.c.bf16 %v2321, %v2320
        %v2697 = vpack.c.bf16 %v2323, %v2322
        %v2698 = vpack.c.bf16 %v2325, %v2324
        %v2699 = vpack.c.bf16 %v2327, %v2326
        %v2700 = vpack.c.bf16 %v2329, %v2328
        %v2701 = vpack.c.bf16 %v2331, %v2330
        %v2702 = vpack.c.bf16 %v2333, %v2332
        %v2703 = vpack.c.bf16 %v2335, %v2334
        %v2704 = vpack.c.bf16 %v2641, %v2640
        %v2705 = vpack.c.bf16 %v2643, %v2642
        %v2706 = vpack.c.bf16 %v2645, %v2644
        %v2707 = vpack.c.bf16 %v2647, %v2646
        %v2708 = vpack.c.bf16 %v2649, %v2648
        %v2709 = vpack.c.bf16 %v2651, %v2650
        %v2710 = vpack.c.bf16 %v2653, %v2652
        %v2711 = vpack.c.bf16 %v2655, %v2654
        %v2712 = vpack.c.bf16 %v2657, %v2656
        %v2713 = vpack.c.bf16 %v2659, %v2658
        %v2714 = vpack.c.bf16 %v2661, %v2660
        %v2715 = vpack.c.bf16 %v2663, %v2662
        %v2716 = vpack.c.bf16 %v2665, %v2664
        %v2717 = vpack.c.bf16 %v2667, %v2666
        %v2718 = vpack.c.bf16 %v2669, %v2668
        %v2719 = vpack.c.bf16 %v2671, %v2670
        %v2768 = vunpack.c.l.b16 %v2384
        %v2769 = vunpack.c.l.b16 %v2385
        %v2770 = vunpack.c.l.b16 %v2386
        %v2771 = vunpack.c.l.b16 %v2387
        %v2772 = vunpack.c.l.b16 %v2388
        %v2773 = vunpack.c.l.b16 %v2389
        %v2774 = vunpack.c.l.b16 %v2390
        %v2775 = vunpack.c.l.b16 %v2391
        %v2776 = vunpack.c.l.b16 %v2392
        %v2777 = vunpack.c.l.b16 %v2393
        %v2778 = vunpack.c.l.b16 %v2394
        %v2779 = vunpack.c.l.b16 %v2395
        %v2780 = vunpack.c.l.b16 %v2396
        %v2781 = vunpack.c.l.b16 %v2397
        %v2782 = vunpack.c.l.b16 %v2398
        %v2783 = vunpack.c.l.b16 %v2399
        %v2784 = vunpack.c.l.b16 %v2400
        %v2785 = vunpack.c.l.b16 %v2401
        %v2786 = vunpack.c.l.b16 %v2402
        %v2787 = vunpack.c.l.b16 %v2403
        %v2788 = vunpack.c.l.b16 %v2404
        %v2789 = vunpack.c.l.b16 %v2405
        %v2790 = vunpack.c.l.b16 %v2406
        %v2791 = vunpack.c.l.b16 %v2407
        %v2792 = vunpack.c.l.b16 %v2408
        %v2793 = vunpack.c.l.b16 %v2409
        %v2794 = vunpack.c.l.b16 %v2410
        %v2795 = vunpack.c.l.b16 %v2411
        %v2796 = vunpack.c.l.b16 %v2412
        %v2797 = vunpack.c.l.b16 %v2413
        %v2798 = vunpack.c.l.b16 %v2414
        %v2799 = vunpack.c.l.b16 %v2415
        %v2800 = vunpack.c.l.b16 %v2416
        %v2801 = vunpack.c.l.b16 %v2417
        %v2802 = vunpack.c.l.b16 %v2418
        %v2803 = vunpack.c.l.b16 %v2419
        %v2804 = vunpack.c.l.b16 %v2420
        %v2805 = vunpack.c.l.b16 %v2421
        %v2806 = vunpack.c.l.b16 %v2422
        %v2807 = vunpack.c.l.b16 %v2423
        %v2808 = vunpack.c.l.b16 %v2424
        %v2809 = vunpack.c.l.b16 %v2425
        %v2810 = vunpack.c.l.b16 %v2426
        %v2811 = vunpack.c.l.b16 %v2427
        %v2812 = vunpack.c.l.b16 %v2428
        %v2813 = vunpack.c.l.b16 %v2429
        %v2814 = vunpack.c.l.b16 %v2430
        %v2815 = vunpack.c.l.b16 %v2431
        %v2816 = vpack.c.b16 %v2769, %v2768
        %v2817 = vpack.c.b16 %v2771, %v2770
        %v2818 = vpack.c.b16 %v2773, %v2772
        %v2819 = vpack.c.b16 %v2775, %v2774
        %v2820 = vpack.c.b16 %v2777, %v2776
        %v2821 = vpack.c.b16 %v2779, %v2778
        %v2822 = vpack.c.b16 %v2781, %v2780
        %v2823 = vpack.c.b16 %v2783, %v2782
        %v2824 = vpack.c.b16 %v2785, %v2784
        %v2825 = vpack.c.b16 %v2787, %v2786
        %v2826 = vpack.c.b16 %v2789, %v2788
        %v2827 = vpack.c.b16 %v2791, %v2790
        %v2828 = vpack.c.b16 %v2793, %v2792
        %v2829 = vpack.c.b16 %v2795, %v2794
        %v2830 = vpack.c.b16 %v2797, %v2796
        %v2831 = vpack.c.b16 %v2799, %v2798
        %v2832 = vpack.c.b16 %v2801, %v2800
        %v2833 = vpack.c.b16 %v2803, %v2802
        %v2834 = vpack.c.b16 %v2805, %v2804
        %v2835 = vpack.c.b16 %v2807, %v2806
        %v2836 = vpack.c.b16 %v2809, %v2808
        %v2837 = vpack.c.b16 %v2811, %v2810
        %v2838 = vpack.c.b16 %v2813, %v2812
        %v2839 = vpack.c.b16 %v2815, %v2814
        %2864 = vmatprep.subr.bf16.mxu0 0
        %2865 = vmatpush1.bf16.msra.mxu0 %v2823
        %2866 = vmatprep.subr.bf16.mxu0 0
        %2867 = vmatpush1.bf16.msra.mxu0 %v2822
        %2868 = vmatprep.subr.bf16.mxu0 0
        %2869 = vmatpush1.bf16.msra.mxu0 %v2821
        %2870 = vmatprep.subr.bf16.mxu0 0
        %2871 = vmatpush1.bf16.msra.mxu0 %v2820
        %2872 = vmatprep.subr.bf16.mxu0 0
        %2873 = vmatpush1.bf16.msra.mxu0 %v2819
        %2874 = vmatprep.subr.bf16.mxu0 0
        %2875 = vmatpush1.bf16.msra.mxu0 %v2818
        %2876 = vmatprep.subr.bf16.mxu0 0
        %2877 = vmatpush1.bf16.msra.mxu0 %v2817
        %2878 = vmatprep.subr.bf16.mxu0 0
        %2879 = vmatpush1.bf16.msra.mxu0 %v2816
        %2880 = vmatprep.subr.bf16.mxu0 0
        %2881 = vmatpush2.bf16.msra.mxu0 %v2831
        %2882 = vmatprep.subr.bf16.mxu0 0
        %2883 = vmatpush2.bf16.msra.mxu0 %v2830
        %2884 = vmatprep.subr.bf16.mxu0 0
        %2885 = vmatpush2.bf16.msra.mxu0 %v2829
        %2886 = vmatprep.subr.bf16.mxu0 0
        %2887 = vmatpush2.bf16.msra.mxu0 %v2828
        %2888 = vmatprep.subr.bf16.mxu0 0
        %2889 = vmatpush2.bf16.msra.mxu0 %v2827
        %2890 = vmatprep.subr.bf16.mxu0 0
        %2891 = vmatpush2.bf16.msra.mxu0 %v2826
        %2892 = vmatprep.subr.bf16.mxu0 0
        %2893 = vmatpush2.bf16.msra.mxu0 %v2825
        %2894 = vmatprep.subr.bf16.mxu0 0
        %2895 = vmatpush2.bf16.msra.mxu0 %v2824
        %2896 = vmatprep.mubr.bf16.mxu0 %v2688
        %2897 = vmatmul.mubr.bf16.gmra.mxu0 %v2672
        %v2898 = vpop.f32.mrf.mxu0
        %v2899 = vadd.f32 0.0, %v2898
        %v2900 = vpop.f32.mrf.mxu0
        %v2901 = vpop.f32.mrf.mxu0
        %v2902 = vadd.f32 0.0, %v2901
        %v2903 = vpop.f32.mrf.mxu0
        %2904 = vmatprep.mubr.bf16.mxu0 %v2689
        %2905 = vmatmul.mubr.bf16.gmra.mxu0 %v2673
        %v2906 = vpop.f32.mrf.mxu0
        %v2907 = vadd.f32 0.0, %v2906
        %v2908 = vpop.f32.mrf.mxu0
        %v2909 = vpop.f32.mrf.mxu0
        %v2910 = vadd.f32 0.0, %v2909
        %v2911 = vpop.f32.mrf.mxu0
        %2912 = vmatprep.mubr.bf16.mxu0 %v2690
        %2913 = vmatmul.mubr.bf16.gmra.mxu0 %v2674
        %v2914 = vpop.f32.mrf.mxu0
        %v2915 = vadd.f32 0.0, %v2914
        %v2916 = vpop.f32.mrf.mxu0
        %v2917 = vpop.f32.mrf.mxu0
        %v2918 = vadd.f32 0.0, %v2917
        %v2919 = vpop.f32.mrf.mxu0
        %2920 = vmatprep.mubr.bf16.mxu0 %v2691
        %2921 = vmatmul.mubr.bf16.gmra.mxu0 %v2675
        %v2922 = vpop.f32.mrf.mxu0
        %v2923 = vadd.f32 0.0, %v2922
        %v2924 = vpop.f32.mrf.mxu0
        %v2925 = vpop.f32.mrf.mxu0
        %v2926 = vadd.f32 0.0, %v2925
        %v2927 = vpop.f32.mrf.mxu0
        %2928 = vmatprep.mubr.bf16.mxu0 %v2692
        %2929 = vmatmul.mubr.bf16.gmra.mxu0 %v2676
        %v2930 = vpop.f32.mrf.mxu0
        %v2931 = vadd.f32 0.0, %v2930
        %v2932 = vpop.f32.mrf.mxu0
        %v2933 = vpop.f32.mrf.mxu0
        %v2934 = vadd.f32 0.0, %v2933
        %v2935 = vpop.f32.mrf.mxu0
        %2936 = vmatprep.mubr.bf16.mxu0 %v2693
        %2937 = vmatmul.mubr.bf16.gmra.mxu0 %v2677
        %v2938 = vpop.f32.mrf.mxu0
        %v2939 = vadd.f32 0.0, %v2938
        %v2940 = vpop.f32.mrf.mxu0
        %v2941 = vpop.f32.mrf.mxu0
        %v2942 = vadd.f32 0.0, %v2941
        %v2943 = vpop.f32.mrf.mxu0
        %2944 = vmatprep.mubr.bf16.mxu0 %v2694
        %2945 = vmatmul.mubr.bf16.gmra.mxu0 %v2678
        %v2946 = vpop.f32.mrf.mxu0
        %v2947 = vadd.f32 0.0, %v2946
        %v2948 = vpop.f32.mrf.mxu0
        %v2949 = vpop.f32.mrf.mxu0
        %v2950 = vadd.f32 0.0, %v2949
        %v2951 = vpop.f32.mrf.mxu0
        %2952 = vmatprep.mubr.bf16.mxu0 %v2695
        %2953 = vmatmul.mubr.bf16.gmra.mxu0 %v2679
        %v2954 = vpop.f32.mrf.mxu0
        %v2955 = vadd.f32 0.0, %v2954
        %v2956 = vpop.f32.mrf.mxu0
        %v2957 = vpop.f32.mrf.mxu0
        %v2958 = vadd.f32 0.0, %v2957
        %v2959 = vpop.f32.mrf.mxu0
        %2960 = vmatprep.mubr.bf16.mxu0 %v2696
        %2961 = vmatmul.mubr.bf16.gmra.mxu0 %v2680
        %v2962 = vpop.f32.mrf.mxu0
        %v2963 = vadd.f32 0.0, %v2962
        %v2964 = vpop.f32.mrf.mxu0
        %v2965 = vpop.f32.mrf.mxu0
        %v2966 = vadd.f32 0.0, %v2965
        %v2967 = vpop.f32.mrf.mxu0
        %2968 = vmatprep.mubr.bf16.mxu0 %v2697
        %2969 = vmatmul.mubr.bf16.gmra.mxu0 %v2681
        %v2970 = vpop.f32.mrf.mxu0
        %v2971 = vadd.f32 0.0, %v2970
        %v2972 = vpop.f32.mrf.mxu0
        %v2973 = vpop.f32.mrf.mxu0
        %v2974 = vadd.f32 0.0, %v2973
        %v2975 = vpop.f32.mrf.mxu0
        %2976 = vmatprep.mubr.bf16.mxu0 %v2698
        %2977 = vmatmul.mubr.bf16.gmra.mxu0 %v2682
        %v2978 = vpop.f32.mrf.mxu0
        %v2979 = vadd.f32 0.0, %v2978
        %v2980 = vpop.f32.mrf.mxu0
        %v2981 = vpop.f32.mrf.mxu0
        %v2982 = vadd.f32 0.0, %v2981
        %v2983 = vpop.f32.mrf.mxu0
        %2984 = vmatprep.mubr.bf16.mxu0 %v2699
        %2985 = vmatmul.mubr.bf16.gmra.mxu0 %v2683
        %v2986 = vpop.f32.mrf.mxu0
        %v2987 = vadd.f32 0.0, %v2986
        %v2988 = vpop.f32.mrf.mxu0
        %v2989 = vpop.f32.mrf.mxu0
        %v2990 = vadd.f32 0.0, %v2989
        %v2991 = vpop.f32.mrf.mxu0
        %2992 = vmatprep.mubr.bf16.mxu0 %v2700
        %2993 = vmatmul.mubr.bf16.gmra.mxu0 %v2684
        %v2994 = vpop.f32.mrf.mxu0
        %v2995 = vadd.f32 0.0, %v2994
        %v2996 = vpop.f32.mrf.mxu0
        %v2997 = vpop.f32.mrf.mxu0
        %v2998 = vadd.f32 0.0, %v2997
        %v2999 = vpop.f32.mrf.mxu0
        %3000 = vmatprep.mubr.bf16.mxu0 %v2701
        %3001 = vmatmul.mubr.bf16.gmra.mxu0 %v2685
        %v3002 = vpop.f32.mrf.mxu0
        %v3003 = vadd.f32 0.0, %v3002
        %v3004 = vpop.f32.mrf.mxu0
        %v3005 = vpop.f32.mrf.mxu0
        %v3006 = vadd.f32 0.0, %v3005
        %v3007 = vpop.f32.mrf.mxu0
        %3008 = vmatprep.mubr.bf16.mxu0 %v2702
        %3009 = vmatmul.mubr.bf16.gmra.mxu0 %v2686
        %v3010 = vpop.f32.mrf.mxu0
        %v3011 = vadd.f32 0.0, %v3010
        %v3012 = vpop.f32.mrf.mxu0
        %v3013 = vpop.f32.mrf.mxu0
        %v3014 = vadd.f32 0.0, %v3013
        %v3015 = vpop.f32.mrf.mxu0
        %3016 = vmatprep.mubr.bf16.mxu0 %v2703
        %3017 = vmatmul.mubr.bf16.gmra.mxu0 %v2687
        %v3018 = vpop.f32.mrf.mxu0
        %v3019 = vadd.f32 0.0, %v3018
        %v3020 = vpop.f32.mrf.mxu0
        %v3021 = vpop.f32.mrf.mxu0
        %v3022 = vadd.f32 0.0, %v3021
        %v3023 = vpop.f32.mrf.mxu0
        %3024 = vdwg.mxu0
        %3025 = vmatprep.subr.bf16.mxu0 0
        %3026 = vmatpush1.bf16.msra.mxu0 %v2839
        %3027 = vmatprep.subr.bf16.mxu0 0
        %3028 = vmatpush1.bf16.msra.mxu0 %v2838
        %3029 = vmatprep.subr.bf16.mxu0 0
        %3030 = vmatpush1.bf16.msra.mxu0 %v2837
        %3031 = vmatprep.subr.bf16.mxu0 0
        %3032 = vmatpush1.bf16.msra.mxu0 %v2836
        %3033 = vmatprep.subr.bf16.mxu0 0
        %3034 = vmatpush1.bf16.msra.mxu0 %v2835
        %3035 = vmatprep.subr.bf16.mxu0 0
        %3036 = vmatpush1.bf16.msra.mxu0 %v2834
        %3037 = vmatprep.subr.bf16.mxu0 0
        %3038 = vmatpush1.bf16.msra.mxu0 %v2833
        %3039 = vmatprep.subr.bf16.mxu0 0
        %3040 = vmatpush1.bf16.msra.mxu0 %v2832
        %3041 = vmatprep.subr.bf16.mxu0 0
        %3042 = vmatpush2.bf16.msra.mxu0 0
        %3043 = vmatprep.subr.bf16.mxu0 0
        %3044 = vmatpush2.bf16.msra.mxu0 0
        %3045 = vmatprep.subr.bf16.mxu0 0
        %3046 = vmatpush2.bf16.msra.mxu0 0
        %3047 = vmatprep.subr.bf16.mxu0 0
        %3048 = vmatpush2.bf16.msra.mxu0 0
        %3049 = vmatprep.subr.bf16.mxu0 0
        %3050 = vmatpush2.bf16.msra.mxu0 0
        %3051 = vmatprep.subr.bf16.mxu0 0
        %3052 = vmatpush2.bf16.msra.mxu0 0
        %3053 = vmatprep.subr.bf16.mxu0 0
        %3054 = vmatpush2.bf16.msra.mxu0 0
        %3055 = vmatprep.subr.bf16.mxu0 0
        %3056 = vmatpush2.bf16.msra.mxu0 0
        %3057 = vmatprep.mubr.bf16.mxu0 0
        %3058 = vmatmul.mubr.bf16.gmra.mxu0 %v2704
        %v3059 = vpop.f32.mrf.mxu0
        %v3060 = vadd.f32 %v2899, %v3059
        %v3061 = vpop.f32.mrf.mxu0
        %v3062 = vpop.f32.mrf.mxu0
        %v3063 = vadd.f32 %v2902, %v3062
        %v3064 = vpop.f32.mrf.mxu0
        %3065 = vmatprep.mubr.bf16.mxu0 0
        %3066 = vmatmul.mubr.bf16.gmra.mxu0 %v2705
        %v3067 = vpop.f32.mrf.mxu0
        %v3068 = vadd.f32 %v2907, %v3067
        %v3069 = vpop.f32.mrf.mxu0
        %v3070 = vpop.f32.mrf.mxu0
        %v3071 = vadd.f32 %v2910, %v3070
        %v3072 = vpop.f32.mrf.mxu0
        %3073 = vmatprep.mubr.bf16.mxu0 0
        %3074 = vmatmul.mubr.bf16.gmra.mxu0 %v2706
        %v3075 = vpop.f32.mrf.mxu0
        %v3076 = vadd.f32 %v2915, %v3075
        %v3077 = vpop.f32.mrf.mxu0
        %v3078 = vpop.f32.mrf.mxu0
        %v3079 = vadd.f32 %v2918, %v3078
        %v3080 = vpop.f32.mrf.mxu0
        %3081 = vmatprep.mubr.bf16.mxu0 0
        %3082 = vmatmul.mubr.bf16.gmra.mxu0 %v2707
        %v3083 = vpop.f32.mrf.mxu0
        %v3084 = vadd.f32 %v2923, %v3083
        %v3085 = vpop.f32.mrf.mxu0
        %v3086 = vpop.f32.mrf.mxu0
        %v3087 = vadd.f32 %v2926, %v3086
        %v3088 = vpop.f32.mrf.mxu0
        %3089 = vmatprep.mubr.bf16.mxu0 0
        %3090 = vmatmul.mubr.bf16.gmra.mxu0 %v2708
        %v3091 = vpop.f32.mrf.mxu0
        %v3092 = vadd.f32 %v2931, %v3091
        %v3093 = vpop.f32.mrf.mxu0
        %v3094 = vpop.f32.mrf.mxu0
        %v3095 = vadd.f32 %v2934, %v3094
        %v3096 = vpop.f32.mrf.mxu0
        %3097 = vmatprep.mubr.bf16.mxu0 0
        %3098 = vmatmul.mubr.bf16.gmra.mxu0 %v2709
        %v3099 = vpop.f32.mrf.mxu0
        %v3100 = vadd.f32 %v2939, %v3099
        %v3101 = vpop.f32.mrf.mxu0
        %v3102 = vpop.f32.mrf.mxu0
        %v3103 = vadd.f32 %v2942, %v3102
        %v3104 = vpop.f32.mrf.mxu0
        %3105 = vmatprep.mubr.bf16.mxu0 0
        %3106 = vmatmul.mubr.bf16.gmra.mxu0 %v2710
        %v3107 = vpop.f32.mrf.mxu0
        %v3108 = vadd.f32 %v2947, %v3107
        %v3109 = vpop.f32.mrf.mxu0
        %v3110 = vpop.f32.mrf.mxu0
        %v3111 = vadd.f32 %v2950, %v3110
        %v3112 = vpop.f32.mrf.mxu0
        %3113 = vmatprep.mubr.bf16.mxu0 0
        %3114 = vmatmul.mubr.bf16.gmra.mxu0 %v2711
        %v3115 = vpop.f32.mrf.mxu0
        %v3116 = vadd.f32 %v2955, %v3115
        %v3117 = vpop.f32.mrf.mxu0
        %v3118 = vpop.f32.mrf.mxu0
        %v3119 = vadd.f32 %v2958, %v3118
        %v3120 = vpop.f32.mrf.mxu0
        %3121 = vmatprep.mubr.bf16.mxu0 0
        %3122 = vmatmul.mubr.bf16.gmra.mxu0 %v2712
        %v3123 = vpop.f32.mrf.mxu0
        %v3124 = vadd.f32 %v2963, %v3123
        %v3125 = vpop.f32.mrf.mxu0
        %v3126 = vpop.f32.mrf.mxu0
        %v3127 = vadd.f32 %v2966, %v3126
        %v3128 = vpop.f32.mrf.mxu0
        %3129 = vmatprep.mubr.bf16.mxu0 0
        %3130 = vmatmul.mubr.bf16.gmra.mxu0 %v2713
        %v3131 = vpop.f32.mrf.mxu0
        %v3132 = vadd.f32 %v2971, %v3131
        %v3133 = vpop.f32.mrf.mxu0
        %v3134 = vpop.f32.mrf.mxu0
        %v3135 = vadd.f32 %v2974, %v3134
        %v3136 = vpop.f32.mrf.mxu0
        %3137 = vmatprep.mubr.bf16.mxu0 0
        %3138 = vmatmul.mubr.bf16.gmra.mxu0 %v2714
        %v3139 = vpop.f32.mrf.mxu0
        %v3140 = vadd.f32 %v2979, %v3139
        %v3141 = vpop.f32.mrf.mxu0
        %v3142 = vpop.f32.mrf.mxu0
        %v3143 = vadd.f32 %v2982, %v3142
        %v3144 = vpop.f32.mrf.mxu0
        %3145 = vmatprep.mubr.bf16.mxu0 0
        %3146 = vmatmul.mubr.bf16.gmra.mxu0 %v2715
        %v3147 = vpop.f32.mrf.mxu0
        %v3148 = vadd.f32 %v2987, %v3147
        %v3149 = vpop.f32.mrf.mxu0
        %v3150 = vpop.f32.mrf.mxu0
        %v3151 = vadd.f32 %v2990, %v3150
        %v3152 = vpop.f32.mrf.mxu0
        %3153 = vmatprep.mubr.bf16.mxu0 0
        %3154 = vmatmul.mubr.bf16.gmra.mxu0 %v2716
        %v3155 = vpop.f32.mrf.mxu0
        %v3156 = vadd.f32 %v2995, %v3155
        %v3157 = vpop.f32.mrf.mxu0
        %v3158 = vpop.f32.mrf.mxu0
        %v3159 = vadd.f32 %v2998, %v3158
        %v3160 = vpop.f32.mrf.mxu0
        %3161 = vmatprep.mubr.bf16.mxu0 0
        %3162 = vmatmul.mubr.bf16.gmra.mxu0 %v2717
        %v3163 = vpop.f32.mrf.mxu0
        %v3164 = vadd.f32 %v3003, %v3163
        %v3165 = vpop.f32.mrf.mxu0
        %v3166 = vpop.f32.mrf.mxu0
        %v3167 = vadd.f32 %v3006, %v3166
        %v3168 = vpop.f32.mrf.mxu0
        %3169 = vmatprep.mubr.bf16.mxu0 0
        %3170 = vmatmul.mubr.bf16.gmra.mxu0 %v2718
        %v3171 = vpop.f32.mrf.mxu0
        %v3172 = vadd.f32 %v3011, %v3171
        %v3173 = vpop.f32.mrf.mxu0
        %v3174 = vpop.f32.mrf.mxu0
        %v3175 = vadd.f32 %v3014, %v3174
        %v3176 = vpop.f32.mrf.mxu0
        %3177 = vmatprep.mubr.bf16.mxu0 0
        %3178 = vmatmul.mubr.bf16.gmra.mxu0 %v2719
        %v3179 = vpop.f32.mrf.mxu0
        %v3180 = vadd.f32 %v3019, %v3179
        %v3181 = vpop.f32.mrf.mxu0
        %v3182 = vpop.f32.mrf.mxu0
        %v3183 = vadd.f32 %v3022, %v3182
        %v3184 = vpop.f32.mrf.mxu0
        %3185 = vdwg.mxu0
        %v3234 = vunpack.c.l.b16 %v2336
        %v3235 = vunpack.c.l.b16 %v2337
        %v3236 = vunpack.c.l.b16 %v2338
        %v3237 = vunpack.c.l.b16 %v2339
        %v3238 = vunpack.c.l.b16 %v2340
        %v3239 = vunpack.c.l.b16 %v2341
        %v3240 = vunpack.c.l.b16 %v2342
        %v3241 = vunpack.c.l.b16 %v2343
        %v3242 = vunpack.c.l.b16 %v2344
        %v3243 = vunpack.c.l.b16 %v2345
        %v3244 = vunpack.c.l.b16 %v2346
        %v3245 = vunpack.c.l.b16 %v2347
        %v3246 = vunpack.c.l.b16 %v2348
        %v3247 = vunpack.c.l.b16 %v2349
        %v3248 = vunpack.c.l.b16 %v2350
        %v3249 = vunpack.c.l.b16 %v2351
        %v3250 = vunpack.c.l.b16 %v2352
        %v3251 = vunpack.c.l.b16 %v2353
        %v3252 = vunpack.c.l.b16 %v2354
        %v3253 = vunpack.c.l.b16 %v2355
        %v3254 = vunpack.c.l.b16 %v2356
        %v3255 = vunpack.c.l.b16 %v2357
        %v3256 = vunpack.c.l.b16 %v2358
        %v3257 = vunpack.c.l.b16 %v2359
        %v3258 = vunpack.c.l.b16 %v2360
        %v3259 = vunpack.c.l.b16 %v2361
        %v3260 = vunpack.c.l.b16 %v2362
        %v3261 = vunpack.c.l.b16 %v2363
        %v3262 = vunpack.c.l.b16 %v2364
        %v3263 = vunpack.c.l.b16 %v2365
        %v3264 = vunpack.c.l.b16 %v2366
        %v3265 = vunpack.c.l.b16 %v2367
        %v3266 = vunpack.c.l.b16 %v2368
        %v3267 = vunpack.c.l.b16 %v2369
        %v3268 = vunpack.c.l.b16 %v2370
        %v3269 = vunpack.c.l.b16 %v2371
        %v3270 = vunpack.c.l.b16 %v2372
        %v3271 = vunpack.c.l.b16 %v2373
        %v3272 = vunpack.c.l.b16 %v2374
        %v3273 = vunpack.c.l.b16 %v2375
        %v3274 = vunpack.c.l.b16 %v2376
        %v3275 = vunpack.c.l.b16 %v2377
        %v3276 = vunpack.c.l.b16 %v2378
        %v3277 = vunpack.c.l.b16 %v2379
        %v3278 = vunpack.c.l.b16 %v2380
        %v3279 = vunpack.c.l.b16 %v2381
        %v3280 = vunpack.c.l.b16 %v2382
        %v3281 = vunpack.c.l.b16 %v2383
        %v3282 = vpack.c.b16 %v3235, %v3234
        %v3283 = vpack.c.b16 %v3237, %v3236
        %v3284 = vpack.c.b16 %v3239, %v3238
        %v3285 = vpack.c.b16 %v3241, %v3240
        %v3286 = vpack.c.b16 %v3243, %v3242
        %v3287 = vpack.c.b16 %v3245, %v3244
        %v3288 = vpack.c.b16 %v3247, %v3246
        %v3289 = vpack.c.b16 %v3249, %v3248
        %v3290 = vpack.c.b16 %v3251, %v3250
        %v3291 = vpack.c.b16 %v3253, %v3252
        %v3292 = vpack.c.b16 %v3255, %v3254
        %v3293 = vpack.c.b16 %v3257, %v3256
        %v3294 = vpack.c.b16 %v3259, %v3258
        %v3295 = vpack.c.b16 %v3261, %v3260
        %v3296 = vpack.c.b16 %v3263, %v3262
        %v3297 = vpack.c.b16 %v3265, %v3264
        %v3298 = vpack.c.b16 %v3267, %v3266
        %v3299 = vpack.c.b16 %v3269, %v3268
        %v3300 = vpack.c.b16 %v3271, %v3270
        %v3301 = vpack.c.b16 %v3273, %v3272
        %v3302 = vpack.c.b16 %v3275, %v3274
        %v3303 = vpack.c.b16 %v3277, %v3276
        %v3304 = vpack.c.b16 %v3279, %v3278
        %v3305 = vpack.c.b16 %v3281, %v3280
        %3330 = vmatprep.subr.bf16.mxu0 0
        %3331 = vmatpush1.bf16.msra.mxu0 %v3289
        %3332 = vmatprep.subr.bf16.mxu0 0
        %3333 = vmatpush1.bf16.msra.mxu0 %v3288
        %3334 = vmatprep.subr.bf16.mxu0 0
        %3335 = vmatpush1.bf16.msra.mxu0 %v3287
        %3336 = vmatprep.subr.bf16.mxu0 0
        %3337 = vmatpush1.bf16.msra.mxu0 %v3286
        %3338 = vmatprep.subr.bf16.mxu0 0
        %3339 = vmatpush1.bf16.msra.mxu0 %v3285
        %3340 = vmatprep.subr.bf16.mxu0 0
        %3341 = vmatpush1.bf16.msra.mxu0 %v3284
        %3342 = vmatprep.subr.bf16.mxu0 0
        %3343 = vmatpush1.bf16.msra.mxu0 %v3283
        %3344 = vmatprep.subr.bf16.mxu0 0
        %3345 = vmatpush1.bf16.msra.mxu0 %v3282
        %3346 = vmatprep.subr.bf16.mxu0 0
        %3347 = vmatpush2.bf16.msra.mxu0 %v3297
        %3348 = vmatprep.subr.bf16.mxu0 0
        %3349 = vmatpush2.bf16.msra.mxu0 %v3296
        %3350 = vmatprep.subr.bf16.mxu0 0
        %3351 = vmatpush2.bf16.msra.mxu0 %v3295
        %3352 = vmatprep.subr.bf16.mxu0 0
        %3353 = vmatpush2.bf16.msra.mxu0 %v3294
        %3354 = vmatprep.subr.bf16.mxu0 0
        %3355 = vmatpush2.bf16.msra.mxu0 %v3293
        %3356 = vmatprep.subr.bf16.mxu0 0
        %3357 = vmatpush2.bf16.msra.mxu0 %v3292
        %3358 = vmatprep.subr.bf16.mxu0 0
        %3359 = vmatpush2.bf16.msra.mxu0 %v3291
        %3360 = vmatprep.subr.bf16.mxu0 0
        %3361 = vmatpush2.bf16.msra.mxu0 %v3290
        %3362 = vmatprep.mubr.bf16.mxu0 0
        %3363 = vmatmul.mubr.bf16.gmra.mxu0 0
        %v3364 = vpop.f32.mrf.mxu0
        %v3365 = vadd.f32 %v3060, %v3364
        %v3366 = vpop.f32.mrf.mxu0
        %v3367 = vpop.f32.mrf.mxu0
        %v3368 = vadd.f32 %v3063, %v3367
        %v3369 = vpop.f32.mrf.mxu0
        %3370 = vmatprep.mubr.bf16.mxu0 %v2688
        %3371 = vmatmul.mubr.bf16.gmra.mxu0 %v2672
        %v3372 = vpop.f32.mrf.mxu0
        %v3373 = vadd.f32 %v3068, %v3372
        %v3374 = vpop.f32.mrf.mxu0
        %v3375 = vpop.f32.mrf.mxu0
        %v3376 = vadd.f32 %v3071, %v3375
        %v3377 = vpop.f32.mrf.mxu0
        %3378 = vmatprep.mubr.bf16.mxu0 %v2689
        %3379 = vmatmul.mubr.bf16.gmra.mxu0 %v2673
        %v3380 = vpop.f32.mrf.mxu0
        %v3381 = vadd.f32 %v3076, %v3380
        %v3382 = vpop.f32.mrf.mxu0
        %v3383 = vpop.f32.mrf.mxu0
        %v3384 = vadd.f32 %v3079, %v3383
        %v3385 = vpop.f32.mrf.mxu0
        %3386 = vmatprep.mubr.bf16.mxu0 %v2690
        %3387 = vmatmul.mubr.bf16.gmra.mxu0 %v2674
        %v3388 = vpop.f32.mrf.mxu0
        %v3389 = vadd.f32 %v3084, %v3388
        %v3390 = vpop.f32.mrf.mxu0
        %v3391 = vpop.f32.mrf.mxu0
        %v3392 = vadd.f32 %v3087, %v3391
        %v3393 = vpop.f32.mrf.mxu0
        %3394 = vmatprep.mubr.bf16.mxu0 %v2691
        %3395 = vmatmul.mubr.bf16.gmra.mxu0 %v2675
        %v3396 = vpop.f32.mrf.mxu0
        %v3397 = vadd.f32 %v3092, %v3396
        %v3398 = vpop.f32.mrf.mxu0
        %v3399 = vpop.f32.mrf.mxu0
        %v3400 = vadd.f32 %v3095, %v3399
        %v3401 = vpop.f32.mrf.mxu0
        %3402 = vmatprep.mubr.bf16.mxu0 %v2692
        %3403 = vmatmul.mubr.bf16.gmra.mxu0 %v2676
        %v3404 = vpop.f32.mrf.mxu0
        %v3405 = vadd.f32 %v3100, %v3404
        %v3406 = vpop.f32.mrf.mxu0
        %v3407 = vpop.f32.mrf.mxu0
        %v3408 = vadd.f32 %v3103, %v3407
        %v3409 = vpop.f32.mrf.mxu0
        %3410 = vmatprep.mubr.bf16.mxu0 %v2693
        %3411 = vmatmul.mubr.bf16.gmra.mxu0 %v2677
        %v3412 = vpop.f32.mrf.mxu0
        %v3413 = vadd.f32 %v3108, %v3412
        %v3414 = vpop.f32.mrf.mxu0
        %v3415 = vpop.f32.mrf.mxu0
        %v3416 = vadd.f32 %v3111, %v3415
        %v3417 = vpop.f32.mrf.mxu0
        %3418 = vmatprep.mubr.bf16.mxu0 %v2694
        %3419 = vmatmul.mubr.bf16.gmra.mxu0 %v2678
        %v3420 = vpop.f32.mrf.mxu0
        %v3421 = vadd.f32 %v3116, %v3420
        %v3422 = vpop.f32.mrf.mxu0
        %v3423 = vpop.f32.mrf.mxu0
        %v3424 = vadd.f32 %v3119, %v3423
        %v3425 = vpop.f32.mrf.mxu0
        %3426 = vmatprep.mubr.bf16.mxu0 %v2695
        %3427 = vmatmul.mubr.bf16.gmra.mxu0 %v2679
        %v3428 = vpop.f32.mrf.mxu0
        %v3429 = vadd.f32 %v3124, %v3428
        %v3430 = vpop.f32.mrf.mxu0
        %v3431 = vpop.f32.mrf.mxu0
        %v3432 = vadd.f32 %v3127, %v3431
        %v3433 = vpop.f32.mrf.mxu0
        %3434 = vmatprep.mubr.bf16.mxu0 %v2696
        %3435 = vmatmul.mubr.bf16.gmra.mxu0 %v2680
        %v3436 = vpop.f32.mrf.mxu0
        %v3437 = vadd.f32 %v3132, %v3436
        %v3438 = vpop.f32.mrf.mxu0
        %v3439 = vpop.f32.mrf.mxu0
        %v3440 = vadd.f32 %v3135, %v3439
        %v3441 = vpop.f32.mrf.mxu0
        %3442 = vmatprep.mubr.bf16.mxu0 %v2697
        %3443 = vmatmul.mubr.bf16.gmra.mxu0 %v2681
        %v3444 = vpop.f32.mrf.mxu0
        %v3445 = vadd.f32 %v3140, %v3444
        %v3446 = vpop.f32.mrf.mxu0
        %v3447 = vpop.f32.mrf.mxu0
        %v3448 = vadd.f32 %v3143, %v3447
        %v3449 = vpop.f32.mrf.mxu0
        %3450 = vmatprep.mubr.bf16.mxu0 %v2698
        %3451 = vmatmul.mubr.bf16.gmra.mxu0 %v2682
        %v3452 = vpop.f32.mrf.mxu0
        %v3453 = vadd.f32 %v3148, %v3452
        %v3454 = vpop.f32.mrf.mxu0
        %v3455 = vpop.f32.mrf.mxu0
        %v3456 = vadd.f32 %v3151, %v3455
        %v3457 = vpop.f32.mrf.mxu0
        %3458 = vmatprep.mubr.bf16.mxu0 %v2699
        %3459 = vmatmul.mubr.bf16.gmra.mxu0 %v2683
        %v3460 = vpop.f32.mrf.mxu0
        %v3461 = vadd.f32 %v3156, %v3460
        %v3462 = vpop.f32.mrf.mxu0
        %v3463 = vpop.f32.mrf.mxu0
        %v3464 = vadd.f32 %v3159, %v3463
        %v3465 = vpop.f32.mrf.mxu0
        %3466 = vmatprep.mubr.bf16.mxu0 %v2700
        %3467 = vmatmul.mubr.bf16.gmra.mxu0 %v2684
        %v3468 = vpop.f32.mrf.mxu0
        %v3469 = vadd.f32 %v3164, %v3468
        %v3470 = vpop.f32.mrf.mxu0
        %v3471 = vpop.f32.mrf.mxu0
        %v3472 = vadd.f32 %v3167, %v3471
        %v3473 = vpop.f32.mrf.mxu0
        %3474 = vmatprep.mubr.bf16.mxu0 %v2701
        %3475 = vmatmul.mubr.bf16.gmra.mxu0 %v2685
        %v3476 = vpop.f32.mrf.mxu0
        %v3477 = vadd.f32 %v3172, %v3476
        %v3478 = vpop.f32.mrf.mxu0
        %v3479 = vpop.f32.mrf.mxu0
        %v3480 = vadd.f32 %v3175, %v3479
        %v3481 = vpop.f32.mrf.mxu0
        %3482 = vmatprep.mubr.bf16.mxu0 %v2702
        %3483 = vmatmul.mubr.bf16.gmra.mxu0 %v2686
        %v3484 = vpop.f32.mrf.mxu0
        %v3485 = vadd.f32 %v3180, %v3484
        %v3486 = vpop.f32.mrf.mxu0
        %v3487 = vpop.f32.mrf.mxu0
        %v3488 = vadd.f32 %v3183, %v3487
        %v3489 = vpop.f32.mrf.mxu0
        %3490 = vdwg.mxu0
        %3491 = vmatprep.subr.bf16.mxu0 0
        %3492 = vmatpush1.bf16.msra.mxu0 %v3305
        %3493 = vmatprep.subr.bf16.mxu0 0
        %3494 = vmatpush1.bf16.msra.mxu0 %v3304
        %3495 = vmatprep.subr.bf16.mxu0 0
        %3496 = vmatpush1.bf16.msra.mxu0 %v3303
        %3497 = vmatprep.subr.bf16.mxu0 0
        %3498 = vmatpush1.bf16.msra.mxu0 %v3302
        %3499 = vmatprep.subr.bf16.mxu0 0
        %3500 = vmatpush1.bf16.msra.mxu0 %v3301
        %3501 = vmatprep.subr.bf16.mxu0 0
        %3502 = vmatpush1.bf16.msra.mxu0 %v3300
        %3503 = vmatprep.subr.bf16.mxu0 0
        %3504 = vmatpush1.bf16.msra.mxu0 %v3299
        %3505 = vmatprep.subr.bf16.mxu0 0
        %3506 = vmatpush1.bf16.msra.mxu0 %v3298
        %3507 = vmatprep.subr.bf16.mxu0 0
        %3508 = vmatpush2.bf16.msra.mxu0 0
        %3509 = vmatprep.subr.bf16.mxu0 0
        %3510 = vmatpush2.bf16.msra.mxu0 0
        %3511 = vmatprep.subr.bf16.mxu0 0
        %3512 = vmatpush2.bf16.msra.mxu0 0
        %3513 = vmatprep.subr.bf16.mxu0 0
        %3514 = vmatpush2.bf16.msra.mxu0 0
        %3515 = vmatprep.subr.bf16.mxu0 0
        %3516 = vmatpush2.bf16.msra.mxu0 0
        %3517 = vmatprep.subr.bf16.mxu0 0
        %3518 = vmatpush2.bf16.msra.mxu0 0
        %3519 = vmatprep.subr.bf16.mxu0 0
        %3520 = vmatpush2.bf16.msra.mxu0 0
        %3521 = vmatprep.subr.bf16.mxu0 0
        %3522 = vmatpush2.bf16.msra.mxu0 0
        %3523 = vmatprep.mubr.bf16.mxu0 0
        %3524 = vmatmul.mubr.bf16.gmra.mxu0 0
        %v3525 = vpop.f32.mrf.mxu0
        %v3526 = vadd.f32 %v3365, %v3525
        %v3527 = vpop.f32.mrf.mxu0
        %v3528 = vpop.f32.mrf.mxu0
        %v3529 = vadd.f32 %v3368, %v3528
        %v3530 = vpop.f32.mrf.mxu0
        %3531 = vmatprep.mubr.bf16.mxu0 0
        %3532 = vmatmul.mubr.bf16.gmra.mxu0 %v2704
        %v3533 = vpop.f32.mrf.mxu0
        %v3534 = vadd.f32 %v3373, %v3533
        %v3535 = vpop.f32.mrf.mxu0
        %v3536 = vpop.f32.mrf.mxu0
        %v3537 = vadd.f32 %v3376, %v3536
        %v3538 = vpop.f32.mrf.mxu0
        %3539 = vmatprep.mubr.bf16.mxu0 0
        %3540 = vmatmul.mubr.bf16.gmra.mxu0 %v2705
        %v3541 = vpop.f32.mrf.mxu0
        %v3542 = vadd.f32 %v3381, %v3541
        %v3543 = vpop.f32.mrf.mxu0
        %v3544 = vpop.f32.mrf.mxu0
        %v3545 = vadd.f32 %v3384, %v3544
        %v3546 = vpop.f32.mrf.mxu0
        %3547 = vmatprep.mubr.bf16.mxu0 0
        %3548 = vmatmul.mubr.bf16.gmra.mxu0 %v2706
        %v3549 = vpop.f32.mrf.mxu0
        %v3550 = vadd.f32 %v3389, %v3549
        %v3551 = vpop.f32.mrf.mxu0
        %v3552 = vpop.f32.mrf.mxu0
        %v3553 = vadd.f32 %v3392, %v3552
        %v3554 = vpop.f32.mrf.mxu0
        %3555 = vmatprep.mubr.bf16.mxu0 0
        %3556 = vmatmul.mubr.bf16.gmra.mxu0 %v2707
        %v3557 = vpop.f32.mrf.mxu0
        %v3558 = vadd.f32 %v3397, %v3557
        %v3559 = vpop.f32.mrf.mxu0
        %v3560 = vpop.f32.mrf.mxu0
        %v3561 = vadd.f32 %v3400, %v3560
        %v3562 = vpop.f32.mrf.mxu0
        %3563 = vmatprep.mubr.bf16.mxu0 0
        %3564 = vmatmul.mubr.bf16.gmra.mxu0 %v2708
        %v3565 = vpop.f32.mrf.mxu0
        %v3566 = vadd.f32 %v3405, %v3565
        %v3567 = vpop.f32.mrf.mxu0
        %v3568 = vpop.f32.mrf.mxu0
        %v3569 = vadd.f32 %v3408, %v3568
        %v3570 = vpop.f32.mrf.mxu0
        %3571 = vmatprep.mubr.bf16.mxu0 0
        %3572 = vmatmul.mubr.bf16.gmra.mxu0 %v2709
        %v3573 = vpop.f32.mrf.mxu0
        %v3574 = vadd.f32 %v3413, %v3573
        %v3575 = vpop.f32.mrf.mxu0
        %v3576 = vpop.f32.mrf.mxu0
        %v3577 = vadd.f32 %v3416, %v3576
        %v3578 = vpop.f32.mrf.mxu0
        %3579 = vmatprep.mubr.bf16.mxu0 0
        %3580 = vmatmul.mubr.bf16.gmra.mxu0 %v2710
        %v3581 = vpop.f32.mrf.mxu0
        %v3582 = vadd.f32 %v3421, %v3581
        %v3583 = vpop.f32.mrf.mxu0
        %v3584 = vpop.f32.mrf.mxu0
        %v3585 = vadd.f32 %v3424, %v3584
        %v3586 = vpop.f32.mrf.mxu0
        %3587 = vmatprep.mubr.bf16.mxu0 0
        %3588 = vmatmul.mubr.bf16.gmra.mxu0 %v2711
        %v3589 = vpop.f32.mrf.mxu0
        %v3590 = vadd.f32 %v3429, %v3589
        %v3591 = vpop.f32.mrf.mxu0
        %v3592 = vpop.f32.mrf.mxu0
        %v3593 = vadd.f32 %v3432, %v3592
        %v3594 = vpop.f32.mrf.mxu0
        %3595 = vmatprep.mubr.bf16.mxu0 0
        %3596 = vmatmul.mubr.bf16.gmra.mxu0 %v2712
        %v3597 = vpop.f32.mrf.mxu0
        %v3598 = vadd.f32 %v3437, %v3597
        %v3599 = vpop.f32.mrf.mxu0
        %v3600 = vpop.f32.mrf.mxu0
        %v3601 = vadd.f32 %v3440, %v3600
        %v3602 = vpop.f32.mrf.mxu0
        %3603 = vmatprep.mubr.bf16.mxu0 0
        %3604 = vmatmul.mubr.bf16.gmra.mxu0 %v2713
        %v3605 = vpop.f32.mrf.mxu0
        %v3606 = vadd.f32 %v3445, %v3605
        %v3607 = vpop.f32.mrf.mxu0
        %v3608 = vpop.f32.mrf.mxu0
        %v3609 = vadd.f32 %v3448, %v3608
        %v3610 = vpop.f32.mrf.mxu0
        %3611 = vmatprep.mubr.bf16.mxu0 0
        %3612 = vmatmul.mubr.bf16.gmra.mxu0 %v2714
        %v3613 = vpop.f32.mrf.mxu0
        %v3614 = vadd.f32 %v3453, %v3613
        %v3615 = vpop.f32.mrf.mxu0
        %v3616 = vpop.f32.mrf.mxu0
        %v3617 = vadd.f32 %v3456, %v3616
        %v3618 = vpop.f32.mrf.mxu0
        %3619 = vmatprep.mubr.bf16.mxu0 0
        %3620 = vmatmul.mubr.bf16.gmra.mxu0 %v2715
        %v3621 = vpop.f32.mrf.mxu0
        %v3622 = vadd.f32 %v3461, %v3621
        %v3623 = vpop.f32.mrf.mxu0
        %v3624 = vpop.f32.mrf.mxu0
        %v3625 = vadd.f32 %v3464, %v3624
        %v3626 = vpop.f32.mrf.mxu0
        %3627 = vmatprep.mubr.bf16.mxu0 0
        %3628 = vmatmul.mubr.bf16.gmra.mxu0 %v2716
        %v3629 = vpop.f32.mrf.mxu0
        %v3630 = vadd.f32 %v3469, %v3629
        %v3631 = vpop.f32.mrf.mxu0
        %v3632 = vpop.f32.mrf.mxu0
        %v3633 = vadd.f32 %v3472, %v3632
        %v3634 = vpop.f32.mrf.mxu0
        %3635 = vmatprep.mubr.bf16.mxu0 0
        %3636 = vmatmul.mubr.bf16.gmra.mxu0 %v2717
        %v3637 = vpop.f32.mrf.mxu0
        %v3638 = vadd.f32 %v3477, %v3637
        %v3639 = vpop.f32.mrf.mxu0
        %v3640 = vpop.f32.mrf.mxu0
        %v3641 = vadd.f32 %v3480, %v3640
        %v3642 = vpop.f32.mrf.mxu0
        %3643 = vmatprep.mubr.bf16.mxu0 0
        %3644 = vmatmul.mubr.bf16.gmra.mxu0 %v2718
        %v3645 = vpop.f32.mrf.mxu0
        %v3646 = vadd.f32 %v3485, %v3645
        %v3647 = vpop.f32.mrf.mxu0
        %v3648 = vpop.f32.mrf.mxu0
        %v3649 = vadd.f32 %v3488, %v3648
        %v3650 = vpop.f32.mrf.mxu0
        %3651 = vdwg.mxu0
        %v3700 = vunpack.c.l.b16 %v2432
        %v3701 = vunpack.c.l.b16 %v2433
        %v3702 = vunpack.c.l.b16 %v2434
        %v3703 = vunpack.c.l.b16 %v2435
        %v3704 = vunpack.c.l.b16 %v2436
        %v3705 = vunpack.c.l.b16 %v2437
        %v3706 = vunpack.c.l.b16 %v2438
        %v3707 = vunpack.c.l.b16 %v2439
        %v3708 = vunpack.c.l.b16 %v2440
        %v3709 = vunpack.c.l.b16 %v2441
        %v3710 = vunpack.c.l.b16 %v2442
        %v3711 = vunpack.c.l.b16 %v2443
        %v3712 = vunpack.c.l.b16 %v2444
        %v3713 = vunpack.c.l.b16 %v2445
        %v3714 = vunpack.c.l.b16 %v2446
        %v3715 = vunpack.c.l.b16 %v2447
        %v3716 = vunpack.c.l.b16 %v2448
        %v3717 = vunpack.c.l.b16 %v2449
        %v3718 = vunpack.c.l.b16 %v2450
        %v3719 = vunpack.c.l.b16 %v2451
        %v3720 = vunpack.c.l.b16 %v2452
        %v3721 = vunpack.c.l.b16 %v2453
        %v3722 = vunpack.c.l.b16 %v2454
        %v3723 = vunpack.c.l.b16 %v2455
        %v3724 = vunpack.c.l.b16 %v2456
        %v3725 = vunpack.c.l.b16 %v2457
        %v3726 = vunpack.c.l.b16 %v2458
        %v3727 = vunpack.c.l.b16 %v2459
        %v3728 = vunpack.c.l.b16 %v2460
        %v3729 = vunpack.c.l.b16 %v2461
        %v3730 = vunpack.c.l.b16 %v2462
        %v3731 = vunpack.c.l.b16 %v2463
        %v3732 = vunpack.c.l.b16 %v2464
        %v3733 = vunpack.c.l.b16 %v2465
        %v3734 = vunpack.c.l.b16 %v2466
        %v3735 = vunpack.c.l.b16 %v2467
        %v3736 = vunpack.c.l.b16 %v2468
        %v3737 = vunpack.c.l.b16 %v2469
        %v3738 = vunpack.c.l.b16 %v2470
        %v3739 = vunpack.c.l.b16 %v2471
        %v3740 = vunpack.c.l.b16 %v2472
        %v3741 = vunpack.c.l.b16 %v2473
        %v3742 = vunpack.c.l.b16 %v2474
        %v3743 = vunpack.c.l.b16 %v2475
        %v3744 = vunpack.c.l.b16 %v2476
        %v3745 = vunpack.c.l.b16 %v2477
        %v3746 = vunpack.c.l.b16 %v2478
        %v3747 = vunpack.c.l.b16 %v2479
        %v3748 = vpack.c.b16 %v3701, %v3700
        %v3749 = vpack.c.b16 %v3703, %v3702
        %v3750 = vpack.c.b16 %v3705, %v3704
        %v3751 = vpack.c.b16 %v3707, %v3706
        %v3752 = vpack.c.b16 %v3709, %v3708
        %v3753 = vpack.c.b16 %v3711, %v3710
        %v3754 = vpack.c.b16 %v3713, %v3712
        %v3755 = vpack.c.b16 %v3715, %v3714
        %v3756 = vpack.c.b16 %v3717, %v3716
        %v3757 = vpack.c.b16 %v3719, %v3718
        %v3758 = vpack.c.b16 %v3721, %v3720
        %v3759 = vpack.c.b16 %v3723, %v3722
        %v3760 = vpack.c.b16 %v3725, %v3724
        %v3761 = vpack.c.b16 %v3727, %v3726
        %v3762 = vpack.c.b16 %v3729, %v3728
        %v3763 = vpack.c.b16 %v3731, %v3730
        %v3764 = vpack.c.b16 %v3733, %v3732
        %v3765 = vpack.c.b16 %v3735, %v3734
        %v3766 = vpack.c.b16 %v3737, %v3736
        %v3767 = vpack.c.b16 %v3739, %v3738
        %v3768 = vpack.c.b16 %v3741, %v3740
        %v3769 = vpack.c.b16 %v3743, %v3742
        %v3770 = vpack.c.b16 %v3745, %v3744
        %v3771 = vpack.c.b16 %v3747, %v3746
        %3796 = vmatprep.subr.bf16.mxu0 0
        %3797 = vmatpush1.bf16.msra.mxu0 %v3755
        %3798 = vmatprep.subr.bf16.mxu0 0
        %3799 = vmatpush1.bf16.msra.mxu0 %v3754
        %3800 = vmatprep.subr.bf16.mxu0 0
        %3801 = vmatpush1.bf16.msra.mxu0 %v3753
        %3802 = vmatprep.subr.bf16.mxu0 0
        %3803 = vmatpush1.bf16.msra.mxu0 %v3752
        %3804 = vmatprep.subr.bf16.mxu0 0
        %3805 = vmatpush1.bf16.msra.mxu0 %v3751
        %3806 = vmatprep.subr.bf16.mxu0 0
        %3807 = vmatpush1.bf16.msra.mxu0 %v3750
        %3808 = vmatprep.subr.bf16.mxu0 0
        %3809 = vmatpush1.bf16.msra.mxu0 %v3749
        %3810 = vmatprep.subr.bf16.mxu0 0
        %3811 = vmatpush1.bf16.msra.mxu0 %v3748
        %3812 = vmatprep.subr.bf16.mxu0 0
        %3813 = vmatpush2.bf16.msra.mxu0 %v3763
        %3814 = vmatprep.subr.bf16.mxu0 0
        %3815 = vmatpush2.bf16.msra.mxu0 %v3762
        %3816 = vmatprep.subr.bf16.mxu0 0
        %3817 = vmatpush2.bf16.msra.mxu0 %v3761
        %3818 = vmatprep.subr.bf16.mxu0 0
        %3819 = vmatpush2.bf16.msra.mxu0 %v3760
        %3820 = vmatprep.subr.bf16.mxu0 0
        %3821 = vmatpush2.bf16.msra.mxu0 %v3759
        %3822 = vmatprep.subr.bf16.mxu0 0
        %3823 = vmatpush2.bf16.msra.mxu0 %v3758
        %3824 = vmatprep.subr.bf16.mxu0 0
        %3825 = vmatpush2.bf16.msra.mxu0 %v3757
        %3826 = vmatprep.subr.bf16.mxu0 0
        %3827 = vmatpush2.bf16.msra.mxu0 %v3756
        %3828 = vmatprep.mubr.bf16.mxu0 %v2689
        %3829 = vmatmul.mubr.bf16.gmra.mxu0 %v2673
        %v3830 = vpop.f32.mrf.mxu0
        %v3831 = vadd.f32 0.0, %v3830
        %v3832 = vpop.f32.mrf.mxu0
        %v3833 = vpop.f32.mrf.mxu0
        %v3834 = vadd.f32 0.0, %v3833
        %v3835 = vpop.f32.mrf.mxu0
        %3836 = vmatprep.mubr.bf16.mxu0 %v2690
        %3837 = vmatmul.mubr.bf16.gmra.mxu0 %v2674
        %v3838 = vpop.f32.mrf.mxu0
        %v3839 = vadd.f32 0.0, %v3838
        %v3840 = vpop.f32.mrf.mxu0
        %v3841 = vpop.f32.mrf.mxu0
        %v3842 = vadd.f32 0.0, %v3841
        %v3843 = vpop.f32.mrf.mxu0
        %3844 = vmatprep.mubr.bf16.mxu0 %v2691
        %3845 = vmatmul.mubr.bf16.gmra.mxu0 %v2675
        %v3846 = vpop.f32.mrf.mxu0
        %v3847 = vadd.f32 0.0, %v3846
        %v3848 = vpop.f32.mrf.mxu0
        %v3849 = vpop.f32.mrf.mxu0
        %v3850 = vadd.f32 0.0, %v3849
        %v3851 = vpop.f32.mrf.mxu0
        %3852 = vmatprep.mubr.bf16.mxu0 %v2692
        %3853 = vmatmul.mubr.bf16.gmra.mxu0 %v2676
        %v3854 = vpop.f32.mrf.mxu0
        %v3855 = vadd.f32 0.0, %v3854
        %v3856 = vpop.f32.mrf.mxu0
        %v3857 = vpop.f32.mrf.mxu0
        %v3858 = vadd.f32 0.0, %v3857
        %v3859 = vpop.f32.mrf.mxu0
        %3860 = vmatprep.mubr.bf16.mxu0 %v2693
        %3861 = vmatmul.mubr.bf16.gmra.mxu0 %v2677
        %v3862 = vpop.f32.mrf.mxu0
        %v3863 = vadd.f32 0.0, %v3862
        %v3864 = vpop.f32.mrf.mxu0
        %v3865 = vpop.f32.mrf.mxu0
        %v3866 = vadd.f32 0.0, %v3865
        %v3867 = vpop.f32.mrf.mxu0
        %3868 = vmatprep.mubr.bf16.mxu0 %v2694
        %3869 = vmatmul.mubr.bf16.gmra.mxu0 %v2678
        %v3870 = vpop.f32.mrf.mxu0
        %v3871 = vadd.f32 0.0, %v3870
        %v3872 = vpop.f32.mrf.mxu0
        %v3873 = vpop.f32.mrf.mxu0
        %v3874 = vadd.f32 0.0, %v3873
        %v3875 = vpop.f32.mrf.mxu0
        %3876 = vmatprep.mubr.bf16.mxu0 %v2695
        %3877 = vmatmul.mubr.bf16.gmra.mxu0 %v2679
        %v3878 = vpop.f32.mrf.mxu0
        %v3879 = vadd.f32 0.0, %v3878
        %v3880 = vpop.f32.mrf.mxu0
        %v3881 = vpop.f32.mrf.mxu0
        %v3882 = vadd.f32 0.0, %v3881
        %v3883 = vpop.f32.mrf.mxu0
        %3884 = vmatprep.mubr.bf16.mxu0 %v2696
        %3885 = vmatmul.mubr.bf16.gmra.mxu0 %v2680
        %v3886 = vpop.f32.mrf.mxu0
        %v3887 = vadd.f32 0.0, %v3886
        %v3888 = vpop.f32.mrf.mxu0
        %v3889 = vpop.f32.mrf.mxu0
        %v3890 = vadd.f32 0.0, %v3889
        %v3891 = vpop.f32.mrf.mxu0
        %3892 = vmatprep.mubr.bf16.mxu0 %v2697
        %3893 = vmatmul.mubr.bf16.gmra.mxu0 %v2681
        %v3894 = vpop.f32.mrf.mxu0
        %v3895 = vadd.f32 0.0, %v3894
        %v3896 = vpop.f32.mrf.mxu0
        %v3897 = vpop.f32.mrf.mxu0
        %v3898 = vadd.f32 0.0, %v3897
        %v3899 = vpop.f32.mrf.mxu0
        %3900 = vmatprep.mubr.bf16.mxu0 %v2698
        %3901 = vmatmul.mubr.bf16.gmra.mxu0 %v2682
        %v3902 = vpop.f32.mrf.mxu0
        %v3903 = vadd.f32 0.0, %v3902
        %v3904 = vpop.f32.mrf.mxu0
        %v3905 = vpop.f32.mrf.mxu0
        %v3906 = vadd.f32 0.0, %v3905
        %v3907 = vpop.f32.mrf.mxu0
        %3908 = vmatprep.mubr.bf16.mxu0 %v2699
        %3909 = vmatmul.mubr.bf16.gmra.mxu0 %v2683
        %v3910 = vpop.f32.mrf.mxu0
        %v3911 = vadd.f32 0.0, %v3910
        %v3912 = vpop.f32.mrf.mxu0
        %v3913 = vpop.f32.mrf.mxu0
        %v3914 = vadd.f32 0.0, %v3913
        %v3915 = vpop.f32.mrf.mxu0
        %3916 = vmatprep.mubr.bf16.mxu0 %v2700
        %3917 = vmatmul.mubr.bf16.gmra.mxu0 %v2684
        %v3918 = vpop.f32.mrf.mxu0
        %v3919 = vadd.f32 0.0, %v3918
        %v3920 = vpop.f32.mrf.mxu0
        %v3921 = vpop.f32.mrf.mxu0
        %v3922 = vadd.f32 0.0, %v3921
        %v3923 = vpop.f32.mrf.mxu0
        %3924 = vmatprep.mubr.bf16.mxu0 %v2701
        %3925 = vmatmul.mubr.bf16.gmra.mxu0 %v2685
        %v3926 = vpop.f32.mrf.mxu0
        %v3927 = vadd.f32 0.0, %v3926
        %v3928 = vpop.f32.mrf.mxu0
        %v3929 = vpop.f32.mrf.mxu0
        %v3930 = vadd.f32 0.0, %v3929
        %v3931 = vpop.f32.mrf.mxu0
        %3932 = vmatprep.mubr.bf16.mxu0 %v2702
        %3933 = vmatmul.mubr.bf16.gmra.mxu0 %v2686
        %v3934 = vpop.f32.mrf.mxu0
        %v3935 = vadd.f32 0.0, %v3934
        %v3936 = vpop.f32.mrf.mxu0
        %v3937 = vpop.f32.mrf.mxu0
        %v3938 = vadd.f32 0.0, %v3937
        %v3939 = vpop.f32.mrf.mxu0
        %3940 = vmatprep.mubr.bf16.mxu0 %v2703
        %3941 = vmatmul.mubr.bf16.gmra.mxu0 %v2687
        %v3942 = vpop.f32.mrf.mxu0
        %v3943 = vadd.f32 0.0, %v3942
        %v3944 = vpop.f32.mrf.mxu0
        %v3945 = vpop.f32.mrf.mxu0
        %v3946 = vadd.f32 0.0, %v3945
        %v3947 = vpop.f32.mrf.mxu0
        %3948 = vmatprep.mubr.bf16.mxu0 0
        %3949 = vmatmul.mubr.bf16.gmra.mxu0 0
        %v3950 = vpop.f32.mrf.mxu0
        %v3951 = vadd.f32 0.0, %v3950
        %v3952 = vpop.f32.mrf.mxu0
        %v3953 = vpop.f32.mrf.mxu0
        %v3954 = vadd.f32 0.0, %v3953
        %v3955 = vpop.f32.mrf.mxu0
        %3956 = vdwg.mxu0
        %3957 = vmatprep.subr.bf16.mxu0 0
        %3958 = vmatpush1.bf16.msra.mxu0 %v3771
        %3959 = vmatprep.subr.bf16.mxu0 0
        %3960 = vmatpush1.bf16.msra.mxu0 %v3770
        %3961 = vmatprep.subr.bf16.mxu0 0
        %3962 = vmatpush1.bf16.msra.mxu0 %v3769
        %3963 = vmatprep.subr.bf16.mxu0 0
        %3964 = vmatpush1.bf16.msra.mxu0 %v3768
        %3965 = vmatprep.subr.bf16.mxu0 0
        %3966 = vmatpush1.bf16.msra.mxu0 %v3767
        %3967 = vmatprep.subr.bf16.mxu0 0
        %3968 = vmatpush1.bf16.msra.mxu0 %v3766
        %3969 = vmatprep.subr.bf16.mxu0 0
        %3970 = vmatpush1.bf16.msra.mxu0 %v3765
        %3971 = vmatprep.subr.bf16.mxu0 0
        %3972 = vmatpush1.bf16.msra.mxu0 %v3764
        %3973 = vmatprep.subr.bf16.mxu0 0
        %3974 = vmatpush2.bf16.msra.mxu0 0
        %3975 = vmatprep.subr.bf16.mxu0 0
        %3976 = vmatpush2.bf16.msra.mxu0 0
        %3977 = vmatprep.subr.bf16.mxu0 0
        %3978 = vmatpush2.bf16.msra.mxu0 0
        %3979 = vmatprep.subr.bf16.mxu0 0
        %3980 = vmatpush2.bf16.msra.mxu0 0
        %3981 = vmatprep.subr.bf16.mxu0 0
        %3982 = vmatpush2.bf16.msra.mxu0 0
        %3983 = vmatprep.subr.bf16.mxu0 0
        %3984 = vmatpush2.bf16.msra.mxu0 0
        %3985 = vmatprep.subr.bf16.mxu0 0
        %3986 = vmatpush2.bf16.msra.mxu0 0
        %3987 = vmatprep.subr.bf16.mxu0 0
        %3988 = vmatpush2.bf16.msra.mxu0 0
        %3989 = vmatprep.mubr.bf16.mxu0 0
        %3990 = vmatmul.mubr.bf16.gmra.mxu0 %v2705
        %v3991 = vpop.f32.mrf.mxu0
        %v3992 = vadd.f32 %v3831, %v3991
        %v3993 = vpop.f32.mrf.mxu0
        %v3994 = vpop.f32.mrf.mxu0
        %v3995 = vadd.f32 %v3834, %v3994
        %v3996 = vpop.f32.mrf.mxu0
        %3997 = vmatprep.mubr.bf16.mxu0 0
        %3998 = vmatmul.mubr.bf16.gmra.mxu0 %v2706
        %v3999 = vpop.f32.mrf.mxu0
        %v4000 = vadd.f32 %v3839, %v3999
        %v4001 = vpop.f32.mrf.mxu0
        %v4002 = vpop.f32.mrf.mxu0
        %v4003 = vadd.f32 %v3842, %v4002
        %v4004 = vpop.f32.mrf.mxu0
        %4005 = vmatprep.mubr.bf16.mxu0 0
        %4006 = vmatmul.mubr.bf16.gmra.mxu0 %v2707
        %v4007 = vpop.f32.mrf.mxu0
        %v4008 = vadd.f32 %v3847, %v4007
        %v4009 = vpop.f32.mrf.mxu0
        %v4010 = vpop.f32.mrf.mxu0
        %v4011 = vadd.f32 %v3850, %v4010
        %v4012 = vpop.f32.mrf.mxu0
        %4013 = vmatprep.mubr.bf16.mxu0 0
        %4014 = vmatmul.mubr.bf16.gmra.mxu0 %v2708
        %v4015 = vpop.f32.mrf.mxu0
        %v4016 = vadd.f32 %v3855, %v4015
        %v4017 = vpop.f32.mrf.mxu0
        %v4018 = vpop.f32.mrf.mxu0
        %v4019 = vadd.f32 %v3858, %v4018
        %v4020 = vpop.f32.mrf.mxu0
        %4021 = vmatprep.mubr.bf16.mxu0 0
        %4022 = vmatmul.mubr.bf16.gmra.mxu0 %v2709
        %v4023 = vpop.f32.mrf.mxu0
        %v4024 = vadd.f32 %v3863, %v4023
        %v4025 = vpop.f32.mrf.mxu0
        %v4026 = vpop.f32.mrf.mxu0
        %v4027 = vadd.f32 %v3866, %v4026
        %v4028 = vpop.f32.mrf.mxu0
        %4029 = vmatprep.mubr.bf16.mxu0 0
        %4030 = vmatmul.mubr.bf16.gmra.mxu0 %v2710
        %v4031 = vpop.f32.mrf.mxu0
        %v4032 = vadd.f32 %v3871, %v4031
        %v4033 = vpop.f32.mrf.mxu0
        %v4034 = vpop.f32.mrf.mxu0
        %v4035 = vadd.f32 %v3874, %v4034
        %v4036 = vpop.f32.mrf.mxu0
        %4037 = vmatprep.mubr.bf16.mxu0 0
        %4038 = vmatmul.mubr.bf16.gmra.mxu0 %v2711
        %v4039 = vpop.f32.mrf.mxu0
        %v4040 = vadd.f32 %v3879, %v4039
        %v4041 = vpop.f32.mrf.mxu0
        %v4042 = vpop.f32.mrf.mxu0
        %v4043 = vadd.f32 %v3882, %v4042
        %v4044 = vpop.f32.mrf.mxu0
        %4045 = vmatprep.mubr.bf16.mxu0 0
        %4046 = vmatmul.mubr.bf16.gmra.mxu0 %v2712
        %v4047 = vpop.f32.mrf.mxu0
        %v4048 = vadd.f32 %v3887, %v4047
        %v4049 = vpop.f32.mrf.mxu0
        %v4050 = vpop.f32.mrf.mxu0
        %v4051 = vadd.f32 %v3890, %v4050
        %v4052 = vpop.f32.mrf.mxu0
        %4053 = vmatprep.mubr.bf16.mxu0 0
        %4054 = vmatmul.mubr.bf16.gmra.mxu0 %v2713
        %v4055 = vpop.f32.mrf.mxu0
        %v4056 = vadd.f32 %v3895, %v4055
        %v4057 = vpop.f32.mrf.mxu0
        %v4058 = vpop.f32.mrf.mxu0
        %v4059 = vadd.f32 %v3898, %v4058
        %v4060 = vpop.f32.mrf.mxu0
        %4061 = vmatprep.mubr.bf16.mxu0 0
        %4062 = vmatmul.mubr.bf16.gmra.mxu0 %v2714
        %v4063 = vpop.f32.mrf.mxu0
        %v4064 = vadd.f32 %v3903, %v4063
        %v4065 = vpop.f32.mrf.mxu0
        %v4066 = vpop.f32.mrf.mxu0
        %v4067 = vadd.f32 %v3906, %v4066
        %v4068 = vpop.f32.mrf.mxu0
        %4069 = vmatprep.mubr.bf16.mxu0 0
        %4070 = vmatmul.mubr.bf16.gmra.mxu0 %v2715
        %v4071 = vpop.f32.mrf.mxu0
        %v4072 = vadd.f32 %v3911, %v4071
        %v4073 = vpop.f32.mrf.mxu0
        %v4074 = vpop.f32.mrf.mxu0
        %v4075 = vadd.f32 %v3914, %v4074
        %v4076 = vpop.f32.mrf.mxu0
        %4077 = vmatprep.mubr.bf16.mxu0 0
        %4078 = vmatmul.mubr.bf16.gmra.mxu0 %v2716
        %v4079 = vpop.f32.mrf.mxu0
        %v4080 = vadd.f32 %v3919, %v4079
        %v4081 = vpop.f32.mrf.mxu0
        %v4082 = vpop.f32.mrf.mxu0
        %v4083 = vadd.f32 %v3922, %v4082
        %v4084 = vpop.f32.mrf.mxu0
        %4085 = vmatprep.mubr.bf16.mxu0 0
        %4086 = vmatmul.mubr.bf16.gmra.mxu0 %v2717
        %v4087 = vpop.f32.mrf.mxu0
        %v4088 = vadd.f32 %v3927, %v4087
        %v4089 = vpop.f32.mrf.mxu0
        %v4090 = vpop.f32.mrf.mxu0
        %v4091 = vadd.f32 %v3930, %v4090
        %v4092 = vpop.f32.mrf.mxu0
        %4093 = vmatprep.mubr.bf16.mxu0 0
        %4094 = vmatmul.mubr.bf16.gmra.mxu0 %v2718
        %v4095 = vpop.f32.mrf.mxu0
        %v4096 = vadd.f32 %v3935, %v4095
        %v4097 = vpop.f32.mrf.mxu0
        %v4098 = vpop.f32.mrf.mxu0
        %v4099 = vadd.f32 %v3938, %v4098
        %v4100 = vpop.f32.mrf.mxu0
        %4101 = vmatprep.mubr.bf16.mxu0 0
        %4102 = vmatmul.mubr.bf16.gmra.mxu0 %v2719
        %v4103 = vpop.f32.mrf.mxu0
        %v4104 = vadd.f32 %v3943, %v4103
        %v4105 = vpop.f32.mrf.mxu0
        %v4106 = vpop.f32.mrf.mxu0
        %v4107 = vadd.f32 %v3946, %v4106
        %v4108 = vpop.f32.mrf.mxu0
        %4109 = vmatprep.mubr.bf16.mxu0 0
        %4110 = vmatmul.mubr.bf16.gmra.mxu0 0
        %v4111 = vpop.f32.mrf.mxu0
        %v4112 = vadd.f32 %v3951, %v4111
        %v4113 = vpop.f32.mrf.mxu0
        %v4114 = vpop.f32.mrf.mxu0
        %v4115 = vadd.f32 %v3954, %v4114
        %v4116 = vpop.f32.mrf.mxu0
        %4117 = vdwg.mxu0
        %v4118 = vadd.f32 %v3526, %v3992
        %v4119 = vadd.f32 %v3529, %v3995
        %v4120 = vadd.f32 %v3534, %v4000
        %v4121 = vadd.f32 %v3537, %v4003
        %v4122 = vadd.f32 %v3542, %v4008
        %v4123 = vadd.f32 %v3545, %v4011
        %v4124 = vadd.f32 %v3550, %v4016
        %v4125 = vadd.f32 %v3553, %v4019
        %v4126 = vadd.f32 %v3558, %v4024
        %v4127 = vadd.f32 %v3561, %v4027
        %v4128 = vadd.f32 %v3566, %v4032
        %v4129 = vadd.f32 %v3569, %v4035
        %v4130 = vadd.f32 %v3574, %v4040
        %v4131 = vadd.f32 %v3577, %v4043
        %v4132 = vadd.f32 %v3582, %v4048
        %v4133 = vadd.f32 %v3585, %v4051
        %v4134 = vadd.f32 %v3590, %v4056
        %v4135 = vadd.f32 %v3593, %v4059
        %v4136 = vadd.f32 %v3598, %v4064
        %v4137 = vadd.f32 %v3601, %v4067
        %v4138 = vadd.f32 %v3606, %v4072
        %v4139 = vadd.f32 %v3609, %v4075
        %v4140 = vadd.f32 %v3614, %v4080
        %v4141 = vadd.f32 %v3617, %v4083
        %v4142 = vadd.f32 %v3622, %v4088
        %v4143 = vadd.f32 %v3625, %v4091
        %v4144 = vadd.f32 %v3630, %v4096
        %v4145 = vadd.f32 %v3633, %v4099
        %v4146 = vadd.f32 %v3638, %v4104
        %v4147 = vadd.f32 %v3641, %v4107
        %v4148 = vadd.f32 %v3646, %v4112
        %v4149 = vadd.f32 %v3649, %v4115
        %v4150 = vadd.f32 %v4118, %v300
        %v4151 = vadd.f32 %v4119, %v301
        %v4152 = vadd.f32 %v4120, %v302
        %v4153 = vadd.f32 %v4121, %v303
        %v4154 = vadd.f32 %v4122, %v304
        %v4155 = vadd.f32 %v4123, %v305
        %v4156 = vadd.f32 %v4124, %v306
        %v4157 = vadd.f32 %v4125, %v307
        %v4158 = vadd.f32 %v4126, %v308
        %v4159 = vadd.f32 %v4127, %v309
        %v4160 = vadd.f32 %v4128, %v310
        %v4161 = vadd.f32 %v4129, %v311
        %v4162 = vadd.f32 %v4130, %v312
        %v4163 = vadd.f32 %v4131, %v313
        %v4164 = vadd.f32 %v4132, %v314
        %v4165 = vadd.f32 %v4133, %v315
        %v4166 = vadd.f32 %v4134, %v316
        %v4167 = vadd.f32 %v4135, %v317
        %v4168 = vadd.f32 %v4136, %v318
        %v4169 = vadd.f32 %v4137, %v319
        %v4170 = vadd.f32 %v4138, %v320
        %v4171 = vadd.f32 %v4139, %v321
        %v4172 = vadd.f32 %v4140, %v322
        %v4173 = vadd.f32 %v4141, %v323
        %v4174 = vadd.f32 %v4142, %v324
        %v4175 = vadd.f32 %v4143, %v325
        %v4176 = vadd.f32 %v4144, %v326
        %v4177 = vadd.f32 %v4145, %v327
        %v4178 = vadd.f32 %v4146, %v328
        %v4179 = vadd.f32 %v4147, %v329
        %v4180 = vadd.f32 %v4148, %v330
        %v4181 = vadd.f32 %v4149, %v331
        %4182 = vst [vmem:[%s298] sm:$0xff] %v4150
        %4183 = vst [vmem:[%s298 + $0x8] sm:$0xff] %v4151
        %4184 = vst [vmem:[%s298 + $0x10] sm:$0xff] %v4152
        %4185 = vst [vmem:[%s298 + $0x18] sm:$0xff] %v4153
        %4186 = vst [vmem:[%s298 + $0x20] sm:$0xff] %v4154
        %4187 = vst [vmem:[%s298 + $0x28] sm:$0xff] %v4155
        %4188 = vst [vmem:[%s298 + $0x30] sm:$0xff] %v4156
        %4189 = vst [vmem:[%s298 + $0x38] sm:$0xff] %v4157
        %4190 = vst [vmem:[%s298 + $0x40] sm:$0xff] %v4158
        %4191 = vst [vmem:[%s298 + $0x48] sm:$0xff] %v4159
        %4192 = vst [vmem:[%s298 + $0x50] sm:$0xff] %v4160
        %4193 = vst [vmem:[%s298 + $0x58] sm:$0xff] %v4161
        %4194 = vst [vmem:[%s298 + $0x60] sm:$0xff] %v4162
        %4195 = vst [vmem:[%s298 + $0x68] sm:$0xff] %v4163
        %4196 = vst [vmem:[%s298 + $0x70] sm:$0xff] %v4164
        %4197 = vst [vmem:[%s298 + $0x78] sm:$0xff] %v4165
        %4198 = vst [vmem:[%s298 + $0x80] sm:$0xff] %v4166
        %4199 = vst [vmem:[%s298 + $0x88] sm:$0xff] %v4167
        %4200 = vst [vmem:[%s298 + $0x90] sm:$0xff] %v4168
        %4201 = vst [vmem:[%s298 + $0x98] sm:$0xff] %v4169
        %4202 = vst [vmem:[%s298 + $0xa0] sm:$0xff] %v4170
        %4203 = vst [vmem:[%s298 + $0xa8] sm:$0xff] %v4171
        %4204 = vst [vmem:[%s298 + $0xb0] sm:$0xff] %v4172
        %4205 = vst [vmem:[%s298 + $0xb8] sm:$0xff] %v4173
        %4206 = vst [vmem:[%s298 + $0xc0] sm:$0xff] %v4174
        %4207 = vst [vmem:[%s298 + $0xc8] sm:$0xff] %v4175
        %4208 = vst [vmem:[%s298 + $0xd0] sm:$0xff] %v4176
        %4209 = vst [vmem:[%s298 + $0xd8] sm:$0xff] %v4177
        %4210 = vst [vmem:[%s298 + $0xe0] sm:$0xff] %v4178
        %4211 = vst [vmem:[%s298 + $0xe8] sm:$0xff] %v4179
        %4212 = vst [vmem:[%s298 + $0xf0] sm:$0xff] %v4180
        %4213 = vst [vmem:[%s298 + $0xf8] sm:$0xff] %v4181
        %s4214 = sand.u32 %s163, 1
        %s4215 = scalar_lea.sflag [#allocation4], %s4214
        %s4216 = sand.u32 %s163, 1
        %s4217 = smul.addr %s4216, 256
        %s4218 = scalar_lea.vmem [#allocation8], %s4217
        // Predicated region
        $region57: #{tpu_custom_call.1} parent=43 // pred_check
          %p4219 = pneg %p173
        $region58: #{tpu_custom_call.1} parent=43 // pred_check_branch
          %4221 = sbr.rel (%p4219) target = $region60
        $region59: #{tpu_custom_call.1} parent=43 // pred_region
          %s4223 = ssub.s32 4096, 4096
          %4224 = vsyncadd %s4215, %s4223
          %s4225 = smul.addr %s24, 32
          %s4226 = smul.addr %s4225, 128
          %s4227 = scalar_lea.hbm %s6, %s4226
          %s4228 = sshll.u32 %s4218, 4
          %s4229 = int_to_ptr.vmem [resolvable:$true] %s4228
          %4234 = dma.vmem_to_hbm [thread:$0]  %s4229, 4096, %s4227, %s4215, 128, 128, 8
        $region60: #{tpu_custom_call.1} parent=43 // pred_fallthru
          _
      $region44: #{tpu_custom_call.1} parent=5 // pred_fallthru
        _
      %p4235 = scmp.le.s32.totalorder 2, %s19
      // Predicated region
      $region61: #{tpu_custom_call.1} parent=5 // pred_check
        %p4236 = pneg %p4235
      $region62: #{tpu_custom_call.1} parent=5 // pred_check_branch
        %4238 = sbr.rel (%p4236) target = $region64
      $region63: #{tpu_custom_call.1} parent=5 // pred_region
        %s4239 = ssub.s32 %s19, 2
        // Predicated region
        $region65: #{tpu_custom_call.1} parent=63 // pred_check
          %p4240 = pneg %p179
        $region66: #{tpu_custom_call.1} parent=63 // pred_check_branch
          %4242 = sbr.rel (%p4240) target = $region68
        $region67: #{tpu_custom_call.1} parent=63 // pred_region
          %s4243 = sand.u32 %s164, 1
          %s4244 = scalar_lea.sflag [#allocation4], %s4243
          %s4245 = sand.u32 %s164, 1
          %s4246 = smul.addr %s4245, 256
          %s4247 = scalar_lea.vmem [#allocation8], %s4246
          %4248 = dma.done %s4244, 4096
        $region68: #{tpu_custom_call.1} parent=63 // pred_fallthru
          _
      $region64: #{tpu_custom_call.1} parent=5 // pred_fallthru
        _
    $region6: #{tpu_custom_call.1} parent=1 // loop_footer
      %s23 = sadd.s32 1, %s19
    $region7: #{tpu_custom_call.1} parent=1 // loop_footer_branch
      %18 = sbr.rel target = $region3
    $region8: #{tpu_custom_call.1} parent=1 // loop_exit
      _
    %4249 = vsyncpa [#allocation3], 1
    %s4250 = scalar_lea.sflag [#allocation3], 1
    %4251 = vsyncpa %s4250, 1
    %4252 = vsyncpa [#allocation6], 1
    %4253 = vsyncpa [#allocation4], 1
    %s4254 = scalar_lea.sflag [#allocation4], 1
    %4255 = vsyncpa %s4254, 1

</llo_original>
